<compile_context>
chip_gen: v5e
topology: v5e:2x2
jax: 0.10.0
libtpu: 0.0.40
codegen_flags: <defaults>
</compile_context>

<pallas_src>
import math
from functools import partial

import numpy as np
import jax
import jax.numpy as jnp
from jax.experimental import pallas as pl
from jax.experimental.pallas import tpu as pltpu

# ----- small but structurally faithful configuration ------------------------
B           = 2      # batch
IMG         = 32     # input resolution (= clip_imsize)
PATCH       = 16     # visual.conv1 patch size (PromptLearner assumes 16x16)
N_PATCH     = (IMG // PATCH) ** 2           # 4 patches
VIS_WIDTH   = 64     # visual transformer width (== prompt_dim at this toy scale)
VIS_HEADS   = 4
VIS_LAYERS  = 12     # hardcoded in VPT_VisionTransformer.forward_deep_prompt
NUM_TOKENS  = 2      # VPT prompt tokens (num_tokens > 0 -> VPT path)
DEEP_LAYERS = 11     # hardcoded total_d_layer in PromptLearner
S_VIS       = 1 + NUM_TOKENS + N_PATCH      # CLS + VPT prompts + patches = 7
S_PAD       = 8      # padded to a sublane multiple; pad token masked out of keys
TXT_WIDTH   = 32     # ctx_dim == text transformer width
TXT_HEADS   = 2
TXT_LAYERS  = 2
SEQ_LEN     = 16     # tokenized prompt length
N_CLS       = 3
N_CTX       = 4
EMBED_DIM   = 32     # joint CLIP embedding dim (visual.proj / text_projection)


# ======================= in-kernel math (pure jnp on values) =================

def _ln(x, g, b):
    x = x.astype(jnp.float32)
    mu = jnp.mean(x, axis=-1, keepdims=True)
    var = jnp.mean(jnp.square(x - mu), axis=-1, keepdims=True)
    return (x - mu) * jax.lax.rsqrt(var + 1e-5) * g + b


def _matmul(x, w):
    # bf16 MXU operands, fp32 accumulation.
    return jnp.dot(x.astype(jnp.bfloat16), w.astype(jnp.bfloat16),
                   preferred_element_type=jnp.float32)


def _linear3(x, w, b=None):
    """(B, S, K) @ (K, N) [+ b] done as one tile-aligned 2-D MXU matmul."""
    Bq, S, K = x.shape
    y = _matmul(x.reshape(Bq * S, K), w).reshape(Bq, S, w.shape[-1])
    if b is not None:
        y = y + b
    return y


def _mha(x, in_w, in_b, out_w, out_b, num_heads, mask):
    """Multi-head attention; heads split in-register, out-proj accumulated per head
    (no lane concatenate of head outputs)."""
    Bq, S, D = x.shape
    Dh = D // num_heads
    scale = 1.0 / math.sqrt(Dh)
    qkv = _linear3(x, in_w, in_b)                     # (B, S, 3D) f32
    out = None
    for h in range(num_heads):                        # static unroll, tiny head count
        q = qkv[..., h * Dh:(h + 1) * Dh] * scale
        k = qkv[..., D + h * Dh:D + (h + 1) * Dh]
        v = qkv[..., 2 * D + h * Dh:2 * D + (h + 1) * Dh]
        s = jnp.einsum('bqd,bkd->bqk', q.astype(jnp.bfloat16), k.astype(jnp.bfloat16),
                       preferred_element_type=jnp.float32)
        s = s + mask[None]                            # mask added in f32
        p = jax.nn.softmax(s, axis=-1)
        o = jnp.einsum('bqk,bkd->bqd', p.astype(jnp.bfloat16), v.astype(jnp.bfloat16),
                       preferred_element_type=jnp.float32)
        contrib = _linear3(o, out_w[h * Dh:(h + 1) * Dh, :])
        out = contrib if out is None else out + contrib
    return out + out_b


def _resblock(x, mat_ref, projw_ref, vec_ref, num_heads, mask):
    """CLIP ResidualAttentionBlock on the packed per-layer weight slabs.
    mat_ref : (1, W, 8W) bf16  = [in_w | out_w | fc_w]
    projw_ref: (1, 4W, W) bf16 = mlp c_proj weight
    vec_ref : (1, 1, 13W) f32  = [ln1_g|ln1_b|in_b|out_b|ln2_g|ln2_b|fc_b|proj_b]
    """
    W = x.shape[-1]
    vec = vec_ref[0]                                     # (1, 13W) f32
    ln1_g, ln1_b = vec[:, 0:W], vec[:, W:2 * W]
    in_b  = vec[:, 2 * W:5 * W]
    out_b = vec[:, 5 * W:6 * W]
    ln2_g, ln2_b = vec[:, 6 * W:7 * W], vec[:, 7 * W:8 * W]
    fc_b  = vec[:, 8 * W:12 * W]
    proj_b = vec[:, 12 * W:13 * W]
    in_w  = mat_ref[0, :, 0:3 * W]                       # (W, 3W) bf16
    out_w = mat_ref[0, :, 3 * W:4 * W]                   # (W, W)  bf16
    fc_w  = mat_ref[0, :, 4 * W:8 * W]                   # (W, 4W) bf16
    proj_w = projw_ref[0]                                # (4W, W) bf16

    x = x + _mha(_ln(x, ln1_g, ln1_b), in_w, in_b, out_w, out_b, num_heads, mask)
    h = _ln(x, ln2_g, ln2_b)
    h = _linear3(h, fc_w, fc_b)
    h = h * jax.nn.sigmoid(1.702 * h)                    # QuickGELU
    h = _linear3(h, proj_w, proj_b)
    return x + h


# ============================== Pallas kernels ==============================

def _vision_encoder_kernel(patches_ref, conv1_ref, clsemb_ref, pos_ref, lnpre_ref,
                           vpt_ref, lnpost_ref, vproj_ref, vmask_ref, dpe_ref,
                           mat_ref, projw_ref, vec_ref, o_ref, x_ref):
    """One grid step == one of the 12 visual layers; activation resident in VMEM scratch.
    Layer 0: patch embed + CLS + pos + ln_pre + VPT prompt insertion.
    Layers 1..11: deep-prompt row overwrite. Last layer: ln_post + visual.proj."""
    layer = pl.program_id(0)
    Bq = x_ref.shape[0]

    @pl.when(layer == 0)
    def _embed():
        # conv1 (im2col done host-side) -> [CLS ; patches] + pos -> ln_pre, then VPT
        # prompt rows inserted after CLS (un-normalized, as in the reference) and one
        # zero pad token; written with ONE dense store.
        patch = _matmul(patches_ref[...].reshape(Bq * N_PATCH, 3 * PATCH * PATCH),
                        conv1_ref[...]).reshape(Bq, N_PATCH, VIS_WIDTH)
        cls_tok = jnp.broadcast_to(clsemb_ref[...][None].astype(jnp.float32),
                                   (Bq, 1, VIS_WIDTH))
        emb = jnp.concatenate([cls_tok, patch], axis=1) + pos_ref[...][None]
        emb = _ln(emb, lnpre_ref[0:1, :], lnpre_ref[1:2, :])
        vpt = jnp.broadcast_to(vpt_ref[...][None].astype(jnp.float32),
                               (Bq, NUM_TOKENS, VIS_WIDTH))
        pad = jnp.zeros((Bq, S_PAD - S_VIS, VIS_WIDTH), jnp.float32)
        x_ref[...] = jnp.concatenate([emb[:, :1], vpt, emb[:, 1:], pad], axis=1)

    @pl.when((layer > 0) & (layer <= DEEP_LAYERS))
    def _deep_prompt():
        # Layer l (1..11) overwrites the VPT rows with deep_prompt[l-1] (fetched by the
        # BlockSpec index_map); done as a full-tile select + dense store.
        dp = jnp.broadcast_to(dpe_ref[0][None].astype(jnp.float32),
                              (Bq, NUM_TOKENS, VIS_WIDTH))
        dp_full = jnp.concatenate(
            [jnp.zeros((Bq, 1, VIS_WIDTH), jnp.float32), dp,
             jnp.zeros((Bq, S_PAD - 1 - NUM_TOKENS, VIS_WIDTH), jnp.float32)], axis=1)
        tok = jax.lax.broadcasted_iota(jnp.int32, (S_PAD, VIS_WIDTH), 0)[None]
        keep = (tok < 1) | (tok >= 1 + NUM_TOKENS)
        x_ref[...] = jnp.where(keep, x_ref[...], dp_full)

    x = _resblock(x_ref[...], mat_ref, projw_ref, vec_ref, VIS_HEADS, vmask_ref[...])
    x_ref[...] = x

    @pl.when(layer == pl.num_programs(0) - 1)
    def _finalize():
        cls = x[:, 0, :]                                             # CLS token (B, W)
        feat = _matmul(_ln(cls, lnpost_ref[0:1, :], lnpost_ref[1:2, :]), vproj_ref[...])
        o_ref[...] = feat.astype(o_ref.dtype)


def _text_encoder_head_kernel(prefix_ref, ctx_ref, suffix_ref, pos_ref, cmask_ref,
                              eot_ref, img_ref, lnfin_ref, tproj_ref, scale_ref,
                              mat_ref, projw_ref, vec_ref, o_ref, x_ref):
    """One grid step == one text layer; prompt assembly fused at layer 0, the whole
    CLIP head (ln_final + EOT gather + projections + L2-norm + logits) fused at the end."""
    layer = pl.program_id(0)

    @pl.when(layer == 0)
    def _init():
        # PromptLearner (class_token_position == 'end'): [prefix ; ctx ; suffix] + pos,
        # assembled directly in VMEM (no XLA concat / HBM materialization).
        ctx = jnp.broadcast_to(ctx_ref[...][None].astype(jnp.float32),
                               (N_CLS, N_CTX, TXT_WIDTH))
        prompts = jnp.concatenate([prefix_ref[...].astype(jnp.float32), ctx,
                                   suffix_ref[...].astype(jnp.float32)], axis=1)
        x_ref[...] = prompts + pos_ref[...][None]

    x = _resblock(x_ref[...], mat_ref, projw_ref, vec_ref, TXT_HEADS, cmask_ref[...])
    x_ref[...] = x

    @pl.when(layer == pl.num_programs(0) - 1)
    def _head():
        # EOT gather via host-precomputed one-hot (LN commutes with per-token gather).
        txt_tok = jnp.sum(eot_ref[...][:, :, None] * x, axis=1)      # (C, TW)
        txt = _matmul(_ln(txt_tok, lnfin_ref[0:1, :], lnfin_ref[1:2, :]), tproj_ref[...])
        img = img_ref[...].astype(jnp.float32)
        img = img * jax.lax.rsqrt(jnp.sum(img * img, axis=-1, keepdims=True) + 1e-12)
        txt = txt * jax.lax.rsqrt(jnp.sum(txt * txt, axis=-1, keepdims=True) + 1e-12)
        sim = jax.lax.dot_general(img, txt, (((1,), (1,)), ((), ())),
                                  preferred_element_type=jnp.float32)
        o_ref[...] = (scale_ref[...] * sim).astype(o_ref.dtype)


# ============================ kernel wrappers ===============================

def _nb(a):
    return int(np.prod(a.shape)) * a.dtype.itemsize


def _vmem_limit(request_bytes):
    # 2x for double-buffering every stream + 4 MiB headroom for compiler scratch,
    # clamped to a range that fits every generation (v7x: 64 MiB physical VMEM / TC).
    return int(min(max(2 * request_bytes + (4 << 20), 16 << 20), 60 << 20))


def image_encoder(params, image):
    """VPT_VisionTransformer.forward as ONE layer-grid pallas_call -> (B, EMBED_DIM)."""
    Bq = image.shape[0]
    gh = gw = IMG // PATCH
    # im2col for visual.conv1 (stride == kernel, no bias) — pure layout, host-side.
    patches = image.reshape(Bq, 3, gh, PATCH, gw, PATCH)
    patches = patches.transpose(0, 2, 4, 1, 3, 5).reshape(Bq, N_PATCH, 3 * PATCH * PATCH)

    args = (patches, params['conv1_w'], params['class_embedding'], params['vis_pos'],
            params['ln_pre'], params['prompt_embeddings'], params['ln_post'],
            params['visual_proj'], params['vis_attn_mask'],
            params['deep_prompt_embeddings'],
            params['vis_blk_mat'], params['vis_blk_proj'], params['vis_blk_vec'])
    c2, c3 = (lambda l: (0, 0)), (lambda l: (0, 0, 0))
    scratch_bytes = Bq * S_PAD * VIS_WIDTH * 4
    return pl.pallas_call(
        _vision_encoder_kernel,
        grid=(VIS_LAYERS,),
        in_specs=[
            pl.BlockSpec((Bq, N_PATCH, 3 * PATCH * PATCH), c3),      # im2col patches
            pl.BlockSpec((3 * PATCH * PATCH, VIS_WIDTH), c2),        # conv1 weight
            pl.BlockSpec((1, VIS_WIDTH), c2),                        # class_embedding
            pl.BlockSpec((1 + N_PATCH, VIS_WIDTH), c2),              # positional_embedding
            pl.BlockSpec((2, VIS_WIDTH), c2),                        # ln_pre gamma/beta
            pl.BlockSpec((NUM_TOKENS, VIS_WIDTH), c2),               # VPT prompt_embeddings
            pl.BlockSpec((2, VIS_WIDTH), c2),                        # ln_post gamma/beta
            pl.BlockSpec((VIS_WIDTH, EMBED_DIM), c2),                # visual.proj
            pl.BlockSpec((S_PAD, S_PAD), c2),                        # pad-token key mask
            pl.BlockSpec((1, NUM_TOKENS, VIS_WIDTH),                 # deep prompt for layer l
                         lambda l: (jnp.maximum(l - 1, 0), 0, 0)),   # (l=0 fetch unused)
            pl.BlockSpec((1, VIS_WIDTH, 8 * VIS_WIDTH), lambda l: (l, 0, 0)),   # bf16 mats
            pl.BlockSpec((1, 4 * VIS_WIDTH, VIS_WIDTH), lambda l: (l, 0, 0)),   # bf16 c_proj
            pl.BlockSpec((1, 1, 13 * VIS_WIDTH), lambda l: (l, 0, 0)),          # f32 LN/bias
        ],
        out_specs=pl.BlockSpec((Bq, EMBED_DIM), c2),
        out_shape=jax.ShapeDtypeStruct((Bq, EMBED_DIM), jnp.float32),
        scratch_shapes=[pltpu.VMEM((Bq, S_PAD, VIS_WIDTH), jnp.float32)],
        compiler_params=pltpu.CompilerParams(
            dimension_semantics=("arbitrary",),
            vmem_limit_bytes=_vmem_limit(sum(_nb(a) for a in args) + scratch_bytes)),
    )(*args)


def text_encoder_and_head(params, img_feat):
    """Text transformer + PromptLearner assembly + fused CLIP head -> (B, N_CLS) logits."""
    Bq = img_feat.shape[0]
    ctx = params['ctx']
    assert ctx.ndim == 2   # generic (non-CSC) context; CSC would pass (C, N_CTX, D)
    scale = jnp.exp(params['logit_scale']).reshape(1, 1)   # exp hoisted out of the kernel
    suf = SEQ_LEN - 1 - N_CTX

    args = (params['token_prefix'], ctx, params['token_suffix'], params['txt_pos'],
            params['txt_attn_mask'], params['eot_onehot'], img_feat,
            params['ln_final'], params['text_projection'], scale,
            params['txt_blk_mat'], params['txt_blk_proj'], params['txt_blk_vec'])
    c2, c3 = (lambda l: (0, 0)), (lambda l: (0, 0, 0))
    scratch_bytes = N_CLS * SEQ_LEN * TXT_WIDTH * 4
    return pl.pallas_call(
        _text_encoder_head_kernel,
        grid=(TXT_LAYERS,),
        in_specs=[
            pl.BlockSpec((N_CLS, 1, TXT_WIDTH), c3),                 # token_prefix (SOS)
            pl.BlockSpec((N_CTX, TXT_WIDTH), c2),                    # learned ctx
            pl.BlockSpec((N_CLS, suf, TXT_WIDTH), c3),               # token_suffix
            pl.BlockSpec((SEQ_LEN, TXT_WIDTH), c2),                  # positional_embedding
            pl.BlockSpec((SEQ_LEN, SEQ_LEN), c2),                    # causal mask
            pl.BlockSpec((N_CLS, SEQ_LEN), c2),                      # EOT one-hot
            pl.BlockSpec((Bq, EMBED_DIM), c2),                       # image features
            pl.BlockSpec((2, TXT_WIDTH), c2),                        # ln_final gamma/beta
            pl.BlockSpec((TXT_WIDTH, EMBED_DIM), c2),                # text_projection
            pl.BlockSpec((1, 1), c2),                                # exp(logit_scale)
            pl.BlockSpec((1, TXT_WIDTH, 8 * TXT_WIDTH), lambda l: (l, 0, 0)),   # bf16 mats
            pl.BlockSpec((1, 4 * TXT_WIDTH, TXT_WIDTH), lambda l: (l, 0, 0)),   # bf16 c_proj
            pl.BlockSpec((1, 1, 13 * TXT_WIDTH), lambda l: (l, 0, 0)),          # f32 LN/bias
        ],
        out_specs=pl.BlockSpec((Bq, N_CLS), c2),
        out_shape=jax.ShapeDtypeStruct((Bq, N_CLS), jnp.float32),
        scratch_shapes=[pltpu.VMEM((N_CLS, SEQ_LEN, TXT_WIDTH), jnp.float32)],
        compiler_params=pltpu.CompilerParams(
            dimension_semantics=("arbitrary",),
            vmem_limit_bytes=_vmem_limit(sum(_nb(a) for a in args) + scratch_bytes)),
    )(*args)


def custom_clip_forward(params, image):
    img_feat = image_encoder(params, image)            # pallas_call #1: 12-layer VPT ViT
    return text_encoder_and_head(params, img_feat)     # pallas_call #2: text stack + head


# ========================= deterministic init ===============================

class _KeyGen:
    def __init__(self, key):
        self.key = key
        self.i = 0

    def __call__(self):
        self.i += 1
        return jax.random.fold_in(self.key, self.i)


def init_params(key):
    kg = _KeyGen(key)
    f32 = jnp.float32

    def nrm(shape, std=0.02):
        return (std * jax.random.normal(kg(), shape)).astype(f32)

    def unif(shape, val):
        return jax.random.uniform(kg(), shape, f32, -val, val)

    def packed_blocks(width, n_layers):
        """Per-layer transformer weights packed into 3 slabs (see _resblock)."""
        W = width
        mat = jnp.concatenate([nrm((n_layers, W, 3 * W)),     # attn in_proj weight
                               nrm((n_layers, W, W)),         # attn out_proj weight
                               nrm((n_layers, W, 4 * W))],    # mlp c_fc weight
                              axis=-1).astype(jnp.bfloat16)   # (L, W, 8W) bf16
        proj = nrm((n_layers, 4 * W, W)).astype(jnp.bfloat16)  # (L, 4W, W) bf16
        ones = jnp.ones((n_layers, 1, W), f32)
        zeros = jnp.zeros((n_layers, 1, W), f32)
        vec = jnp.concatenate([ones, zeros,                   # ln_1 gamma / beta
                               nrm((n_layers, 1, 3 * W)),     # in_proj bias
                               nrm((n_layers, 1, W)),         # out_proj bias
                               ones, zeros,                   # ln_2 gamma / beta
                               nrm((n_layers, 1, 4 * W)),     # c_fc bias
                               nrm((n_layers, 1, W))],        # c_proj bias
                              axis=-1)                        # (L, 1, 13W) f32
        return mat, proj, vec

    vis_mat, vis_proj_slab, vis_vec = packed_blocks(VIS_WIDTH, VIS_LAYERS)
    txt_mat, txt_proj_slab, txt_vec = packed_blocks(TXT_WIDTH, TXT_LAYERS)

    # PromptLearner (generic context, CSC=False, class_token_position='end')
    ctx = nrm((N_CTX, TXT_WIDTH))
    embedding = nrm((N_CLS, SEQ_LEN, TXT_WIDTH))        # synthetic token_embedding output
    token_prefix = embedding[:, :1, :]
    token_suffix = embedding[:, 1 + N_CTX:, :]
    val = math.sqrt(6.0 / float(3 * PATCH * PATCH + VIS_WIDTH))  # prompt_dim == VIS_WIDTH here
    prompt_embeddings = unif((NUM_TOKENS, VIS_WIDTH), val)       # stored squeezed (1,NT,D)->(NT,D)
    deep_prompt_embeddings = unif((DEEP_LAYERS, NUM_TOKENS, VIS_WIDTH), val)

    # Synthetic tokenized prompts; EOT argmax + one-hot precomputed host-side (numpy).
    name_lens = [1, 2, 3]
    tok = np.zeros((N_CLS, SEQ_LEN), dtype=np.int32)
    for i, nl in enumerate(name_lens):
        tok[i, 0] = 49406                                # SOT
        tok[i, 1:1 + N_CTX + nl] = 400 + np.arange(N_CTX + nl)
        tok[i, 1 + N_CTX + nl] = 49407                   # EOT (argmax target)
    eot = tok.argmax(-1)
    eot_onehot = np.zeros((N_CLS, SEQ_LEN), np.float32)
    eot_onehot[np.arange(N_CLS), eot] = 1.0

    # Attention masks built once host-side (hoisted out of the per-layer kernel body).
    vmask = np.zeros((S_PAD, S_PAD), np.float32)
    vmask[:, S_VIS:] = -1e30                             # padded dummy token never a key
    cmask = np.triu(np.full((SEQ_LEN, SEQ_LEN), -1e30, np.float32), k=1)

    return dict(
        # visual (VPT ViT)
        conv1_w=nrm((3 * PATCH * PATCH, VIS_WIDTH)),
        class_embedding=nrm((1, VIS_WIDTH)),
        vis_pos=nrm((1 + N_PATCH, VIS_WIDTH)),
        ln_pre=jnp.concatenate([jnp.ones((1, VIS_WIDTH), f32),
                                jnp.zeros((1, VIS_WIDTH), f32)], axis=0),
        ln_post=jnp.concatenate([jnp.ones((1, VIS_WIDTH), f32),
                                 jnp.zeros((1, VIS_WIDTH), f32)], axis=0),
        visual_proj=nrm((VIS_WIDTH, EMBED_DIM)),
        vis_blk_mat=vis_mat, vis_blk_proj=vis_proj_slab, vis_blk_vec=vis_vec,
        vis_attn_mask=jnp.asarray(vmask),
        # text encoder
        txt_pos=nrm((SEQ_LEN, TXT_WIDTH)),
        txt_blk_mat=txt_mat, txt_blk_proj=txt_proj_slab, txt_blk_vec=txt_vec,
        ln_final=jnp.concatenate([jnp.ones((1, TXT_WIDTH), f32),
                                  jnp.zeros((1, TXT_WIDTH), f32)], axis=0),
        text_projection=nrm((TXT_WIDTH, EMBED_DIM)),
        txt_attn_mask=jnp.asarray(cmask),
        logit_scale=jnp.full((1,), float(np.log(1.0 / 0.07)), f32),
        # prompt learner buffers / parameters
        ctx=ctx, token_prefix=token_prefix, token_suffix=token_suffix,
        prompt_embeddings=prompt_embeddings, deep_prompt_embeddings=deep_prompt_embeddings,
        tokenized_prompts=jnp.asarray(tok), eot_onehot=jnp.asarray(eot_onehot),
    )


# ================================== main ====================================

if __name__ == "__main__":
    root = jax.random.PRNGKey(0)
    params = init_params(jax.random.fold_in(root, 1))
    image = jax.random.normal(jax.random.fold_in(root, 2), (B, 3, IMG, IMG), jnp.float32)

    fwd = jax.jit(partial(custom_clip_forward, params))
    logits = fwd(image)
    jax.block_until_ready(logits)

    assert logits.shape == (B, N_CLS), logits.shape
    assert bool(jnp.all(jnp.isfinite(logits)))
    print("KERNEL_OK")
</pallas_src>

<mosaic_0001>
module attributes {stable_mosaic.version = 11 : i64} {
  func.func @_vision_encoder_kernel(%arg0: i32, %arg1: memref<2x4x768xf32, #tpu.memory_space<vmem>>, %arg2: memref<768x64xf32, #tpu.memory_space<vmem>>, %arg3: memref<1x64xf32, #tpu.memory_space<vmem>>, %arg4: memref<5x64xf32, #tpu.memory_space<vmem>>, %arg5: memref<2x64xf32, #tpu.memory_space<vmem>>, %arg6: memref<2x64xf32, #tpu.memory_space<vmem>>, %arg7: memref<2x64xf32, #tpu.memory_space<vmem>>, %arg8: memref<64x32xf32, #tpu.memory_space<vmem>>, %arg9: memref<8x8xf32, #tpu.memory_space<vmem>>, %arg10: memref<1x2x64xf32, #tpu.memory_space<vmem>>, %arg11: memref<1x64x512xbf16, #tpu.memory_space<vmem>>, %arg12: memref<1x256x64xbf16, #tpu.memory_space<vmem>>, %arg13: memref<1x1x832xf32, #tpu.memory_space<vmem>>, %arg14: memref<2x32xf32, #tpu.memory_space<vmem>>, %arg15: memref<2x8x64xf32, #tpu.memory_space<vmem>>) attributes {dimension_semantics = [#tpu.dimension_semantics<arbitrary>], iteration_bounds = array<i64: 12>, scalar_prefetch = 0 : i64, scratch_operands = 1 : i64, tpu.core_type = #tpu.core_type<tc>, window_params = [{pipeline_mode = #tpu.pipeline_mode<synchronous>, transform_indices = @transform_0, window_bounds = array<i64: 2, 4, 768>}, {pipeline_mode = #tpu.pipeline_mode<synchronous>, transform_indices = @transform_1, window_bounds = array<i64: 768, 64>}, {pipeline_mode = #tpu.pipeline_mode<synchronous>, transform_indices = @transform_2, window_bounds = array<i64: 1, 64>}, {pipeline_mode = #tpu.pipeline_mode<synchronous>, transform_indices = @transform_3, window_bounds = array<i64: 5, 64>}, {pipeline_mode = #tpu.pipeline_mode<synchronous>, transform_indices = @transform_4, window_bounds = array<i64: 2, 64>}, {pipeline_mode = #tpu.pipeline_mode<synchronous>, transform_indices = @transform_5, window_bounds = array<i64: 2, 64>}, {pipeline_mode = #tpu.pipeline_mode<synchronous>, transform_indices = @transform_6, window_bounds = array<i64: 2, 64>}, {pipeline_mode = #tpu.pipeline_mode<synchronous>, transform_indices = @transform_7, window_bounds = array<i64: 64, 32>}, {pipeline_mode = #tpu.pipeline_mode<synchronous>, transform_indices = @transform_8, window_bounds = array<i64: 8, 8>}, {transform_indices = @transform_9, window_bounds = array<i64: 1, 2, 64>}, {transform_indices = @transform_10, window_bounds = array<i64: 1, 64, 512>}, {transform_indices = @transform_11, window_bounds = array<i64: 1, 256, 64>}, {transform_indices = @transform_12, window_bounds = array<i64: 1, 1, 832>}, {pipeline_mode = #tpu.pipeline_mode<synchronous>, transform_indices = @transform_13, window_bounds = array<i64: 2, 32>}]} {
    %c0_i32 = arith.constant 0 : i32
    %0 = arith.cmpi eq, %arg0, %c0_i32 : i32
    %1 = arith.extui %0 : i1 to i32
    %c0_i32_0 = arith.constant 0 : i32
    %2 = arith.cmpi ne, %1, %c0_i32_0 : i32
    scf.if %2 {
      %c0_67 = arith.constant 0 : index
      %c0_68 = arith.constant 0 : index
      %c0_69 = arith.constant 0 : index
      %237 = vector.load %arg1[%c0_67, %c0_68, %c0_69] : memref<2x4x768xf32, #tpu.memory_space<vmem>>, vector<2x4x768xf32>
      %238 = vector.shape_cast %237 : vector<2x4x768xf32> to vector<8x768xf32>
      %c0_70 = arith.constant 0 : index
      %c0_71 = arith.constant 0 : index
      %239 = vector.load %arg2[%c0_70, %c0_71] : memref<768x64xf32, #tpu.memory_space<vmem>>, vector<768x64xf32>
      %240 = arith.truncf %238 : vector<8x768xf32> to vector<8x768xbf16>
      %241 = arith.truncf %239 : vector<768x64xf32> to vector<768x64xbf16>
      %cst_72 = arith.constant dense<0.000000e+00> : vector<8x64xf32>
      %242 = tpu.matmul %240, %241, %cst_72 {dimension_numbers = #tpu.dot_dimension_numbers<[1], [0], [0], [1], [0, 0, 1, 1], [], []>} : vector<8x768xbf16>, vector<768x64xbf16>, vector<8x64xf32> -> vector<8x64xf32>
      %243 = vector.shape_cast %242 : vector<8x64xf32> to vector<2x4x64xf32>
      %c0_73 = arith.constant 0 : index
      %c0_74 = arith.constant 0 : index
      %244 = vector.load %arg3[%c0_73, %c0_74] : memref<1x64xf32, #tpu.memory_space<vmem>>, vector<1x64xf32>
      %245 = vector.shape_cast %244 : vector<1x64xf32> to vector<1x1x64xf32>
      %246 = vector.shape_cast %245 : vector<1x1x64xf32> to vector<1x1x64xf32>
      %247 = vector.broadcast %246 : vector<1x1x64xf32> to vector<2x1x64xf32>
      %248 = tpu.concatenate %247, %243 in 1 : vector<2x1x64xf32>, vector<2x4x64xf32> -> vector<2x5x64xf32>
      %c0_75 = arith.constant 0 : index
      %c0_76 = arith.constant 0 : index
      %249 = vector.load %arg4[%c0_75, %c0_76] : memref<5x64xf32, #tpu.memory_space<vmem>>, vector<5x64xf32>
      %250 = vector.shape_cast %249 : vector<5x64xf32> to vector<1x5x64xf32>
      %251 = vector.broadcast %250 : vector<1x5x64xf32> to vector<2x5x64xf32>
      %252 = arith.addf %248, %251 : vector<2x5x64xf32>
      %c0_77 = arith.constant 0 : index
      %c0_78 = arith.constant 0 : index
      %253 = vector.load %arg5[%c0_77, %c0_78] : memref<2x64xf32, #tpu.memory_space<vmem>>, vector<1x64xf32>
      %c1 = arith.constant 1 : index
      %c0_79 = arith.constant 0 : index
      %254 = vector.load %arg5[%c1, %c0_79] : memref<2x64xf32, #tpu.memory_space<vmem>>, vector<1x64xf32>
      %cst_80 = arith.constant dense<0.000000e+00> : vector<2x5xf32>
      %255 = vector.multi_reduction <add>, %252, %cst_80 [2] : vector<2x5x64xf32> to vector<2x5xf32>
      %256 = vector.shape_cast %255 : vector<2x5xf32> to vector<2x5x1xf32>
      %cst_81 = arith.constant 6.400000e+01 : f32
      %257 = vector.broadcast %cst_81 : f32 to vector<2x5x1xf32>
      %258 = arith.divf %256, %257 : vector<2x5x1xf32>
      %259 = vector.broadcast %258 : vector<2x5x1xf32> to vector<2x5x64xf32>
      %260 = arith.subf %252, %259 : vector<2x5x64xf32>
      %261 = arith.mulf %260, %260 : vector<2x5x64xf32>
      %cst_82 = arith.constant dense<0.000000e+00> : vector<2x5xf32>
      %262 = vector.multi_reduction <add>, %261, %cst_82 [2] : vector<2x5x64xf32> to vector<2x5xf32>
      %263 = vector.shape_cast %262 : vector<2x5xf32> to vector<2x5x1xf32>
      %cst_83 = arith.constant 6.400000e+01 : f32
      %264 = vector.broadcast %cst_83 : f32 to vector<2x5x1xf32>
      %265 = arith.divf %263, %264 : vector<2x5x1xf32>
      %266 = vector.broadcast %258 : vector<2x5x1xf32> to vector<2x5x64xf32>
      %267 = arith.subf %252, %266 : vector<2x5x64xf32>
      %cst_84 = arith.constant 9.99999974E-6 : f32
      %268 = vector.broadcast %cst_84 : f32 to vector<2x5x1xf32>
      %269 = arith.addf %265, %268 : vector<2x5x1xf32>
      %270 = math.rsqrt %269 : vector<2x5x1xf32>
      %271 = vector.broadcast %270 : vector<2x5x1xf32> to vector<2x5x64xf32>
      %272 = arith.mulf %267, %271 : vector<2x5x64xf32>
      %273 = vector.shape_cast %253 : vector<1x64xf32> to vector<1x1x64xf32>
      %274 = vector.broadcast %273 : vector<1x1x64xf32> to vector<2x5x64xf32>
      %275 = arith.mulf %272, %274 : vector<2x5x64xf32>
      %276 = vector.shape_cast %254 : vector<1x64xf32> to vector<1x1x64xf32>
      %277 = vector.broadcast %276 : vector<1x1x64xf32> to vector<2x5x64xf32>
      %278 = arith.addf %275, %277 : vector<2x5x64xf32>
      %c0_85 = arith.constant 0 : index
      %c0_86 = arith.constant 0 : index
      %279 = vector.load %arg6[%c0_85, %c0_86] : memref<2x64xf32, #tpu.memory_space<vmem>>, vector<2x64xf32>
      %280 = vector.shape_cast %279 : vector<2x64xf32> to vector<1x2x64xf32>
      %281 = vector.shape_cast %280 : vector<1x2x64xf32> to vector<1x2x64xf32>
      %282 = vector.broadcast %281 : vector<1x2x64xf32> to vector<2x2x64xf32>
      %cst_87 = arith.constant 0.000000e+00 : f32
      %283 = vector.broadcast %cst_87 : f32 to vector<2x1x64xf32>
      %284 = vector.extract_strided_slice %278 {offsets = [0, 0, 0], sizes = [2, 1, 64], strides = [1, 1, 1]} : vector<2x5x64xf32> to vector<2x1x64xf32>
      %285 = vector.extract_strided_slice %278 {offsets = [0, 1, 0], sizes = [2, 4, 64], strides = [1, 1, 1]} : vector<2x5x64xf32> to vector<2x4x64xf32>
      %286 = tpu.concatenate %284, %282, %285, %283 in 1 : vector<2x1x64xf32>, vector<2x2x64xf32>, vector<2x4x64xf32>, vector<2x1x64xf32> -> vector<2x8x64xf32>
      %c0_88 = arith.constant 0 : index
      %c0_89 = arith.constant 0 : index
      %c0_90 = arith.constant 0 : index
      %287 = vector.load %arg15[%c0_88, %c0_89, %c0_90] : memref<2x8x64xf32, #tpu.memory_space<vmem>>, vector<2x8x64xf32>
      tpu.vector_store %arg15[%c0_88, %c0_89, %c0_90], %286 {strides = array<i32>} : memref<2x8x64xf32, #tpu.memory_space<vmem>>, vector<2x8x64xf32>,
    } else {
    }
    %c0_i32_1 = arith.constant 0 : i32
    %3 = arith.cmpi sgt, %arg0, %c0_i32_1 : i32
    %c11_i32 = arith.constant 11 : i32
    %4 = arith.cmpi sle, %arg0, %c11_i32 : i32
    %5 = arith.andi %3, %4 : i1
    %6 = arith.extui %5 : i1 to i32
    %c0_i32_2 = arith.constant 0 : i32
    %7 = arith.cmpi ne, %6, %c0_i32_2 : i32
    scf.if %7 {
      %c0_67 = arith.constant 0 : index
      %c0_68 = arith.constant 0 : index
      %c0_69 = arith.constant 0 : index
      %237 = vector.load %arg10[%c0_67, %c0_68, %c0_69] : memref<1x2x64xf32, #tpu.memory_space<vmem>>, vector<1x2x64xf32>
      %238 = vector.shape_cast %237 : vector<1x2x64xf32> to vector<2x64xf32>
      %239 = vector.shape_cast %238 : vector<2x64xf32> to vector<1x2x64xf32>
      %240 = vector.shape_cast %239 : vector<1x2x64xf32> to vector<1x2x64xf32>
      %241 = vector.broadcast %240 : vector<1x2x64xf32> to vector<2x2x64xf32>
      %cst_70 = arith.constant 0.000000e+00 : f32
      %242 = vector.broadcast %cst_70 : f32 to vector<2x1x64xf32>
      %cst_71 = arith.constant 0.000000e+00 : f32
      %243 = vector.broadcast %cst_71 : f32 to vector<2x5x64xf32>
      %244 = tpu.concatenate %242, %241, %243 in 1 : vector<2x1x64xf32>, vector<2x2x64xf32>, vector<2x5x64xf32> -> vector<2x8x64xf32>
      %245 = tpu.iota {dimensions = array<i32: 0>} : vector<8x64xi32>
      %246 = vector.shape_cast %245 : vector<8x64xi32> to vector<1x8x64xi32>
      %c1_i32 = arith.constant 1 : i32
      %247 = vector.broadcast %c1_i32 : i32 to vector<1x8x64xi32>
      %248 = arith.cmpi slt, %246, %247 : vector<1x8x64xi32>
      %c3_i32 = arith.constant 3 : i32
      %249 = vector.broadcast %c3_i32 : i32 to vector<1x8x64xi32>
      %250 = arith.cmpi sge, %246, %249 : vector<1x8x64xi32>
      %251 = arith.ori %248, %250 : vector<1x8x64xi1>
      %c0_72 = arith.constant 0 : index
      %c0_73 = arith.constant 0 : index
      %c0_74 = arith.constant 0 : index
      %252 = vector.load %arg15[%c0_72, %c0_73, %c0_74] : memref<2x8x64xf32, #tpu.memory_space<vmem>>, vector<2x8x64xf32>
      %253 = vector.shape_cast %251 : vector<1x8x64xi1> to vector<1x8x64xi1>
      %254 = vector.broadcast %253 : vector<1x8x64xi1> to vector<2x8x64xi1>
      %255 = arith.select %254, %252, %244 : vector<2x8x64xi1>, vector<2x8x64xf32>
      %c0_75 = arith.constant 0 : index
      %c0_76 = arith.constant 0 : index
      %c0_77 = arith.constant 0 : index
      %256 = vector.load %arg15[%c0_75, %c0_76, %c0_77] : memref<2x8x64xf32, #tpu.memory_space<vmem>>, vector<2x8x64xf32>
      tpu.vector_store %arg15[%c0_75, %c0_76, %c0_77], %255 {strides = array<i32>} : memref<2x8x64xf32, #tpu.memory_space<vmem>>, vector<2x8x64xf32>,
    } else {
    }
    %c0 = arith.constant 0 : index
    %c0_3 = arith.constant 0 : index
    %c0_4 = arith.constant 0 : index
    %8 = vector.load %arg15[%c0, %c0_3, %c0_4] : memref<2x8x64xf32, #tpu.memory_space<vmem>>, vector<2x8x64xf32>
    %c0_5 = arith.constant 0 : index
    %c0_6 = arith.constant 0 : index
    %9 = vector.load %arg9[%c0_5, %c0_6] : memref<8x8xf32, #tpu.memory_space<vmem>>, vector<8x8xf32>
    %c0_7 = arith.constant 0 : index
    %c0_8 = arith.constant 0 : index
    %c0_9 = arith.constant 0 : index
    %10 = vector.load %arg13[%c0_7, %c0_8, %c0_9] : memref<1x1x832xf32, #tpu.memory_space<vmem>>, vector<1x1x832xf32>
    %11 = vector.shape_cast %10 : vector<1x1x832xf32> to vector<1x832xf32>
    %12 = vector.extract_strided_slice %11 {offsets = [0, 0], sizes = [1, 64], strides = [1, 1]} : vector<1x832xf32> to vector<1x64xf32>
    %13 = vector.extract_strided_slice %11 {offsets = [0, 64], sizes = [1, 64], strides = [1, 1]} : vector<1x832xf32> to vector<1x64xf32>
    %14 = vector.extract_strided_slice %11 {offsets = [0, 128], sizes = [1, 192], strides = [1, 1]} : vector<1x832xf32> to vector<1x192xf32>
    %15 = vector.extract_strided_slice %11 {offsets = [0, 320], sizes = [1, 64], strides = [1, 1]} : vector<1x832xf32> to vector<1x64xf32>
    %16 = vector.extract_strided_slice %11 {offsets = [0, 384], sizes = [1, 64], strides = [1, 1]} : vector<1x832xf32> to vector<1x64xf32>
    %17 = vector.extract_strided_slice %11 {offsets = [0, 448], sizes = [1, 64], strides = [1, 1]} : vector<1x832xf32> to vector<1x64xf32>
    %18 = vector.extract_strided_slice %11 {offsets = [0, 512], sizes = [1, 256], strides = [1, 1]} : vector<1x832xf32> to vector<1x256xf32>
    %19 = vector.extract_strided_slice %11 {offsets = [0, 768], sizes = [1, 64], strides = [1, 1]} : vector<1x832xf32> to vector<1x64xf32>
    %c0_10 = arith.constant 0 : index
    %c0_11 = arith.constant 0 : index
    %c0_12 = arith.constant 0 : index
    %20 = vector.load %arg11[%c0_10, %c0_11, %c0_12] : memref<1x64x512xbf16, #tpu.memory_space<vmem>>, vector<1x64x192xbf16>
    %21 = vector.shape_cast %20 : vector<1x64x192xbf16> to vector<64x192xbf16>
    %c0_13 = arith.constant 0 : index
    %c0_14 = arith.constant 0 : index
    %c192 = arith.constant 192 : index
    %22 = vector.load %arg11[%c0_13, %c0_14, %c192] : memref<1x64x512xbf16, #tpu.memory_space<vmem>>, vector<1x64x64xbf16>
    %23 = vector.shape_cast %22 : vector<1x64x64xbf16> to vector<64x64xbf16>
    %c0_15 = arith.constant 0 : index
    %c0_16 = arith.constant 0 : index
    %c256 = arith.constant 256 : index
    %24 = vector.load %arg11[%c0_15, %c0_16, %c256] : memref<1x64x512xbf16, #tpu.memory_space<vmem>>, vector<1x64x256xbf16>
    %25 = vector.shape_cast %24 : vector<1x64x256xbf16> to vector<64x256xbf16>
    %c0_17 = arith.constant 0 : index
    %c0_18 = arith.constant 0 : index
    %c0_19 = arith.constant 0 : index
    %26 = vector.load %arg12[%c0_17, %c0_18, %c0_19] : memref<1x256x64xbf16, #tpu.memory_space<vmem>>, vector<1x256x64xbf16>
    %27 = vector.shape_cast %26 : vector<1x256x64xbf16> to vector<256x64xbf16>
    %cst = arith.constant dense<0.000000e+00> : vector<2x8xf32>
    %28 = vector.multi_reduction <add>, %8, %cst [2] : vector<2x8x64xf32> to vector<2x8xf32>
    %29 = vector.shape_cast %28 : vector<2x8xf32> to vector<2x8x1xf32>
    %cst_20 = arith.constant 6.400000e+01 : f32
    %30 = vector.broadcast %cst_20 : f32 to vector<2x8x1xf32>
    %31 = arith.divf %29, %30 : vector<2x8x1xf32>
    %32 = vector.broadcast %31 : vector<2x8x1xf32> to vector<2x8x64xf32>
    %33 = arith.subf %8, %32 : vector<2x8x64xf32>
    %34 = arith.mulf %33, %33 : vector<2x8x64xf32>
    %cst_21 = arith.constant dense<0.000000e+00> : vector<2x8xf32>
    %35 = vector.multi_reduction <add>, %34, %cst_21 [2] : vector<2x8x64xf32> to vector<2x8xf32>
    %36 = vector.shape_cast %35 : vector<2x8xf32> to vector<2x8x1xf32>
    %cst_22 = arith.constant 6.400000e+01 : f32
    %37 = vector.broadcast %cst_22 : f32 to vector<2x8x1xf32>
    %38 = arith.divf %36, %37 : vector<2x8x1xf32>
    %39 = vector.broadcast %31 : vector<2x8x1xf32> to vector<2x8x64xf32>
    %40 = arith.subf %8, %39 : vector<2x8x64xf32>
    %cst_23 = arith.constant 9.99999974E-6 : f32
    %41 = vector.broadcast %cst_23 : f32 to vector<2x8x1xf32>
    %42 = arith.addf %38, %41 : vector<2x8x1xf32>
    %43 = math.rsqrt %42 : vector<2x8x1xf32>
    %44 = vector.broadcast %43 : vector<2x8x1xf32> to vector<2x8x64xf32>
    %45 = arith.mulf %40, %44 : vector<2x8x64xf32>
    %46 = vector.shape_cast %12 : vector<1x64xf32> to vector<1x1x64xf32>
    %47 = vector.broadcast %46 : vector<1x1x64xf32> to vector<2x8x64xf32>
    %48 = arith.mulf %45, %47 : vector<2x8x64xf32>
    %49 = vector.shape_cast %13 : vector<1x64xf32> to vector<1x1x64xf32>
    %50 = vector.broadcast %49 : vector<1x1x64xf32> to vector<2x8x64xf32>
    %51 = arith.addf %48, %50 : vector<2x8x64xf32>
    %52 = vector.shape_cast %51 : vector<2x8x64xf32> to vector<16x64xf32>
    %53 = arith.truncf %52 : vector<16x64xf32> to vector<16x64xbf16>
    %cst_24 = arith.constant dense<0.000000e+00> : vector<16x192xf32>
    %54 = tpu.matmul %53, %21, %cst_24 {dimension_numbers = #tpu.dot_dimension_numbers<[1], [0], [0], [1], [0, 0, 1, 1], [], []>} : vector<16x64xbf16>, vector<64x192xbf16>, vector<16x192xf32> -> vector<16x192xf32>
    %55 = vector.shape_cast %54 : vector<16x192xf32> to vector<2x8x192xf32>
    %56 = vector.shape_cast %14 : vector<1x192xf32> to vector<1x1x192xf32>
    %57 = vector.broadcast %56 : vector<1x1x192xf32> to vector<2x8x192xf32>
    %58 = arith.addf %55, %57 : vector<2x8x192xf32>
    %59 = vector.extract_strided_slice %58 {offsets = [0, 0, 0], sizes = [2, 8, 16], strides = [1, 1, 1]} : vector<2x8x192xf32> to vector<2x8x16xf32>
    %cst_25 = arith.constant 2.500000e-01 : f32
    %60 = vector.broadcast %cst_25 : f32 to vector<2x8x16xf32>
    %61 = arith.mulf %59, %60 : vector<2x8x16xf32>
    %62 = vector.extract_strided_slice %58 {offsets = [0, 0, 64], sizes = [2, 8, 16], strides = [1, 1, 1]} : vector<2x8x192xf32> to vector<2x8x16xf32>
    %63 = vector.extract_strided_slice %58 {offsets = [0, 0, 128], sizes = [2, 8, 16], strides = [1, 1, 1]} : vector<2x8x192xf32> to vector<2x8x16xf32>
    %64 = arith.truncf %61 : vector<2x8x16xf32> to vector<2x8x16xbf16>
    %65 = arith.truncf %62 : vector<2x8x16xf32> to vector<2x8x16xbf16>
    "tpu.trace_start"() <{level = 10 : i32, message = "bqd,bkd->bqk"}> : () -> ()
    %cst_26 = arith.constant dense<0.000000e+00> : vector<2x8x8xf32>
    %66 = tpu.matmul %64, %65, %cst_26 {dimension_numbers = #tpu.dot_dimension_numbers<[2], [2], [1], [1], [0, 0, 0, 1, 1, 1], [0], [0]>} : vector<2x8x16xbf16>, vector<2x8x16xbf16>, vector<2x8x8xf32> -> vector<2x8x8xf32>
    "tpu.trace_stop"() : () -> ()
    %67 = vector.shape_cast %9 : vector<8x8xf32> to vector<1x8x8xf32>
    %68 = vector.broadcast %67 : vector<1x8x8xf32> to vector<2x8x8xf32>
    %69 = arith.addf %66, %68 : vector<2x8x8xf32>
    %cst_27 = arith.constant dense<0xFF800000> : vector<2x8xf32>
    %70 = vector.multi_reduction <maximumf>, %69, %cst_27 [2] : vector<2x8x8xf32> to vector<2x8xf32>
    %cst_28 = arith.constant 0xFF800000 : f32
    %71 = vector.broadcast %cst_28 : f32 to vector<2x8xf32>
    %72 = arith.maximumf %71, %70 : vector<2x8xf32>
    %73 = vector.shape_cast %72 : vector<2x8xf32> to vector<2x8x1xf32>
    %74 = vector.broadcast %73 : vector<2x8x1xf32> to vector<2x8x8xf32>
    %75 = arith.subf %69, %74 : vector<2x8x8xf32>
    %76 = math.exp %75 : vector<2x8x8xf32>
    %cst_29 = arith.constant dense<0.000000e+00> : vector<2x8xf32>
    %77 = vector.multi_reduction <add>, %76, %cst_29 [2] : vector<2x8x8xf32> to vector<2x8xf32>
    %78 = vector.shape_cast %77 : vector<2x8xf32> to vector<2x8x1xf32>
    %79 = vector.broadcast %78 : vector<2x8x1xf32> to vector<2x8x8xf32>
    %80 = arith.divf %76, %79 : vector<2x8x8xf32>
    %81 = arith.truncf %80 : vector<2x8x8xf32> to vector<2x8x8xbf16>
    %82 = arith.truncf %63 : vector<2x8x16xf32> to vector<2x8x16xbf16>
    "tpu.trace_start"() <{level = 10 : i32, message = "bqk,bkd->bqd"}> : () -> ()
    %cst_30 = arith.constant dense<0.000000e+00> : vector<2x8x16xf32>
    %83 = tpu.matmul %81, %82, %cst_30 {dimension_numbers = #tpu.dot_dimension_numbers<[2], [1], [1], [2], [0, 0, 0, 1, 1, 2], [0], [0]>} : vector<2x8x8xbf16>, vector<2x8x16xbf16>, vector<2x8x16xf32> -> vector<2x8x16xf32>
    "tpu.trace_stop"() : () -> ()
    %84 = vector.extract_strided_slice %23 {offsets = [0, 0], sizes = [16, 64], strides = [1, 1]} : vector<64x64xbf16> to vector<16x64xbf16>
    %85 = vector.shape_cast %83 : vector<2x8x16xf32> to vector<16x16xf32>
    %86 = arith.truncf %85 : vector<16x16xf32> to vector<16x16xbf16>
    %cst_31 = arith.constant dense<0.000000e+00> : vector<16x64xf32>
    %87 = tpu.matmul %86, %84, %cst_31 {dimension_numbers = #tpu.dot_dimension_numbers<[1], [0], [0], [1], [0, 0, 1, 1], [], []>} : vector<16x16xbf16>, vector<16x64xbf16>, vector<16x64xf32> -> vector<16x64xf32>
    %88 = vector.shape_cast %87 : vector<16x64xf32> to vector<2x8x64xf32>
    %89 = vector.extract_strided_slice %58 {offsets = [0, 0, 16], sizes = [2, 8, 16], strides = [1, 1, 1]} : vector<2x8x192xf32> to vector<2x8x16xf32>
    %cst_32 = arith.constant 2.500000e-01 : f32
    %90 = vector.broadcast %cst_32 : f32 to vector<2x8x16xf32>
    %91 = arith.mulf %89, %90 : vector<2x8x16xf32>
    %92 = vector.extract_strided_slice %58 {offsets = [0, 0, 80], sizes = [2, 8, 16], strides = [1, 1, 1]} : vector<2x8x192xf32> to vector<2x8x16xf32>
    %93 = vector.extract_strided_slice %58 {offsets = [0, 0, 144], sizes = [2, 8, 16], strides = [1, 1, 1]} : vector<2x8x192xf32> to vector<2x8x16xf32>
    %94 = arith.truncf %91 : vector<2x8x16xf32> to vector<2x8x16xbf16>
    %95 = arith.truncf %92 : vector<2x8x16xf32> to vector<2x8x16xbf16>
    "tpu.trace_start"() <{level = 10 : i32, message = "bqd,bkd->bqk"}> : () -> ()
    %cst_33 = arith.constant dense<0.000000e+00> : vector<2x8x8xf32>
    %96 = tpu.matmul %94, %95, %cst_33 {dimension_numbers = #tpu.dot_dimension_numbers<[2], [2], [1], [1], [0, 0, 0, 1, 1, 1], [0], [0]>} : vector<2x8x16xbf16>, vector<2x8x16xbf16>, vector<2x8x8xf32> -> vector<2x8x8xf32>
    "tpu.trace_stop"() : () -> ()
    %97 = vector.shape_cast %9 : vector<8x8xf32> to vector<1x8x8xf32>
    %98 = vector.broadcast %97 : vector<1x8x8xf32> to vector<2x8x8xf32>
    %99 = arith.addf %96, %98 : vector<2x8x8xf32>
    %cst_34 = arith.constant dense<0xFF800000> : vector<2x8xf32>
    %100 = vector.multi_reduction <maximumf>, %99, %cst_34 [2] : vector<2x8x8xf32> to vector<2x8xf32>
    %cst_35 = arith.constant 0xFF800000 : f32
    %101 = vector.broadcast %cst_35 : f32 to vector<2x8xf32>
    %102 = arith.maximumf %101, %100 : vector<2x8xf32>
    %103 = vector.shape_cast %102 : vector<2x8xf32> to vector<2x8x1xf32>
    %104 = vector.broadcast %103 : vector<2x8x1xf32> to vector<2x8x8xf32>
    %105 = arith.subf %99, %104 : vector<2x8x8xf32>
    %106 = math.exp %105 : vector<2x8x8xf32>
    %cst_36 = arith.constant dense<0.000000e+00> : vector<2x8xf32>
    %107 = vector.multi_reduction <add>, %106, %cst_36 [2] : vector<2x8x8xf32> to vector<2x8xf32>
    %108 = vector.shape_cast %107 : vector<2x8xf32> to vector<2x8x1xf32>
    %109 = vector.broadcast %108 : vector<2x8x1xf32> to vector<2x8x8xf32>
    %110 = arith.divf %106, %109 : vector<2x8x8xf32>
    %111 = arith.truncf %110 : vector<2x8x8xf32> to vector<2x8x8xbf16>
    %112 = arith.truncf %93 : vector<2x8x16xf32> to vector<2x8x16xbf16>
    "tpu.trace_start"() <{level = 10 : i32, message = "bqk,bkd->bqd"}> : () -> ()
    %cst_37 = arith.constant dense<0.000000e+00> : vector<2x8x16xf32>
    %113 = tpu.matmul %111, %112, %cst_37 {dimension_numbers = #tpu.dot_dimension_numbers<[2], [1], [1], [2], [0, 0, 0, 1, 1, 2], [0], [0]>} : vector<2x8x8xbf16>, vector<2x8x16xbf16>, vector<2x8x16xf32> -> vector<2x8x16xf32>
    "tpu.trace_stop"() : () -> ()
    %114 = vector.extract_strided_slice %23 {offsets = [16, 0], sizes = [16, 64], strides = [1, 1]} : vector<64x64xbf16> to vector<16x64xbf16>
    %115 = vector.shape_cast %113 : vector<2x8x16xf32> to vector<16x16xf32>
    %116 = arith.truncf %115 : vector<16x16xf32> to vector<16x16xbf16>
    %cst_38 = arith.constant dense<0.000000e+00> : vector<16x64xf32>
    %117 = tpu.matmul %116, %114, %cst_38 {dimension_numbers = #tpu.dot_dimension_numbers<[1], [0], [0], [1], [0, 0, 1, 1], [], []>} : vector<16x16xbf16>, vector<16x64xbf16>, vector<16x64xf32> -> vector<16x64xf32>
    %118 = vector.shape_cast %117 : vector<16x64xf32> to vector<2x8x64xf32>
    %119 = arith.addf %88, %118 : vector<2x8x64xf32>
    %120 = vector.extract_strided_slice %58 {offsets = [0, 0, 32], sizes = [2, 8, 16], strides = [1, 1, 1]} : vector<2x8x192xf32> to vector<2x8x16xf32>
    %cst_39 = arith.constant 2.500000e-01 : f32
    %121 = vector.broadcast %cst_39 : f32 to vector<2x8x16xf32>
    %122 = arith.mulf %120, %121 : vector<2x8x16xf32>
    %123 = vector.extract_strided_slice %58 {offsets = [0, 0, 96], sizes = [2, 8, 16], strides = [1, 1, 1]} : vector<2x8x192xf32> to vector<2x8x16xf32>
    %124 = vector.extract_strided_slice %58 {offsets = [0, 0, 160], sizes = [2, 8, 16], strides = [1, 1, 1]} : vector<2x8x192xf32> to vector<2x8x16xf32>
    %125 = arith.truncf %122 : vector<2x8x16xf32> to vector<2x8x16xbf16>
    %126 = arith.truncf %123 : vector<2x8x16xf32> to vector<2x8x16xbf16>
    "tpu.trace_start"() <{level = 10 : i32, message = "bqd,bkd->bqk"}> : () -> ()
    %cst_40 = arith.constant dense<0.000000e+00> : vector<2x8x8xf32>
    %127 = tpu.matmul %125, %126, %cst_40 {dimension_numbers = #tpu.dot_dimension_numbers<[2], [2], [1], [1], [0, 0, 0, 1, 1, 1], [0], [0]>} : vector<2x8x16xbf16>, vector<2x8x16xbf16>, vector<2x8x8xf32> -> vector<2x8x8xf32>
    "tpu.trace_stop"() : () -> ()
    %128 = vector.shape_cast %9 : vector<8x8xf32> to vector<1x8x8xf32>
    %129 = vector.broadcast %128 : vector<1x8x8xf32> to vector<2x8x8xf32>
    %130 = arith.addf %127, %129 : vector<2x8x8xf32>
    %cst_41 = arith.constant dense<0xFF800000> : vector<2x8xf32>
    %131 = vector.multi_reduction <maximumf>, %130, %cst_41 [2] : vector<2x8x8xf32> to vector<2x8xf32>
    %cst_42 = arith.constant 0xFF800000 : f32
    %132 = vector.broadcast %cst_42 : f32 to vector<2x8xf32>
    %133 = arith.maximumf %132, %131 : vector<2x8xf32>
    %134 = vector.shape_cast %133 : vector<2x8xf32> to vector<2x8x1xf32>
    %135 = vector.broadcast %134 : vector<2x8x1xf32> to vector<2x8x8xf32>
    %136 = arith.subf %130, %135 : vector<2x8x8xf32>
    %137 = math.exp %136 : vector<2x8x8xf32>
    %cst_43 = arith.constant dense<0.000000e+00> : vector<2x8xf32>
    %138 = vector.multi_reduction <add>, %137, %cst_43 [2] : vector<2x8x8xf32> to vector<2x8xf32>
    %139 = vector.shape_cast %138 : vector<2x8xf32> to vector<2x8x1xf32>
    %140 = vector.broadcast %139 : vector<2x8x1xf32> to vector<2x8x8xf32>
    %141 = arith.divf %137, %140 : vector<2x8x8xf32>
    %142 = arith.truncf %141 : vector<2x8x8xf32> to vector<2x8x8xbf16>
    %143 = arith.truncf %124 : vector<2x8x16xf32> to vector<2x8x16xbf16>
    "tpu.trace_start"() <{level = 10 : i32, message = "bqk,bkd->bqd"}> : () -> ()
    %cst_44 = arith.constant dense<0.000000e+00> : vector<2x8x16xf32>
    %144 = tpu.matmul %142, %143, %cst_44 {dimension_numbers = #tpu.dot_dimension_numbers<[2], [1], [1], [2], [0, 0, 0, 1, 1, 2], [0], [0]>} : vector<2x8x8xbf16>, vector<2x8x16xbf16>, vector<2x8x16xf32> -> vector<2x8x16xf32>
    "tpu.trace_stop"() : () -> ()
    %145 = vector.extract_strided_slice %23 {offsets = [32, 0], sizes = [16, 64], strides = [1, 1]} : vector<64x64xbf16> to vector<16x64xbf16>
    %146 = vector.shape_cast %144 : vector<2x8x16xf32> to vector<16x16xf32>
    %147 = arith.truncf %146 : vector<16x16xf32> to vector<16x16xbf16>
    %cst_45 = arith.constant dense<0.000000e+00> : vector<16x64xf32>
    %148 = tpu.matmul %147, %145, %cst_45 {dimension_numbers = #tpu.dot_dimension_numbers<[1], [0], [0], [1], [0, 0, 1, 1], [], []>} : vector<16x16xbf16>, vector<16x64xbf16>, vector<16x64xf32> -> vector<16x64xf32>
    %149 = vector.shape_cast %148 : vector<16x64xf32> to vector<2x8x64xf32>
    %150 = arith.addf %119, %149 : vector<2x8x64xf32>
    %151 = vector.extract_strided_slice %58 {offsets = [0, 0, 48], sizes = [2, 8, 16], strides = [1, 1, 1]} : vector<2x8x192xf32> to vector<2x8x16xf32>
    %cst_46 = arith.constant 2.500000e-01 : f32
    %152 = vector.broadcast %cst_46 : f32 to vector<2x8x16xf32>
    %153 = arith.mulf %151, %152 : vector<2x8x16xf32>
    %154 = vector.extract_strided_slice %58 {offsets = [0, 0, 112], sizes = [2, 8, 16], strides = [1, 1, 1]} : vector<2x8x192xf32> to vector<2x8x16xf32>
    %155 = vector.extract_strided_slice %58 {offsets = [0, 0, 176], sizes = [2, 8, 16], strides = [1, 1, 1]} : vector<2x8x192xf32> to vector<2x8x16xf32>
    %156 = arith.truncf %153 : vector<2x8x16xf32> to vector<2x8x16xbf16>
    %157 = arith.truncf %154 : vector<2x8x16xf32> to vector<2x8x16xbf16>
    "tpu.trace_start"() <{level = 10 : i32, message = "bqd,bkd->bqk"}> : () -> ()
    %cst_47 = arith.constant dense<0.000000e+00> : vector<2x8x8xf32>
    %158 = tpu.matmul %156, %157, %cst_47 {dimension_numbers = #tpu.dot_dimension_numbers<[2], [2], [1], [1], [0, 0, 0, 1, 1, 1], [0], [0]>} : vector<2x8x16xbf16>, vector<2x8x16xbf16>, vector<2x8x8xf32> -> vector<2x8x8xf32>
    "tpu.trace_stop"() : () -> ()
    %159 = vector.shape_cast %9 : vector<8x8xf32> to vector<1x8x8xf32>
    %160 = vector.broadcast %159 : vector<1x8x8xf32> to vector<2x8x8xf32>
    %161 = arith.addf %158, %160 : vector<2x8x8xf32>
    %cst_48 = arith.constant dense<0xFF800000> : vector<2x8xf32>
    %162 = vector.multi_reduction <maximumf>, %161, %cst_48 [2] : vector<2x8x8xf32> to vector<2x8xf32>
    %cst_49 = arith.constant 0xFF800000 : f32
    %163 = vector.broadcast %cst_49 : f32 to vector<2x8xf32>
    %164 = arith.maximumf %163, %162 : vector<2x8xf32>
    %165 = vector.shape_cast %164 : vector<2x8xf32> to vector<2x8x1xf32>
    %166 = vector.broadcast %165 : vector<2x8x1xf32> to vector<2x8x8xf32>
    %167 = arith.subf %161, %166 : vector<2x8x8xf32>
    %168 = math.exp %167 : vector<2x8x8xf32>
    %cst_50 = arith.constant dense<0.000000e+00> : vector<2x8xf32>
    %169 = vector.multi_reduction <add>, %168, %cst_50 [2] : vector<2x8x8xf32> to vector<2x8xf32>
    %170 = vector.shape_cast %169 : vector<2x8xf32> to vector<2x8x1xf32>
    %171 = vector.broadcast %170 : vector<2x8x1xf32> to vector<2x8x8xf32>
    %172 = arith.divf %168, %171 : vector<2x8x8xf32>
    %173 = arith.truncf %172 : vector<2x8x8xf32> to vector<2x8x8xbf16>
    %174 = arith.truncf %155 : vector<2x8x16xf32> to vector<2x8x16xbf16>
    "tpu.trace_start"() <{level = 10 : i32, message = "bqk,bkd->bqd"}> : () -> ()
    %cst_51 = arith.constant dense<0.000000e+00> : vector<2x8x16xf32>
    %175 = tpu.matmul %173, %174, %cst_51 {dimension_numbers = #tpu.dot_dimension_numbers<[2], [1], [1], [2], [0, 0, 0, 1, 1, 2], [0], [0]>} : vector<2x8x8xbf16>, vector<2x8x16xbf16>, vector<2x8x16xf32> -> vector<2x8x16xf32>
    "tpu.trace_stop"() : () -> ()
    %176 = vector.extract_strided_slice %23 {offsets = [48, 0], sizes = [16, 64], strides = [1, 1]} : vector<64x64xbf16> to vector<16x64xbf16>
    %177 = vector.shape_cast %175 : vector<2x8x16xf32> to vector<16x16xf32>
    %178 = arith.truncf %177 : vector<16x16xf32> to vector<16x16xbf16>
    %cst_52 = arith.constant dense<0.000000e+00> : vector<16x64xf32>
    %179 = tpu.matmul %178, %176, %cst_52 {dimension_numbers = #tpu.dot_dimension_numbers<[1], [0], [0], [1], [0, 0, 1, 1], [], []>} : vector<16x16xbf16>, vector<16x64xbf16>, vector<16x64xf32> -> vector<16x64xf32>
    %180 = vector.shape_cast %179 : vector<16x64xf32> to vector<2x8x64xf32>
    %181 = arith.addf %150, %180 : vector<2x8x64xf32>
    %182 = vector.shape_cast %15 : vector<1x64xf32> to vector<1x1x64xf32>
    %183 = vector.broadcast %182 : vector<1x1x64xf32> to vector<2x8x64xf32>
    %184 = arith.addf %181, %183 : vector<2x8x64xf32>
    %185 = arith.addf %8, %184 : vector<2x8x64xf32>
    %cst_53 = arith.constant dense<0.000000e+00> : vector<2x8xf32>
    %186 = vector.multi_reduction <add>, %185, %cst_53 [2] : vector<2x8x64xf32> to vector<2x8xf32>
    %187 = vector.shape_cast %186 : vector<2x8xf32> to vector<2x8x1xf32>
    %cst_54 = arith.constant 6.400000e+01 : f32
    %188 = vector.broadcast %cst_54 : f32 to vector<2x8x1xf32>
    %189 = arith.divf %187, %188 : vector<2x8x1xf32>
    %190 = vector.broadcast %189 : vector<2x8x1xf32> to vector<2x8x64xf32>
    %191 = arith.subf %185, %190 : vector<2x8x64xf32>
    %192 = arith.mulf %191, %191 : vector<2x8x64xf32>
    %cst_55 = arith.constant dense<0.000000e+00> : vector<2x8xf32>
    %193 = vector.multi_reduction <add>, %192, %cst_55 [2] : vector<2x8x64xf32> to vector<2x8xf32>
    %194 = vector.shape_cast %193 : vector<2x8xf32> to vector<2x8x1xf32>
    %cst_56 = arith.constant 6.400000e+01 : f32
    %195 = vector.broadcast %cst_56 : f32 to vector<2x8x1xf32>
    %196 = arith.divf %194, %195 : vector<2x8x1xf32>
    %197 = vector.broadcast %189 : vector<2x8x1xf32> to vector<2x8x64xf32>
    %198 = arith.subf %185, %197 : vector<2x8x64xf32>
    %cst_57 = arith.constant 9.99999974E-6 : f32
    %199 = vector.broadcast %cst_57 : f32 to vector<2x8x1xf32>
    %200 = arith.addf %196, %199 : vector<2x8x1xf32>
    %201 = math.rsqrt %200 : vector<2x8x1xf32>
    %202 = vector.broadcast %201 : vector<2x8x1xf32> to vector<2x8x64xf32>
    %203 = arith.mulf %198, %202 : vector<2x8x64xf32>
    %204 = vector.shape_cast %16 : vector<1x64xf32> to vector<1x1x64xf32>
    %205 = vector.broadcast %204 : vector<1x1x64xf32> to vector<2x8x64xf32>
    %206 = arith.mulf %203, %205 : vector<2x8x64xf32>
    %207 = vector.shape_cast %17 : vector<1x64xf32> to vector<1x1x64xf32>
    %208 = vector.broadcast %207 : vector<1x1x64xf32> to vector<2x8x64xf32>
    %209 = arith.addf %206, %208 : vector<2x8x64xf32>
    %210 = vector.shape_cast %209 : vector<2x8x64xf32> to vector<16x64xf32>
    %211 = arith.truncf %210 : vector<16x64xf32> to vector<16x64xbf16>
    %cst_58 = arith.constant dense<0.000000e+00> : vector<16x256xf32>
    %212 = tpu.matmul %211, %25, %cst_58 {dimension_numbers = #tpu.dot_dimension_numbers<[1], [0], [0], [1], [0, 0, 1, 1], [], []>} : vector<16x64xbf16>, vector<64x256xbf16>, vector<16x256xf32> -> vector<16x256xf32>
    %213 = vector.shape_cast %212 : vector<16x256xf32> to vector<2x8x256xf32>
    %214 = vector.shape_cast %18 : vector<1x256xf32> to vector<1x1x256xf32>
    %215 = vector.broadcast %214 : vector<1x1x256xf32> to vector<2x8x256xf32>
    %216 = arith.addf %213, %215 : vector<2x8x256xf32>
    %cst_59 = arith.constant 1.702000e+00 : f32
    %217 = vector.broadcast %cst_59 : f32 to vector<2x8x256xf32>
    %218 = arith.mulf %217, %216 : vector<2x8x256xf32>
    %219 = arith.negf %218 : vector<2x8x256xf32>
    %220 = math.exp %219 : vector<2x8x256xf32>
    %cst_60 = arith.constant 1.000000e+00 : f32
    %221 = vector.broadcast %cst_60 : f32 to vector<2x8x256xf32>
    %222 = arith.addf %221, %220 : vector<2x8x256xf32>
    %223 = arith.divf %221, %222 : vector<2x8x256xf32>
    %224 = arith.mulf %216, %223 : vector<2x8x256xf32>
    %225 = vector.shape_cast %224 : vector<2x8x256xf32> to vector<16x256xf32>
    %226 = arith.truncf %225 : vector<16x256xf32> to vector<16x256xbf16>
    %cst_61 = arith.constant dense<0.000000e+00> : vector<16x64xf32>
    %227 = tpu.matmul %226, %27, %cst_61 {dimension_numbers = #tpu.dot_dimension_numbers<[1], [0], [0], [1], [0, 0, 1, 1], [], []>} : vector<16x256xbf16>, vector<256x64xbf16>, vector<16x64xf32> -> vector<16x64xf32>
    %228 = vector.shape_cast %227 : vector<16x64xf32> to vector<2x8x64xf32>
    %229 = vector.shape_cast %19 : vector<1x64xf32> to vector<1x1x64xf32>
    %230 = vector.broadcast %229 : vector<1x1x64xf32> to vector<2x8x64xf32>
    %231 = arith.addf %228, %230 : vector<2x8x64xf32>
    %232 = arith.addf %185, %231 : vector<2x8x64xf32>
    %c0_62 = arith.constant 0 : index
    %c0_63 = arith.constant 0 : index
    %c0_64 = arith.constant 0 : index
    %233 = vector.load %arg15[%c0_62, %c0_63, %c0_64] : memref<2x8x64xf32, #tpu.memory_space<vmem>>, vector<2x8x64xf32>
    tpu.vector_store %arg15[%c0_62, %c0_63, %c0_64], %232 {strides = array<i32>} : memref<2x8x64xf32, #tpu.memory_space<vmem>>, vector<2x8x64xf32>,
    %c11_i32_65 = arith.constant 11 : i32
    %234 = arith.cmpi eq, %arg0, %c11_i32_65 : i32
    %235 = arith.extui %234 : i1 to i32
    %c0_i32_66 = arith.constant 0 : i32
    %236 = arith.cmpi ne, %235, %c0_i32_66 : i32
    scf.if %236 {
      %237 = vector.extract_strided_slice %232 {offsets = [0, 0, 0], sizes = [2, 1, 64], strides = [1, 1, 1]} : vector<2x8x64xf32> to vector<2x1x64xf32>
      %238 = vector.shape_cast %237 : vector<2x1x64xf32> to vector<2x64xf32>
      %c0_67 = arith.constant 0 : index
      %c0_68 = arith.constant 0 : index
      %239 = vector.load %arg7[%c0_67, %c0_68] : memref<2x64xf32, #tpu.memory_space<vmem>>, vector<1x64xf32>
      %c1 = arith.constant 1 : index
      %c0_69 = arith.constant 0 : index
      %240 = vector.load %arg7[%c1, %c0_69] : memref<2x64xf32, #tpu.memory_space<vmem>>, vector<1x64xf32>
      %cst_70 = arith.constant dense<0.000000e+00> : vector<2xf32>
      %241 = vector.multi_reduction <add>, %238, %cst_70 [1] : vector<2x64xf32> to vector<2xf32>
      %242 = vector.shape_cast %241 : vector<2xf32> to vector<2x1xf32>
      %cst_71 = arith.constant 6.400000e+01 : f32
      %243 = vector.broadcast %cst_71 : f32 to vector<2x1xf32>
      %244 = arith.divf %242, %243 : vector<2x1xf32>
      %245 = vector.broadcast %244 : vector<2x1xf32> to vector<2x64xf32>
      %246 = arith.subf %238, %245 : vector<2x64xf32>
      %247 = arith.mulf %246, %246 : vector<2x64xf32>
      %cst_72 = arith.constant dense<0.000000e+00> : vector<2xf32>
      %248 = vector.multi_reduction <add>, %247, %cst_72 [1] : vector<2x64xf32> to vector<2xf32>
      %249 = vector.shape_cast %248 : vector<2xf32> to vector<2x1xf32>
      %cst_73 = arith.constant 6.400000e+01 : f32
      %250 = vector.broadcast %cst_73 : f32 to vector<2x1xf32>
      %251 = arith.divf %249, %250 : vector<2x1xf32>
      %252 = vector.broadcast %244 : vector<2x1xf32> to vector<2x64xf32>
      %253 = arith.subf %238, %252 : vector<2x64xf32>
      %cst_74 = arith.constant 9.99999974E-6 : f32
      %254 = vector.broadcast %cst_74 : f32 to vector<2x1xf32>
      %255 = arith.addf %251, %254 : vector<2x1xf32>
      %256 = math.rsqrt %255 : vector<2x1xf32>
      %257 = vector.broadcast %256 : vector<2x1xf32> to vector<2x64xf32>
      %258 = arith.mulf %253, %257 : vector<2x64xf32>
      %259 = vector.broadcast %239 : vector<1x64xf32> to vector<2x64xf32>
      %260 = arith.mulf %258, %259 : vector<2x64xf32>
      %261 = vector.broadcast %240 : vector<1x64xf32> to vector<2x64xf32>
      %262 = arith.addf %260, %261 : vector<2x64xf32>
      %c0_75 = arith.constant 0 : index
      %c0_76 = arith.constant 0 : index
      %263 = vector.load %arg8[%c0_75, %c0_76] : memref<64x32xf32, #tpu.memory_space<vmem>>, vector<64x32xf32>
      %264 = arith.truncf %262 : vector<2x64xf32> to vector<2x64xbf16>
      %265 = arith.truncf %263 : vector<64x32xf32> to vector<64x32xbf16>
      %cst_77 = arith.constant dense<0.000000e+00> : vector<2x32xf32>
      %266 = tpu.matmul %264, %265, %cst_77 {dimension_numbers = #tpu.dot_dimension_numbers<[1], [0], [0], [1], [0, 0, 1, 1], [], []>} : vector<2x64xbf16>, vector<64x32xbf16>, vector<2x32xf32> -> vector<2x32xf32>
      %c0_78 = arith.constant 0 : index
      %c0_79 = arith.constant 0 : index
      %267 = vector.load %arg14[%c0_78, %c0_79] : memref<2x32xf32, #tpu.memory_space<vmem>>, vector<2x32xf32>
      tpu.vector_store %arg14[%c0_78, %c0_79], %266 {strides = array<i32>} : memref<2x32xf32, #tpu.memory_space<vmem>>, vector<2x32xf32>,
    } else {
    }
    return
  }
  func.func @transform_0(%arg0: i32) -> (i32, i32, i32) {
    %c0_i32 = arith.constant 0 : i32
    %c0_i32_0 = arith.constant 0 : i32
    %c0_i32_1 = arith.constant 0 : i32
    %c0_i32_2 = arith.constant 0 : i32
    return %c0_i32, %c0_i32_0, %c0_i32_1 : i32, i32, i32
  }
  func.func @transform_1(%arg0: i32) -> (i32, i32) {
    %c0_i32 = arith.constant 0 : i32
    %c0_i32_0 = arith.constant 0 : i32
    %c0_i32_1 = arith.constant 0 : i32
    return %c0_i32, %c0_i32_0 : i32, i32
  }
  func.func @transform_2(%arg0: i32) -> (i32, i32) {
    %c0_i32 = arith.constant 0 : i32
    %c0_i32_0 = arith.constant 0 : i32
    %c0_i32_1 = arith.constant 0 : i32
    return %c0_i32, %c0_i32_0 : i32, i32
  }
  func.func @transform_3(%arg0: i32) -> (i32, i32) {
    %c0_i32 = arith.constant 0 : i32
    %c0_i32_0 = arith.constant 0 : i32
    %c0_i32_1 = arith.constant 0 : i32
    return %c0_i32, %c0_i32_0 : i32, i32
  }
  func.func @transform_4(%arg0: i32) -> (i32, i32) {
    %c0_i32 = arith.constant 0 : i32
    %c0_i32_0 = arith.constant 0 : i32
    %c0_i32_1 = arith.constant 0 : i32
    return %c0_i32, %c0_i32_0 : i32, i32
  }
  func.func @transform_5(%arg0: i32) -> (i32, i32) {
    %c0_i32 = arith.constant 0 : i32
    %c0_i32_0 = arith.constant 0 : i32
    %c0_i32_1 = arith.constant 0 : i32
    return %c0_i32, %c0_i32_0 : i32, i32
  }
  func.func @transform_6(%arg0: i32) -> (i32, i32) {
    %c0_i32 = arith.constant 0 : i32
    %c0_i32_0 = arith.constant 0 : i32
    %c0_i32_1 = arith.constant 0 : i32
    return %c0_i32, %c0_i32_0 : i32, i32
  }
  func.func @transform_7(%arg0: i32) -> (i32, i32) {
    %c0_i32 = arith.constant 0 : i32
    %c0_i32_0 = arith.constant 0 : i32
    %c0_i32_1 = arith.constant 0 : i32
    return %c0_i32, %c0_i32_0 : i32, i32
  }
  func.func @transform_8(%arg0: i32) -> (i32, i32) {
    %c0_i32 = arith.constant 0 : i32
    %c0_i32_0 = arith.constant 0 : i32
    %c0_i32_1 = arith.constant 0 : i32
    return %c0_i32, %c0_i32_0 : i32, i32
  }
  func.func @transform_9(%arg0: i32) -> (i32, i32, i32) {
    %c1_i32 = arith.constant 1 : i32
    %0 = arith.subi %arg0, %c1_i32 : i32
    %c0_i32 = arith.constant 0 : i32
    %1 = arith.maxsi %0, %c0_i32 : i32
    %c0_i32_0 = arith.constant 0 : i32
    %c0_i32_1 = arith.constant 0 : i32
    %c0_i32_2 = arith.constant 0 : i32
    return %1, %c0_i32_0, %c0_i32_1 : i32, i32, i32
  }
  func.func @transform_10(%arg0: i32) -> (i32, i32, i32) {
    %c0_i32 = arith.constant 0 : i32
    %c0_i32_0 = arith.constant 0 : i32
    %c0_i32_1 = arith.constant 0 : i32
    return %arg0, %c0_i32, %c0_i32_0 : i32, i32, i32
  }
  func.func @transform_11(%arg0: i32) -> (i32, i32, i32) {
    %c0_i32 = arith.constant 0 : i32
    %c0_i32_0 = arith.constant 0 : i32
    %c0_i32_1 = arith.constant 0 : i32
    return %arg0, %c0_i32, %c0_i32_0 : i32, i32, i32
  }
  func.func @transform_12(%arg0: i32) -> (i32, i32, i32) {
    %c0_i32 = arith.constant 0 : i32
    %c0_i32_0 = arith.constant 0 : i32
    %c0_i32_1 = arith.constant 0 : i32
    return %arg0, %c0_i32, %c0_i32_0 : i32, i32, i32
  }
  func.func @transform_13(%arg0: i32) -> (i32, i32) {
    %c0_i32 = arith.constant 0 : i32
    %c0_i32_0 = arith.constant 0 : i32
    %c0_i32_1 = arith.constant 0 : i32
    return %c0_i32, %c0_i32_0 : i32, i32
  }
}

module attributes {stable_mosaic.version = 11 : i64} {
  func.func @_text_encoder_head_kernel(%arg0: i32, %arg1: memref<3x1x32xf32, #tpu.memory_space<vmem>>, %arg2: memref<4x32xf32, #tpu.memory_space<vmem>>, %arg3: memref<3x11x32xf32, #tpu.memory_space<vmem>>, %arg4: memref<16x32xf32, #tpu.memory_space<vmem>>, %arg5: memref<16x16xf32, #tpu.memory_space<vmem>>, %arg6: memref<3x16xf32, #tpu.memory_space<vmem>>, %arg7: memref<2x32xf32, #tpu.memory_space<vmem>>, %arg8: memref<2x32xf32, #tpu.memory_space<vmem>>, %arg9: memref<32x32xf32, #tpu.memory_space<vmem>>, %arg10: memref<1x1xf32, #tpu.memory_space<vmem>>, %arg11: memref<1x32x256xbf16, #tpu.memory_space<vmem>>, %arg12: memref<1x128x32xbf16, #tpu.memory_space<vmem>>, %arg13: memref<1x1x416xf32, #tpu.memory_space<vmem>>, %arg14: memref<2x3xf32, #tpu.memory_space<vmem>>, %arg15: memref<3x16x32xf32, #tpu.memory_space<vmem>>) attributes {dimension_semantics = [#tpu.dimension_semantics<arbitrary>], iteration_bounds = array<i64: 2>, scalar_prefetch = 0 : i64, scratch_operands = 1 : i64, tpu.core_type = #tpu.core_type<tc>, window_params = [{pipeline_mode = #tpu.pipeline_mode<synchronous>, transform_indices = @transform_0, window_bounds = array<i64: 3, 1, 32>}, {pipeline_mode = #tpu.pipeline_mode<synchronous>, transform_indices = @transform_1, window_bounds = array<i64: 4, 32>}, {pipeline_mode = #tpu.pipeline_mode<synchronous>, transform_indices = @transform_2, window_bounds = array<i64: 3, 11, 32>}, {pipeline_mode = #tpu.pipeline_mode<synchronous>, transform_indices = @transform_3, window_bounds = array<i64: 16, 32>}, {pipeline_mode = #tpu.pipeline_mode<synchronous>, transform_indices = @transform_4, window_bounds = array<i64: 16, 16>}, {pipeline_mode = #tpu.pipeline_mode<synchronous>, transform_indices = @transform_5, window_bounds = array<i64: 3, 16>}, {pipeline_mode = #tpu.pipeline_mode<synchronous>, transform_indices = @transform_6, window_bounds = array<i64: 2, 32>}, {pipeline_mode = #tpu.pipeline_mode<synchronous>, transform_indices = @transform_7, window_bounds = array<i64: 2, 32>}, {pipeline_mode = #tpu.pipeline_mode<synchronous>, transform_indices = @transform_8, window_bounds = array<i64: 32, 32>}, {pipeline_mode = #tpu.pipeline_mode<synchronous>, transform_indices = @transform_9, window_bounds = array<i64: 1, 1>}, {transform_indices = @transform_10, window_bounds = array<i64: 1, 32, 256>}, {transform_indices = @transform_11, window_bounds = array<i64: 1, 128, 32>}, {transform_indices = @transform_12, window_bounds = array<i64: 1, 1, 416>}, {pipeline_mode = #tpu.pipeline_mode<synchronous>, transform_indices = @transform_13, window_bounds = array<i64: 2, 3>}]} {
    %c0_i32 = arith.constant 0 : i32
    %0 = arith.cmpi eq, %arg0, %c0_i32 : i32
    %1 = arith.extui %0 : i1 to i32
    %c0_i32_0 = arith.constant 0 : i32
    %2 = arith.cmpi ne, %1, %c0_i32_0 : i32
    scf.if %2 {
      %c0_50 = arith.constant 0 : index
      %c0_51 = arith.constant 0 : index
      %170 = vector.load %arg2[%c0_50, %c0_51] : memref<4x32xf32, #tpu.memory_space<vmem>>, vector<4x32xf32>
      %171 = vector.shape_cast %170 : vector<4x32xf32> to vector<1x4x32xf32>
      %172 = vector.shape_cast %171 : vector<1x4x32xf32> to vector<1x4x32xf32>
      %173 = vector.broadcast %172 : vector<1x4x32xf32> to vector<3x4x32xf32>
      %c0_52 = arith.constant 0 : index
      %c0_53 = arith.constant 0 : index
      %c0_54 = arith.constant 0 : index
      %174 = vector.load %arg1[%c0_52, %c0_53, %c0_54] : memref<3x1x32xf32, #tpu.memory_space<vmem>>, vector<3x1x32xf32>
      %c0_55 = arith.constant 0 : index
      %c0_56 = arith.constant 0 : index
      %c0_57 = arith.constant 0 : index
      %175 = vector.load %arg3[%c0_55, %c0_56, %c0_57] : memref<3x11x32xf32, #tpu.memory_space<vmem>>, vector<3x11x32xf32>
      %176 = tpu.concatenate %174, %173, %175 in 1 : vector<3x1x32xf32>, vector<3x4x32xf32>, vector<3x11x32xf32> -> vector<3x16x32xf32>
      %c0_58 = arith.constant 0 : index
      %c0_59 = arith.constant 0 : index
      %177 = vector.load %arg4[%c0_58, %c0_59] : memref<16x32xf32, #tpu.memory_space<vmem>>, vector<16x32xf32>
      %178 = vector.shape_cast %177 : vector<16x32xf32> to vector<1x16x32xf32>
      %179 = vector.broadcast %178 : vector<1x16x32xf32> to vector<3x16x32xf32>
      %180 = arith.addf %176, %179 : vector<3x16x32xf32>
      %c0_60 = arith.constant 0 : index
      %c0_61 = arith.constant 0 : index
      %c0_62 = arith.constant 0 : index
      %181 = vector.load %arg15[%c0_60, %c0_61, %c0_62] : memref<3x16x32xf32, #tpu.memory_space<vmem>>, vector<3x16x32xf32>
      tpu.vector_store %arg15[%c0_60, %c0_61, %c0_62], %180 {strides = array<i32>} : memref<3x16x32xf32, #tpu.memory_space<vmem>>, vector<3x16x32xf32>,
    } else {
    }
    %c0 = arith.constant 0 : index
    %c0_1 = arith.constant 0 : index
    %c0_2 = arith.constant 0 : index
    %3 = vector.load %arg15[%c0, %c0_1, %c0_2] : memref<3x16x32xf32, #tpu.memory_space<vmem>>, vector<3x16x32xf32>
    %c0_3 = arith.constant 0 : index
    %c0_4 = arith.constant 0 : index
    %4 = vector.load %arg5[%c0_3, %c0_4] : memref<16x16xf32, #tpu.memory_space<vmem>>, vector<16x16xf32>
    %c0_5 = arith.constant 0 : index
    %c0_6 = arith.constant 0 : index
    %c0_7 = arith.constant 0 : index
    %5 = vector.load %arg13[%c0_5, %c0_6, %c0_7] : memref<1x1x416xf32, #tpu.memory_space<vmem>>, vector<1x1x416xf32>
    %6 = vector.shape_cast %5 : vector<1x1x416xf32> to vector<1x416xf32>
    %7 = vector.extract_strided_slice %6 {offsets = [0, 0], sizes = [1, 32], strides = [1, 1]} : vector<1x416xf32> to vector<1x32xf32>
    %8 = vector.extract_strided_slice %6 {offsets = [0, 32], sizes = [1, 32], strides = [1, 1]} : vector<1x416xf32> to vector<1x32xf32>
    %9 = vector.extract_strided_slice %6 {offsets = [0, 64], sizes = [1, 96], strides = [1, 1]} : vector<1x416xf32> to vector<1x96xf32>
    %10 = vector.extract_strided_slice %6 {offsets = [0, 160], sizes = [1, 32], strides = [1, 1]} : vector<1x416xf32> to vector<1x32xf32>
    %11 = vector.extract_strided_slice %6 {offsets = [0, 192], sizes = [1, 32], strides = [1, 1]} : vector<1x416xf32> to vector<1x32xf32>
    %12 = vector.extract_strided_slice %6 {offsets = [0, 224], sizes = [1, 32], strides = [1, 1]} : vector<1x416xf32> to vector<1x32xf32>
    %13 = vector.extract_strided_slice %6 {offsets = [0, 256], sizes = [1, 128], strides = [1, 1]} : vector<1x416xf32> to vector<1x128xf32>
    %14 = vector.extract_strided_slice %6 {offsets = [0, 384], sizes = [1, 32], strides = [1, 1]} : vector<1x416xf32> to vector<1x32xf32>
    %c0_8 = arith.constant 0 : index
    %c0_9 = arith.constant 0 : index
    %c0_10 = arith.constant 0 : index
    %15 = vector.load %arg11[%c0_8, %c0_9, %c0_10] : memref<1x32x256xbf16, #tpu.memory_space<vmem>>, vector<1x32x96xbf16>
    %16 = vector.shape_cast %15 : vector<1x32x96xbf16> to vector<32x96xbf16>
    %c0_11 = arith.constant 0 : index
    %c0_12 = arith.constant 0 : index
    %c96 = arith.constant 96 : index
    %17 = vector.load %arg11[%c0_11, %c0_12, %c96] : memref<1x32x256xbf16, #tpu.memory_space<vmem>>, vector<1x32x32xbf16>
    %18 = vector.shape_cast %17 : vector<1x32x32xbf16> to vector<32x32xbf16>
    %c0_13 = arith.constant 0 : index
    %c0_14 = arith.constant 0 : index
    %c128 = arith.constant 128 : index
    %19 = vector.load %arg11[%c0_13, %c0_14, %c128] : memref<1x32x256xbf16, #tpu.memory_space<vmem>>, vector<1x32x128xbf16>
    %20 = vector.shape_cast %19 : vector<1x32x128xbf16> to vector<32x128xbf16>
    %c0_15 = arith.constant 0 : index
    %c0_16 = arith.constant 0 : index
    %c0_17 = arith.constant 0 : index
    %21 = vector.load %arg12[%c0_15, %c0_16, %c0_17] : memref<1x128x32xbf16, #tpu.memory_space<vmem>>, vector<1x128x32xbf16>
    %22 = vector.shape_cast %21 : vector<1x128x32xbf16> to vector<128x32xbf16>
    %cst = arith.constant dense<0.000000e+00> : vector<3x16xf32>
    %23 = vector.multi_reduction <add>, %3, %cst [2] : vector<3x16x32xf32> to vector<3x16xf32>
    %24 = vector.shape_cast %23 : vector<3x16xf32> to vector<3x16x1xf32>
    %cst_18 = arith.constant 3.200000e+01 : f32
    %25 = vector.broadcast %cst_18 : f32 to vector<3x16x1xf32>
    %26 = arith.divf %24, %25 : vector<3x16x1xf32>
    %27 = vector.broadcast %26 : vector<3x16x1xf32> to vector<3x16x32xf32>
    %28 = arith.subf %3, %27 : vector<3x16x32xf32>
    %29 = arith.mulf %28, %28 : vector<3x16x32xf32>
    %cst_19 = arith.constant dense<0.000000e+00> : vector<3x16xf32>
    %30 = vector.multi_reduction <add>, %29, %cst_19 [2] : vector<3x16x32xf32> to vector<3x16xf32>
    %31 = vector.shape_cast %30 : vector<3x16xf32> to vector<3x16x1xf32>
    %cst_20 = arith.constant 3.200000e+01 : f32
    %32 = vector.broadcast %cst_20 : f32 to vector<3x16x1xf32>
    %33 = arith.divf %31, %32 : vector<3x16x1xf32>
    %34 = vector.broadcast %26 : vector<3x16x1xf32> to vector<3x16x32xf32>
    %35 = arith.subf %3, %34 : vector<3x16x32xf32>
    %cst_21 = arith.constant 9.99999974E-6 : f32
    %36 = vector.broadcast %cst_21 : f32 to vector<3x16x1xf32>
    %37 = arith.addf %33, %36 : vector<3x16x1xf32>
    %38 = math.rsqrt %37 : vector<3x16x1xf32>
    %39 = vector.broadcast %38 : vector<3x16x1xf32> to vector<3x16x32xf32>
    %40 = arith.mulf %35, %39 : vector<3x16x32xf32>
    %41 = vector.shape_cast %7 : vector<1x32xf32> to vector<1x1x32xf32>
    %42 = vector.broadcast %41 : vector<1x1x32xf32> to vector<3x16x32xf32>
    %43 = arith.mulf %40, %42 : vector<3x16x32xf32>
    %44 = vector.shape_cast %8 : vector<1x32xf32> to vector<1x1x32xf32>
    %45 = vector.broadcast %44 : vector<1x1x32xf32> to vector<3x16x32xf32>
    %46 = arith.addf %43, %45 : vector<3x16x32xf32>
    %47 = vector.shape_cast %46 : vector<3x16x32xf32> to vector<48x32xf32>
    %48 = arith.truncf %47 : vector<48x32xf32> to vector<48x32xbf16>
    %cst_22 = arith.constant dense<0.000000e+00> : vector<48x96xf32>
    %49 = tpu.matmul %48, %16, %cst_22 {dimension_numbers = #tpu.dot_dimension_numbers<[1], [0], [0], [1], [0, 0, 1, 1], [], []>} : vector<48x32xbf16>, vector<32x96xbf16>, vector<48x96xf32> -> vector<48x96xf32>
    %50 = vector.shape_cast %49 : vector<48x96xf32> to vector<3x16x96xf32>
    %51 = vector.shape_cast %9 : vector<1x96xf32> to vector<1x1x96xf32>
    %52 = vector.broadcast %51 : vector<1x1x96xf32> to vector<3x16x96xf32>
    %53 = arith.addf %50, %52 : vector<3x16x96xf32>
    %54 = vector.extract_strided_slice %53 {offsets = [0, 0, 0], sizes = [3, 16, 16], strides = [1, 1, 1]} : vector<3x16x96xf32> to vector<3x16x16xf32>
    %cst_23 = arith.constant 2.500000e-01 : f32
    %55 = vector.broadcast %cst_23 : f32 to vector<3x16x16xf32>
    %56 = arith.mulf %54, %55 : vector<3x16x16xf32>
    %57 = vector.extract_strided_slice %53 {offsets = [0, 0, 32], sizes = [3, 16, 16], strides = [1, 1, 1]} : vector<3x16x96xf32> to vector<3x16x16xf32>
    %58 = vector.extract_strided_slice %53 {offsets = [0, 0, 64], sizes = [3, 16, 16], strides = [1, 1, 1]} : vector<3x16x96xf32> to vector<3x16x16xf32>
    %59 = arith.truncf %56 : vector<3x16x16xf32> to vector<3x16x16xbf16>
    %60 = arith.truncf %57 : vector<3x16x16xf32> to vector<3x16x16xbf16>
    "tpu.trace_start"() <{level = 10 : i32, message = "bqd,bkd->bqk"}> : () -> ()
    %cst_24 = arith.constant dense<0.000000e+00> : vector<3x16x16xf32>
    %61 = tpu.matmul %59, %60, %cst_24 {dimension_numbers = #tpu.dot_dimension_numbers<[2], [2], [1], [1], [0, 0, 0, 1, 1, 1], [0], [0]>} : vector<3x16x16xbf16>, vector<3x16x16xbf16>, vector<3x16x16xf32> -> vector<3x16x16xf32>
    "tpu.trace_stop"() : () -> ()
    %62 = vector.shape_cast %4 : vector<16x16xf32> to vector<1x16x16xf32>
    %63 = vector.broadcast %62 : vector<1x16x16xf32> to vector<3x16x16xf32>
    %64 = arith.addf %61, %63 : vector<3x16x16xf32>
    %cst_25 = arith.constant dense<0xFF800000> : vector<3x16xf32>
    %65 = vector.multi_reduction <maximumf>, %64, %cst_25 [2] : vector<3x16x16xf32> to vector<3x16xf32>
    %cst_26 = arith.constant 0xFF800000 : f32
    %66 = vector.broadcast %cst_26 : f32 to vector<3x16xf32>
    %67 = arith.maximumf %66, %65 : vector<3x16xf32>
    %68 = vector.shape_cast %67 : vector<3x16xf32> to vector<3x16x1xf32>
    %69 = vector.broadcast %68 : vector<3x16x1xf32> to vector<3x16x16xf32>
    %70 = arith.subf %64, %69 : vector<3x16x16xf32>
    %71 = math.exp %70 : vector<3x16x16xf32>
    %cst_27 = arith.constant dense<0.000000e+00> : vector<3x16xf32>
    %72 = vector.multi_reduction <add>, %71, %cst_27 [2] : vector<3x16x16xf32> to vector<3x16xf32>
    %73 = vector.shape_cast %72 : vector<3x16xf32> to vector<3x16x1xf32>
    %74 = vector.broadcast %73 : vector<3x16x1xf32> to vector<3x16x16xf32>
    %75 = arith.divf %71, %74 : vector<3x16x16xf32>
    %76 = arith.truncf %75 : vector<3x16x16xf32> to vector<3x16x16xbf16>
    %77 = arith.truncf %58 : vector<3x16x16xf32> to vector<3x16x16xbf16>
    "tpu.trace_start"() <{level = 10 : i32, message = "bqk,bkd->bqd"}> : () -> ()
    %cst_28 = arith.constant dense<0.000000e+00> : vector<3x16x16xf32>
    %78 = tpu.matmul %76, %77, %cst_28 {dimension_numbers = #tpu.dot_dimension_numbers<[2], [1], [1], [2], [0, 0, 0, 1, 1, 2], [0], [0]>} : vector<3x16x16xbf16>, vector<3x16x16xbf16>, vector<3x16x16xf32> -> vector<3x16x16xf32>
    "tpu.trace_stop"() : () -> ()
    %79 = vector.extract_strided_slice %18 {offsets = [0, 0], sizes = [16, 32], strides = [1, 1]} : vector<32x32xbf16> to vector<16x32xbf16>
    %80 = vector.shape_cast %78 : vector<3x16x16xf32> to vector<48x16xf32>
    %81 = arith.truncf %80 : vector<48x16xf32> to vector<48x16xbf16>
    %cst_29 = arith.constant dense<0.000000e+00> : vector<48x32xf32>
    %82 = tpu.matmul %81, %79, %cst_29 {dimension_numbers = #tpu.dot_dimension_numbers<[1], [0], [0], [1], [0, 0, 1, 1], [], []>} : vector<48x16xbf16>, vector<16x32xbf16>, vector<48x32xf32> -> vector<48x32xf32>
    %83 = vector.shape_cast %82 : vector<48x32xf32> to vector<3x16x32xf32>
    %84 = vector.extract_strided_slice %53 {offsets = [0, 0, 16], sizes = [3, 16, 16], strides = [1, 1, 1]} : vector<3x16x96xf32> to vector<3x16x16xf32>
    %cst_30 = arith.constant 2.500000e-01 : f32
    %85 = vector.broadcast %cst_30 : f32 to vector<3x16x16xf32>
    %86 = arith.mulf %84, %85 : vector<3x16x16xf32>
    %87 = vector.extract_strided_slice %53 {offsets = [0, 0, 48], sizes = [3, 16, 16], strides = [1, 1, 1]} : vector<3x16x96xf32> to vector<3x16x16xf32>
    %88 = vector.extract_strided_slice %53 {offsets = [0, 0, 80], sizes = [3, 16, 16], strides = [1, 1, 1]} : vector<3x16x96xf32> to vector<3x16x16xf32>
    %89 = arith.truncf %86 : vector<3x16x16xf32> to vector<3x16x16xbf16>
    %90 = arith.truncf %87 : vector<3x16x16xf32> to vector<3x16x16xbf16>
    "tpu.trace_start"() <{level = 10 : i32, message = "bqd,bkd->bqk"}> : () -> ()
    %cst_31 = arith.constant dense<0.000000e+00> : vector<3x16x16xf32>
    %91 = tpu.matmul %89, %90, %cst_31 {dimension_numbers = #tpu.dot_dimension_numbers<[2], [2], [1], [1], [0, 0, 0, 1, 1, 1], [0], [0]>} : vector<3x16x16xbf16>, vector<3x16x16xbf16>, vector<3x16x16xf32> -> vector<3x16x16xf32>
    "tpu.trace_stop"() : () -> ()
    %92 = vector.shape_cast %4 : vector<16x16xf32> to vector<1x16x16xf32>
    %93 = vector.broadcast %92 : vector<1x16x16xf32> to vector<3x16x16xf32>
    %94 = arith.addf %91, %93 : vector<3x16x16xf32>
    %cst_32 = arith.constant dense<0xFF800000> : vector<3x16xf32>
    %95 = vector.multi_reduction <maximumf>, %94, %cst_32 [2] : vector<3x16x16xf32> to vector<3x16xf32>
    %cst_33 = arith.constant 0xFF800000 : f32
    %96 = vector.broadcast %cst_33 : f32 to vector<3x16xf32>
    %97 = arith.maximumf %96, %95 : vector<3x16xf32>
    %98 = vector.shape_cast %97 : vector<3x16xf32> to vector<3x16x1xf32>
    %99 = vector.broadcast %98 : vector<3x16x1xf32> to vector<3x16x16xf32>
    %100 = arith.subf %94, %99 : vector<3x16x16xf32>
    %101 = math.exp %100 : vector<3x16x16xf32>
    %cst_34 = arith.constant dense<0.000000e+00> : vector<3x16xf32>
    %102 = vector.multi_reduction <add>, %101, %cst_34 [2] : vector<3x16x16xf32> to vector<3x16xf32>
    %103 = vector.shape_cast %102 : vector<3x16xf32> to vector<3x16x1xf32>
    %104 = vector.broadcast %103 : vector<3x16x1xf32> to vector<3x16x16xf32>
    %105 = arith.divf %101, %104 : vector<3x16x16xf32>
    %106 = arith.truncf %105 : vector<3x16x16xf32> to vector<3x16x16xbf16>
    %107 = arith.truncf %88 : vector<3x16x16xf32> to vector<3x16x16xbf16>
    "tpu.trace_start"() <{level = 10 : i32, message = "bqk,bkd->bqd"}> : () -> ()
    %cst_35 = arith.constant dense<0.000000e+00> : vector<3x16x16xf32>
    %108 = tpu.matmul %106, %107, %cst_35 {dimension_numbers = #tpu.dot_dimension_numbers<[2], [1], [1], [2], [0, 0, 0, 1, 1, 2], [0], [0]>} : vector<3x16x16xbf16>, vector<3x16x16xbf16>, vector<3x16x16xf32> -> vector<3x16x16xf32>
    "tpu.trace_stop"() : () -> ()
    %109 = vector.extract_strided_slice %18 {offsets = [16, 0], sizes = [16, 32], strides = [1, 1]} : vector<32x32xbf16> to vector<16x32xbf16>
    %110 = vector.shape_cast %108 : vector<3x16x16xf32> to vector<48x16xf32>
    %111 = arith.truncf %110 : vector<48x16xf32> to vector<48x16xbf16>
    %cst_36 = arith.constant dense<0.000000e+00> : vector<48x32xf32>
    %112 = tpu.matmul %111, %109, %cst_36 {dimension_numbers = #tpu.dot_dimension_numbers<[1], [0], [0], [1], [0, 0, 1, 1], [], []>} : vector<48x16xbf16>, vector<16x32xbf16>, vector<48x32xf32> -> vector<48x32xf32>
    %113 = vector.shape_cast %112 : vector<48x32xf32> to vector<3x16x32xf32>
    %114 = arith.addf %83, %113 : vector<3x16x32xf32>
    %115 = vector.shape_cast %10 : vector<1x32xf32> to vector<1x1x32xf32>
    %116 = vector.broadcast %115 : vector<1x1x32xf32> to vector<3x16x32xf32>
    %117 = arith.addf %114, %116 : vector<3x16x32xf32>
    %118 = arith.addf %3, %117 : vector<3x16x32xf32>
    %cst_37 = arith.constant dense<0.000000e+00> : vector<3x16xf32>
    %119 = vector.multi_reduction <add>, %118, %cst_37 [2] : vector<3x16x32xf32> to vector<3x16xf32>
    %120 = vector.shape_cast %119 : vector<3x16xf32> to vector<3x16x1xf32>
    %cst_38 = arith.constant 3.200000e+01 : f32
    %121 = vector.broadcast %cst_38 : f32 to vector<3x16x1xf32>
    %122 = arith.divf %120, %121 : vector<3x16x1xf32>
    %123 = vector.broadcast %122 : vector<3x16x1xf32> to vector<3x16x32xf32>
    %124 = arith.subf %118, %123 : vector<3x16x32xf32>
    %125 = arith.mulf %124, %124 : vector<3x16x32xf32>
    %cst_39 = arith.constant dense<0.000000e+00> : vector<3x16xf32>
    %126 = vector.multi_reduction <add>, %125, %cst_39 [2] : vector<3x16x32xf32> to vector<3x16xf32>
    %127 = vector.shape_cast %126 : vector<3x16xf32> to vector<3x16x1xf32>
    %cst_40 = arith.constant 3.200000e+01 : f32
    %128 = vector.broadcast %cst_40 : f32 to vector<3x16x1xf32>
    %129 = arith.divf %127, %128 : vector<3x16x1xf32>
    %130 = vector.broadcast %122 : vector<3x16x1xf32> to vector<3x16x32xf32>
    %131 = arith.subf %118, %130 : vector<3x16x32xf32>
    %cst_41 = arith.constant 9.99999974E-6 : f32
    %132 = vector.broadcast %cst_41 : f32 to vector<3x16x1xf32>
    %133 = arith.addf %129, %132 : vector<3x16x1xf32>
    %134 = math.rsqrt %133 : vector<3x16x1xf32>
    %135 = vector.broadcast %134 : vector<3x16x1xf32> to vector<3x16x32xf32>
    %136 = arith.mulf %131, %135 : vector<3x16x32xf32>
    %137 = vector.shape_cast %11 : vector<1x32xf32> to vector<1x1x32xf32>
    %138 = vector.broadcast %137 : vector<1x1x32xf32> to vector<3x16x32xf32>
    %139 = arith.mulf %136, %138 : vector<3x16x32xf32>
    %140 = vector.shape_cast %12 : vector<1x32xf32> to vector<1x1x32xf32>
    %141 = vector.broadcast %140 : vector<1x1x32xf32> to vector<3x16x32xf32>
    %142 = arith.addf %139, %141 : vector<3x16x32xf32>
    %143 = vector.shape_cast %142 : vector<3x16x32xf32> to vector<48x32xf32>
    %144 = arith.truncf %143 : vector<48x32xf32> to vector<48x32xbf16>
    %cst_42 = arith.constant dense<0.000000e+00> : vector<48x128xf32>
    %145 = tpu.matmul %144, %20, %cst_42 {dimension_numbers = #tpu.dot_dimension_numbers<[1], [0], [0], [1], [0, 0, 1, 1], [], []>} : vector<48x32xbf16>, vector<32x128xbf16>, vector<48x128xf32> -> vector<48x128xf32>
    %146 = vector.shape_cast %145 : vector<48x128xf32> to vector<3x16x128xf32>
    %147 = vector.shape_cast %13 : vector<1x128xf32> to vector<1x1x128xf32>
    %148 = vector.broadcast %147 : vector<1x1x128xf32> to vector<3x16x128xf32>
    %149 = arith.addf %146, %148 : vector<3x16x128xf32>
    %cst_43 = arith.constant 1.702000e+00 : f32
    %150 = vector.broadcast %cst_43 : f32 to vector<3x16x128xf32>
    %151 = arith.mulf %150, %149 : vector<3x16x128xf32>
    %152 = arith.negf %151 : vector<3x16x128xf32>
    %153 = math.exp %152 : vector<3x16x128xf32>
    %cst_44 = arith.constant 1.000000e+00 : f32
    %154 = vector.broadcast %cst_44 : f32 to vector<3x16x128xf32>
    %155 = arith.addf %154, %153 : vector<3x16x128xf32>
    %156 = arith.divf %154, %155 : vector<3x16x128xf32>
    %157 = arith.mulf %149, %156 : vector<3x16x128xf32>
    %158 = vector.shape_cast %157 : vector<3x16x128xf32> to vector<48x128xf32>
    %159 = arith.truncf %158 : vector<48x128xf32> to vector<48x128xbf16>
    %cst_45 = arith.constant dense<0.000000e+00> : vector<48x32xf32>
    %160 = tpu.matmul %159, %22, %cst_45 {dimension_numbers = #tpu.dot_dimension_numbers<[1], [0], [0], [1], [0, 0, 1, 1], [], []>} : vector<48x128xbf16>, vector<128x32xbf16>, vector<48x32xf32> -> vector<48x32xf32>
    %161 = vector.shape_cast %160 : vector<48x32xf32> to vector<3x16x32xf32>
    %162 = vector.shape_cast %14 : vector<1x32xf32> to vector<1x1x32xf32>
    %163 = vector.broadcast %162 : vector<1x1x32xf32> to vector<3x16x32xf32>
    %164 = arith.addf %161, %163 : vector<3x16x32xf32>
    %165 = arith.addf %118, %164 : vector<3x16x32xf32>
    %c0_46 = arith.constant 0 : index
    %c0_47 = arith.constant 0 : index
    %c0_48 = arith.constant 0 : index
    %166 = vector.load %arg15[%c0_46, %c0_47, %c0_48] : memref<3x16x32xf32, #tpu.memory_space<vmem>>, vector<3x16x32xf32>
    tpu.vector_store %arg15[%c0_46, %c0_47, %c0_48], %165 {strides = array<i32>} : memref<3x16x32xf32, #tpu.memory_space<vmem>>, vector<3x16x32xf32>,
    %c1_i32 = arith.constant 1 : i32
    %167 = arith.cmpi eq, %arg0, %c1_i32 : i32
    %168 = arith.extui %167 : i1 to i32
    %c0_i32_49 = arith.constant 0 : i32
    %169 = arith.cmpi ne, %168, %c0_i32_49 : i32
    scf.if %169 {
      %c0_50 = arith.constant 0 : index
      %c0_51 = arith.constant 0 : index
      %170 = vector.load %arg6[%c0_50, %c0_51] : memref<3x16xf32, #tpu.memory_space<vmem>>, vector<3x16xf32>
      %171 = vector.shape_cast %170 : vector<3x16xf32> to vector<3x16x1xf32>
      %172 = vector.broadcast %171 : vector<3x16x1xf32> to vector<3x16x32xf32>
      %173 = arith.mulf %172, %165 : vector<3x16x32xf32>
      %cst_52 = arith.constant dense<0.000000e+00> : vector<3x32xf32>
      %174 = vector.multi_reduction <add>, %173, %cst_52 [1] : vector<3x16x32xf32> to vector<3x32xf32>
      %c0_53 = arith.constant 0 : index
      %c0_54 = arith.constant 0 : index
      %175 = vector.load %arg8[%c0_53, %c0_54] : memref<2x32xf32, #tpu.memory_space<vmem>>, vector<1x32xf32>
      %c1 = arith.constant 1 : index
      %c0_55 = arith.constant 0 : index
      %176 = vector.load %arg8[%c1, %c0_55] : memref<2x32xf32, #tpu.memory_space<vmem>>, vector<1x32xf32>
      %cst_56 = arith.constant dense<0.000000e+00> : vector<3xf32>
      %177 = vector.multi_reduction <add>, %174, %cst_56 [1] : vector<3x32xf32> to vector<3xf32>
      %178 = vector.shape_cast %177 : vector<3xf32> to vector<3x1xf32>
      %cst_57 = arith.constant 3.200000e+01 : f32
      %179 = vector.broadcast %cst_57 : f32 to vector<3x1xf32>
      %180 = arith.divf %178, %179 : vector<3x1xf32>
      %181 = vector.broadcast %180 : vector<3x1xf32> to vector<3x32xf32>
      %182 = arith.subf %174, %181 : vector<3x32xf32>
      %183 = arith.mulf %182, %182 : vector<3x32xf32>
      %cst_58 = arith.constant dense<0.000000e+00> : vector<3xf32>
      %184 = vector.multi_reduction <add>, %183, %cst_58 [1] : vector<3x32xf32> to vector<3xf32>
      %185 = vector.shape_cast %184 : vector<3xf32> to vector<3x1xf32>
      %cst_59 = arith.constant 3.200000e+01 : f32
      %186 = vector.broadcast %cst_59 : f32 to vector<3x1xf32>
      %187 = arith.divf %185, %186 : vector<3x1xf32>
      %188 = vector.broadcast %180 : vector<3x1xf32> to vector<3x32xf32>
      %189 = arith.subf %174, %188 : vector<3x32xf32>
      %cst_60 = arith.constant 9.99999974E-6 : f32
      %190 = vector.broadcast %cst_60 : f32 to vector<3x1xf32>
      %191 = arith.addf %187, %190 : vector<3x1xf32>
      %192 = math.rsqrt %191 : vector<3x1xf32>
      %193 = vector.broadcast %192 : vector<3x1xf32> to vector<3x32xf32>
      %194 = arith.mulf %189, %193 : vector<3x32xf32>
      %195 = vector.broadcast %175 : vector<1x32xf32> to vector<3x32xf32>
      %196 = arith.mulf %194, %195 : vector<3x32xf32>
      %197 = vector.broadcast %176 : vector<1x32xf32> to vector<3x32xf32>
      %198 = arith.addf %196, %197 : vector<3x32xf32>
      %c0_61 = arith.constant 0 : index
      %c0_62 = arith.constant 0 : index
      %199 = vector.load %arg9[%c0_61, %c0_62] : memref<32x32xf32, #tpu.memory_space<vmem>>, vector<32x32xf32>
      %200 = arith.truncf %198 : vector<3x32xf32> to vector<3x32xbf16>
      %201 = arith.truncf %199 : vector<32x32xf32> to vector<32x32xbf16>
      %cst_63 = arith.constant dense<0.000000e+00> : vector<3x32xf32>
      %202 = tpu.matmul %200, %201, %cst_63 {dimension_numbers = #tpu.dot_dimension_numbers<[1], [0], [0], [1], [0, 0, 1, 1], [], []>} : vector<3x32xbf16>, vector<32x32xbf16>, vector<3x32xf32> -> vector<3x32xf32>
      %c0_64 = arith.constant 0 : index
      %c0_65 = arith.constant 0 : index
      %203 = vector.load %arg7[%c0_64, %c0_65] : memref<2x32xf32, #tpu.memory_space<vmem>>, vector<2x32xf32>
      %204 = arith.mulf %203, %203 : vector<2x32xf32>
      %cst_66 = arith.constant dense<0.000000e+00> : vector<2xf32>
      %205 = vector.multi_reduction <add>, %204, %cst_66 [1] : vector<2x32xf32> to vector<2xf32>
      %206 = vector.shape_cast %205 : vector<2xf32> to vector<2x1xf32>
      %cst_67 = arith.constant 9.99999996E-13 : f32
      %207 = vector.broadcast %cst_67 : f32 to vector<2x1xf32>
      %208 = arith.addf %206, %207 : vector<2x1xf32>
      %209 = math.rsqrt %208 : vector<2x1xf32>
      %210 = vector.broadcast %209 : vector<2x1xf32> to vector<2x32xf32>
      %211 = arith.mulf %203, %210 : vector<2x32xf32>
      %212 = arith.mulf %202, %202 : vector<3x32xf32>
      %cst_68 = arith.constant dense<0.000000e+00> : vector<3xf32>
      %213 = vector.multi_reduction <add>, %212, %cst_68 [1] : vector<3x32xf32> to vector<3xf32>
      %214 = vector.shape_cast %213 : vector<3xf32> to vector<3x1xf32>
      %cst_69 = arith.constant 9.99999996E-13 : f32
      %215 = vector.broadcast %cst_69 : f32 to vector<3x1xf32>
      %216 = arith.addf %214, %215 : vector<3x1xf32>
      %217 = math.rsqrt %216 : vector<3x1xf32>
      %218 = vector.broadcast %217 : vector<3x1xf32> to vector<3x32xf32>
      %219 = arith.mulf %202, %218 : vector<3x32xf32>
      %cst_70 = arith.constant dense<0.000000e+00> : vector<2x3xf32>
      %220 = tpu.matmul %211, %219, %cst_70 {dimension_numbers = #tpu.dot_dimension_numbers<[1], [1], [0], [0], [0, 0, 1, 0], [], []>} : vector<2x32xf32>, vector<3x32xf32>, vector<2x3xf32> -> vector<2x3xf32>
      %c0_71 = arith.constant 0 : index
      %c0_72 = arith.constant 0 : index
      %221 = vector.load %arg10[%c0_71, %c0_72] : memref<1x1xf32, #tpu.memory_space<vmem>>, vector<1x1xf32>
      %222 = vector.broadcast %221 : vector<1x1xf32> to vector<2x3xf32>
      %223 = arith.mulf %222, %220 : vector<2x3xf32>
      %c0_73 = arith.constant 0 : index
      %c0_74 = arith.constant 0 : index
      %224 = vector.load %arg14[%c0_73, %c0_74] : memref<2x3xf32, #tpu.memory_space<vmem>>, vector<2x3xf32>
      tpu.vector_store %arg14[%c0_73, %c0_74], %223 {strides = array<i32>} : memref<2x3xf32, #tpu.memory_space<vmem>>, vector<2x3xf32>,
    } else {
    }
    return
  }
  func.func @transform_0(%arg0: i32) -> (i32, i32, i32) {
    %c0_i32 = arith.constant 0 : i32
    %c0_i32_0 = arith.constant 0 : i32
    %c0_i32_1 = arith.constant 0 : i32
    %c0_i32_2 = arith.constant 0 : i32
    return %c0_i32, %c0_i32_0, %c0_i32_1 : i32, i32, i32
  }
  func.func @transform_1(%arg0: i32) -> (i32, i32) {
    %c0_i32 = arith.constant 0 : i32
    %c0_i32_0 = arith.constant 0 : i32
    %c0_i32_1 = arith.constant 0 : i32
    return %c0_i32, %c0_i32_0 : i32, i32
  }
  func.func @transform_2(%arg0: i32) -> (i32, i32, i32) {
    %c0_i32 = arith.constant 0 : i32
    %c0_i32_0 = arith.constant 0 : i32
    %c0_i32_1 = arith.constant 0 : i32
    %c0_i32_2 = arith.constant 0 : i32
    return %c0_i32, %c0_i32_0, %c0_i32_1 : i32, i32, i32
  }
  func.func @transform_3(%arg0: i32) -> (i32, i32) {
    %c0_i32 = arith.constant 0 : i32
    %c0_i32_0 = arith.constant 0 : i32
    %c0_i32_1 = arith.constant 0 : i32
    return %c0_i32, %c0_i32_0 : i32, i32
  }
  func.func @transform_4(%arg0: i32) -> (i32, i32) {
    %c0_i32 = arith.constant 0 : i32
    %c0_i32_0 = arith.constant 0 : i32
    %c0_i32_1 = arith.constant 0 : i32
    return %c0_i32, %c0_i32_0 : i32, i32
  }
  func.func @transform_5(%arg0: i32) -> (i32, i32) {
    %c0_i32 = arith.constant 0 : i32
    %c0_i32_0 = arith.constant 0 : i32
    %c0_i32_1 = arith.constant 0 : i32
    return %c0_i32, %c0_i32_0 : i32, i32
  }
  func.func @transform_6(%arg0: i32) -> (i32, i32) {
    %c0_i32 = arith.constant 0 : i32
    %c0_i32_0 = arith.constant 0 : i32
    %c0_i32_1 = arith.constant 0 : i32
    return %c0_i32, %c0_i32_0 : i32, i32
  }
  func.func @transform_7(%arg0: i32) -> (i32, i32) {
    %c0_i32 = arith.constant 0 : i32
    %c0_i32_0 = arith.constant 0 : i32
    %c0_i32_1 = arith.constant 0 : i32
    return %c0_i32, %c0_i32_0 : i32, i32
  }
  func.func @transform_8(%arg0: i32) -> (i32, i32) {
    %c0_i32 = arith.constant 0 : i32
    %c0_i32_0 = arith.constant 0 : i32
    %c0_i32_1 = arith.constant 0 : i32
    return %c0_i32, %c0_i32_0 : i32, i32
  }
  func.func @transform_9(%arg0: i32) -> (i32, i32) {
    %c0_i32 = arith.constant 0 : i32
    %c0_i32_0 = arith.constant 0 : i32
    %c0_i32_1 = arith.constant 0 : i32
    return %c0_i32, %c0_i32_0 : i32, i32
  }
  func.func @transform_10(%arg0: i32) -> (i32, i32, i32) {
    %c0_i32 = arith.constant 0 : i32
    %c0_i32_0 = arith.constant 0 : i32
    %c0_i32_1 = arith.constant 0 : i32
    return %arg0, %c0_i32, %c0_i32_0 : i32, i32, i32
  }
  func.func @transform_11(%arg0: i32) -> (i32, i32, i32) {
    %c0_i32 = arith.constant 0 : i32
    %c0_i32_0 = arith.constant 0 : i32
    %c0_i32_1 = arith.constant 0 : i32
    return %arg0, %c0_i32, %c0_i32_0 : i32, i32, i32
  }
  func.func @transform_12(%arg0: i32) -> (i32, i32, i32) {
    %c0_i32 = arith.constant 0 : i32
    %c0_i32_0 = arith.constant 0 : i32
    %c0_i32_1 = arith.constant 0 : i32
    return %arg0, %c0_i32, %c0_i32_0 : i32, i32, i32
  }
  func.func @transform_13(%arg0: i32) -> (i32, i32) {
    %c0_i32 = arith.constant 0 : i32
    %c0_i32_0 = arith.constant 0 : i32
    %c0_i32_1 = arith.constant 0 : i32
    return %c0_i32, %c0_i32_0 : i32, i32
  }
}

</mosaic_0001>

<llo_original>
// kernel: custom_clip_forward.3
$region0: #{custom_clip_forward.3}
  #allocation0 [shape = 'u32[]', space=smem, size = 0x4, offset = 0x4, fixed_abs, tag = 'smem constant byte address 0x4 - core index']
  #allocation1 [shape = 'u32[72,128]{1,0:T(1,128)}', space=vmem, size = 0x9000, scoped, tag = 'internal scratch']
  #allocation2 [shape = 'f32[3,16,32]{2,1,0:T(8,128)}', space=vmem, size = 0x6000, scoped, tag = 'scratch operand']
  #allocation3 [shape = 'f32[1,1]{1,0:T(1,128)S(1)}', space=vmem, size = 0x200, scoped, tag = 'scoped memory for custom_clip_forward.3']
  %s0 = inlined_call_operand.hbm [shape: f32[3,1,32], index: 0, kind: input, shape index: {}]
  %s1 = inlined_call_operand.hbm [shape: f32[4,32], index: 1, kind: input, shape index: {}]
  %s2 = inlined_call_operand.vmem [shape: f32[3,11,32], index: 2, kind: input, shape index: {}]
  %s3 = inlined_call_operand.hbm [shape: f32[16,32], index: 3, kind: input, shape index: {}]
  %s4 = inlined_call_operand.hbm [shape: f32[16,16], index: 4, kind: input, shape index: {}]
  %s5 = inlined_call_operand.hbm [shape: f32[3,16], index: 5, kind: input, shape index: {}]
  %s6 = inlined_call_operand.vmem [shape: f32[2,32], index: 6, kind: input, shape index: {}]
  %s7 = inlined_call_operand.vmem [shape: f32[2,32], index: 7, kind: input, shape index: {}]
  %s8 = inlined_call_operand.hbm [shape: f32[32,32], index: 8, kind: input, shape index: {}]
  %s9 = inlined_call_operand.<no memory space> [shape: f32[1,1], index: 9, kind: input, shape index: {}]
  %s10 = inlined_call_operand.hbm [shape: bf16[2,32,256], index: 10, kind: input, shape index: {}]
  %s11 = inlined_call_operand.vmem [shape: bf16[2,128,32], index: 11, kind: input, shape index: {}]
  %s12 = inlined_call_operand.hbm [shape: f32[2,1,416], index: 12, kind: input, shape index: {}]
  %s13 = inlined_call_operand.hbm [shape: f32[2,3], index: 13, kind: output, shape index: {}]
  %s14 = sld [smem:[#allocation0]]
  $region125: #{custom_clip_forward.3} parent=0
    _
  %s16 = ssub.s32 1, %s14
  %s17 = scalar_select 0, %s16, %s14
  %v18 = vstv %s9
  %19 = vst [vmem:[#allocation3] sm:$0x1] %v18
  $region1: #{custom_clip_forward.3} parent=0
    #allocation4 [shape = 'u8[1536]{0}', space=vmem, size = 0x800, scoped, tag = 'input window, operand 0, single buffered']
    #allocation5 [shape = 's32[2]{0}', space=sflag, size = 0x8, scoped, tag = 'scoped memory for custom_clip_forward.3']
    #allocation6 [shape = 's32[2]{0}', space=sflag, size = 0x8, scoped, tag = 'scoped memory for custom_clip_forward.3']
    #allocation7 [shape = 'u8[2048]{0}', space=vmem, size = 0x800, scoped, tag = 'input window, operand 1, single buffered']
    #allocation8 [shape = 's32[1]{0}', space=sflag, size = 0x4, scoped, tag = 'scoped memory for custom_clip_forward.3']
    #allocation9 [shape = 'u8[8192]{0}', space=vmem, size = 0x2000, scoped, tag = 'input window, operand 3, single buffered']
    #allocation10 [shape = 'u8[8192]{0}', space=vmem, size = 0x2000, scoped, tag = 'input window, operand 4, single buffered']
    #allocation11 [shape = 's32[1]{0}', space=sflag, size = 0x4, scoped, tag = 'scoped memory for custom_clip_forward.3']
    #allocation12 [shape = 'u8[2048]{0}', space=vmem, size = 0x800, scoped, tag = 'input window, operand 5, single buffered']
    #allocation13 [shape = 'u8[16384]{0}', space=vmem, size = 0x4000, scoped, tag = 'input window, operand 8, single buffered']
    #allocation14 [shape = 's32[1]{0}', space=sflag, size = 0x4, scoped, tag = 'scoped memory for custom_clip_forward.3']
    #allocation15 [shape = 'u8[32768]{0}', space=vmem, size = 0x8000, scoped, tag = 'input window, operand 10']
    #allocation16 [shape = 'u8[4096]{0}', space=vmem, size = 0x1000, scoped, tag = 'input window, operand 12']
    #allocation17 [shape = 'u8[1024]{0}', space=vmem, size = 0x400, scoped, tag = 'output window, operand 0, single buffered']
    %20 = vsyncpa [#allocation5], 0
    %21 = vsyncpa [#allocation8], 0
    %22 = vsyncpa [#allocation11], 0
    %23 = vsyncpa [#allocation14], 0
    %24 = vsyncpa [#allocation6], 0
    loop: start=0, step=1, limit=4
    $region2: #{custom_clip_forward.3} parent=1 // loop_pre_header
      _
    $region3: #{custom_clip_forward.3} parent=1 // loop_header
      %s26 = sphi 0, %s30
      %p27 = scmp.ge.s32.totalorder %s26, 4
      %s34 = sphi 0, %s34
      %s36 = sphi 0, %s34
      %s37 = sphi 0, %s36
      %s51 = sphi 0, %s37
      %s55 = sphi 0, %s55
      %s57 = sphi 0, %s55
      %s58 = sphi 0, %s57
      %s72 = sphi 0, %s58
      %s76 = sphi 0, %s76
      %s78 = sphi 0, %s76
      %s79 = sphi 0, %s78
      %s93 = sphi 0, %s79
      %s97 = sphi 0, %s97
      %s99 = sphi 0, %s97
      %s100 = sphi 0, %s99
      %s114 = sphi 0, %s100
      %s118 = sphi 0, %s118
      %s120 = sphi 0, %s118
      %s121 = sphi 0, %s120
      %s135 = sphi 0, %s121
      %s139 = sphi 0, %s139
      %s141 = sphi 0, %s139
      %s142 = sphi 0, %s141
      %s156 = sphi 0, %s142
      %s160 = sphi 0, %s160
      %s162 = sphi 0, %s160
      %s163 = sphi 0, %s162
      %s177 = sphi 0, %s163
      %s181 = sphi 0, %s181
      %s183 = sphi 0, %s181
      %s184 = sphi 0, %s183
      %s198 = sphi 0, %s184
      %s202 = sphi 0, %s202
      %s204 = sphi 0, %s202
      %s205 = sphi 0, %s204
      %s219 = sphi 0, %s205
      %s223 = sphi 0, %s223
      %s225 = sphi 0, %s223
      %s226 = sphi 0, %s225
      %s240 = sphi 0, %s226
      %s246 = sphi 0, %s248
      %s249 = sphi 0, %s246
      %s250 = sphi 0, %s249
      %s266 = sphi 0, %s250
      %s272 = sphi 0, %s274
      %s275 = sphi 0, %s272
      %s276 = sphi 0, %s275
      %s292 = sphi 0, %s276
      %s298 = sphi 0, %s300
      %s301 = sphi 0, %s298
      %s302 = sphi 0, %s301
      %s318 = sphi 0, %s302
      %s322 = sphi 0, %s322
      %s324 = sphi 0, %s322
      %s325 = sphi 0, %s324
      %s339 = sphi 0, %s325
    $region4: #{custom_clip_forward.3} parent=1 // loop_header_branch
      %29 = sbr.rel (%p27) target = $region8
    $region5: #{custom_clip_forward.3} parent=1 // loop_body
      %s31 = ssub.s32 %s26, 1
      %s32 = ssub.s32 %s26, 2
      %s33 = sadd.s32 %s26, 1
      %s35 = sadd.s32 %s34, 1
      %p38 = scmp.eq.s32.totalorder %s26, 1
      %p39 = scmp.ne.s32.totalorder %s34, %s36
      %p40 = scmp.eq.s32.totalorder %s26, 0
      %p41 = por %p39, %p40
      %p42 = scmp.ne.s32.totalorder %s34, %s36
      %p43 = scmp.eq.s32.totalorder %s31, 1
      %p44 = por %p42, %p43
      %p45 = scmp.ne.s32.totalorder %s36, %s37
      %p46 = scmp.eq.s32.totalorder %s31, 0
      %p47 = por %p45, %p46
      %p48 = scmp.ne.s32.totalorder %s36, %s37
      %p49 = scmp.eq.s32.totalorder %s32, 1
      %p50 = por %p48, %p49
      %p52 = scmp.ne.s32.totalorder %s37, %s51
      %p53 = scmp.eq.s32.totalorder %s32, 0
      %p54 = por %p52, %p53
      %s56 = sadd.s32 %s55, 1
      %p59 = scmp.eq.s32.totalorder %s26, 1
      %p60 = scmp.ne.s32.totalorder %s55, %s57
      %p61 = scmp.eq.s32.totalorder %s26, 0
      %p62 = por %p60, %p61
      %p63 = scmp.ne.s32.totalorder %s55, %s57
      %p64 = scmp.eq.s32.totalorder %s31, 1
      %p65 = por %p63, %p64
      %p66 = scmp.ne.s32.totalorder %s57, %s58
      %p67 = scmp.eq.s32.totalorder %s31, 0
      %p68 = por %p66, %p67
      %p69 = scmp.ne.s32.totalorder %s57, %s58
      %p70 = scmp.eq.s32.totalorder %s32, 1
      %p71 = por %p69, %p70
      %p73 = scmp.ne.s32.totalorder %s58, %s72
      %p74 = scmp.eq.s32.totalorder %s32, 0
      %p75 = por %p73, %p74
      %s77 = sadd.s32 %s76, 1
      %p80 = scmp.eq.s32.totalorder %s26, 1
      %p81 = scmp.ne.s32.totalorder %s76, %s78
      %p82 = scmp.eq.s32.totalorder %s26, 0
      %p83 = por %p81, %p82
      %p84 = scmp.ne.s32.totalorder %s76, %s78
      %p85 = scmp.eq.s32.totalorder %s31, 1
      %p86 = por %p84, %p85
      %p87 = scmp.ne.s32.totalorder %s78, %s79
      %p88 = scmp.eq.s32.totalorder %s31, 0
      %p89 = por %p87, %p88
      %p90 = scmp.ne.s32.totalorder %s78, %s79
      %p91 = scmp.eq.s32.totalorder %s32, 1
      %p92 = por %p90, %p91
      %p94 = scmp.ne.s32.totalorder %s79, %s93
      %p95 = scmp.eq.s32.totalorder %s32, 0
      %p96 = por %p94, %p95
      %s98 = sadd.s32 %s97, 1
      %p101 = scmp.eq.s32.totalorder %s26, 1
      %p102 = scmp.ne.s32.totalorder %s97, %s99
      %p103 = scmp.eq.s32.totalorder %s26, 0
      %p104 = por %p102, %p103
      %p105 = scmp.ne.s32.totalorder %s97, %s99
      %p106 = scmp.eq.s32.totalorder %s31, 1
      %p107 = por %p105, %p106
      %p108 = scmp.ne.s32.totalorder %s99, %s100
      %p109 = scmp.eq.s32.totalorder %s31, 0
      %p110 = por %p108, %p109
      %p111 = scmp.ne.s32.totalorder %s99, %s100
      %p112 = scmp.eq.s32.totalorder %s32, 1
      %p113 = por %p111, %p112
      %p115 = scmp.ne.s32.totalorder %s100, %s114
      %p116 = scmp.eq.s32.totalorder %s32, 0
      %p117 = por %p115, %p116
      %s119 = sadd.s32 %s118, 1
      %p122 = scmp.eq.s32.totalorder %s26, 1
      %p123 = scmp.ne.s32.totalorder %s118, %s120
      %p124 = scmp.eq.s32.totalorder %s26, 0
      %p125 = por %p123, %p124
      %p126 = scmp.ne.s32.totalorder %s118, %s120
      %p127 = scmp.eq.s32.totalorder %s31, 1
      %p128 = por %p126, %p127
      %p129 = scmp.ne.s32.totalorder %s120, %s121
      %p130 = scmp.eq.s32.totalorder %s31, 0
      %p131 = por %p129, %p130
      %p132 = scmp.ne.s32.totalorder %s120, %s121
      %p133 = scmp.eq.s32.totalorder %s32, 1
      %p134 = por %p132, %p133
      %p136 = scmp.ne.s32.totalorder %s121, %s135
      %p137 = scmp.eq.s32.totalorder %s32, 0
      %p138 = por %p136, %p137
      %s140 = sadd.s32 %s139, 1
      %p143 = scmp.eq.s32.totalorder %s26, 1
      %p144 = scmp.ne.s32.totalorder %s139, %s141
      %p145 = scmp.eq.s32.totalorder %s26, 0
      %p146 = por %p144, %p145
      %p147 = scmp.ne.s32.totalorder %s139, %s141
      %p148 = scmp.eq.s32.totalorder %s31, 1
      %p149 = por %p147, %p148
      %p150 = scmp.ne.s32.totalorder %s141, %s142
      %p151 = scmp.eq.s32.totalorder %s31, 0
      %p152 = por %p150, %p151
      %p153 = scmp.ne.s32.totalorder %s141, %s142
      %p154 = scmp.eq.s32.totalorder %s32, 1
      %p155 = por %p153, %p154
      %p157 = scmp.ne.s32.totalorder %s142, %s156
      %p158 = scmp.eq.s32.totalorder %s32, 0
      %p159 = por %p157, %p158
      %s161 = sadd.s32 %s160, 1
      %p164 = scmp.eq.s32.totalorder %s26, 1
      %p165 = scmp.ne.s32.totalorder %s160, %s162
      %p166 = scmp.eq.s32.totalorder %s26, 0
      %p167 = por %p165, %p166
      %p168 = scmp.ne.s32.totalorder %s160, %s162
      %p169 = scmp.eq.s32.totalorder %s31, 1
      %p170 = por %p168, %p169
      %p171 = scmp.ne.s32.totalorder %s162, %s163
      %p172 = scmp.eq.s32.totalorder %s31, 0
      %p173 = por %p171, %p172
      %p174 = scmp.ne.s32.totalorder %s162, %s163
      %p175 = scmp.eq.s32.totalorder %s32, 1
      %p176 = por %p174, %p175
      %p178 = scmp.ne.s32.totalorder %s163, %s177
      %p179 = scmp.eq.s32.totalorder %s32, 0
      %p180 = por %p178, %p179
      %s182 = sadd.s32 %s181, 1
      %p185 = scmp.eq.s32.totalorder %s26, 1
      %p186 = scmp.ne.s32.totalorder %s181, %s183
      %p187 = scmp.eq.s32.totalorder %s26, 0
      %p188 = por %p186, %p187
      %p189 = scmp.ne.s32.totalorder %s181, %s183
      %p190 = scmp.eq.s32.totalorder %s31, 1
      %p191 = por %p189, %p190
      %p192 = scmp.ne.s32.totalorder %s183, %s184
      %p193 = scmp.eq.s32.totalorder %s31, 0
      %p194 = por %p192, %p193
      %p195 = scmp.ne.s32.totalorder %s183, %s184
      %p196 = scmp.eq.s32.totalorder %s32, 1
      %p197 = por %p195, %p196
      %p199 = scmp.ne.s32.totalorder %s184, %s198
      %p200 = scmp.eq.s32.totalorder %s32, 0
      %p201 = por %p199, %p200
      %s203 = sadd.s32 %s202, 1
      %p206 = scmp.eq.s32.totalorder %s26, 1
      %p207 = scmp.ne.s32.totalorder %s202, %s204
      %p208 = scmp.eq.s32.totalorder %s26, 0
      %p209 = por %p207, %p208
      %p210 = scmp.ne.s32.totalorder %s202, %s204
      %p211 = scmp.eq.s32.totalorder %s31, 1
      %p212 = por %p210, %p211
      %p213 = scmp.ne.s32.totalorder %s204, %s205
      %p214 = scmp.eq.s32.totalorder %s31, 0
      %p215 = por %p213, %p214
      %p216 = scmp.ne.s32.totalorder %s204, %s205
      %p217 = scmp.eq.s32.totalorder %s32, 1
      %p218 = por %p216, %p217
      %p220 = scmp.ne.s32.totalorder %s205, %s219
      %p221 = scmp.eq.s32.totalorder %s32, 0
      %p222 = por %p220, %p221
      %s224 = sadd.s32 %s223, 1
      %p227 = scmp.eq.s32.totalorder %s26, 1
      %p228 = scmp.ne.s32.totalorder %s223, %s225
      %p229 = scmp.eq.s32.totalorder %s26, 0
      %p230 = por %p228, %p229
      %p231 = scmp.ne.s32.totalorder %s223, %s225
      %p232 = scmp.eq.s32.totalorder %s31, 1
      %p233 = por %p231, %p232
      %p234 = scmp.ne.s32.totalorder %s225, %s226
      %p235 = scmp.eq.s32.totalorder %s31, 0
      %p236 = por %p234, %p235
      %p237 = scmp.ne.s32.totalorder %s225, %s226
      %p238 = scmp.eq.s32.totalorder %s32, 1
      %p239 = por %p237, %p238
      %p241 = scmp.ne.s32.totalorder %s226, %s240
      %p242 = scmp.eq.s32.totalorder %s32, 0
      %p243 = por %p241, %p242
      %s244 = ssub.s32 %s26, %s33
      %p245 = scmp.eq.s32.totalorder %s244, 0
      %s247 = sadd.s32 %s246, 1
      %s248 = scalar_select %p245, %s246, %s247
      %p251 = pneg %p245
      %p252 = scmp.eq.s32.totalorder %s26, 1
      %p253 = por %p251, %p252
      %p254 = scmp.ne.s32.totalorder %s246, %s249
      %p255 = scmp.eq.s32.totalorder %s26, 0
      %p256 = por %p254, %p255
      %p257 = scmp.ne.s32.totalorder %s246, %s249
      %p258 = scmp.eq.s32.totalorder %s31, 1
      %p259 = por %p257, %p258
      %p260 = scmp.ne.s32.totalorder %s249, %s250
      %p261 = scmp.eq.s32.totalorder %s31, 0
      %p262 = por %p260, %p261
      %p263 = scmp.ne.s32.totalorder %s249, %s250
      %p264 = scmp.eq.s32.totalorder %s32, 1
      %p265 = por %p263, %p264
      %p267 = scmp.ne.s32.totalorder %s250, %s266
      %p268 = scmp.eq.s32.totalorder %s32, 0
      %p269 = por %p267, %p268
      %s270 = ssub.s32 %s26, %s33
      %p271 = scmp.eq.s32.totalorder %s270, 0
      %s273 = sadd.s32 %s272, 1
      %s274 = scalar_select %p271, %s272, %s273
      %p277 = pneg %p271
      %p278 = scmp.eq.s32.totalorder %s26, 1
      %p279 = por %p277, %p278
      %p280 = scmp.ne.s32.totalorder %s272, %s275
      %p281 = scmp.eq.s32.totalorder %s26, 0
      %p282 = por %p280, %p281
      %p283 = scmp.ne.s32.totalorder %s272, %s275
      %p284 = scmp.eq.s32.totalorder %s31, 1
      %p285 = por %p283, %p284
      %p286 = scmp.ne.s32.totalorder %s275, %s276
      %p287 = scmp.eq.s32.totalorder %s31, 0
      %p288 = por %p286, %p287
      %p289 = scmp.ne.s32.totalorder %s275, %s276
      %p290 = scmp.eq.s32.totalorder %s32, 1
      %p291 = por %p289, %p290
      %p293 = scmp.ne.s32.totalorder %s276, %s292
      %p294 = scmp.eq.s32.totalorder %s32, 0
      %p295 = por %p293, %p294
      %s296 = ssub.s32 %s26, %s33
      %p297 = scmp.eq.s32.totalorder %s296, 0
      %s299 = sadd.s32 %s298, 1
      %s300 = scalar_select %p297, %s298, %s299
      %p303 = pneg %p297
      %p304 = scmp.eq.s32.totalorder %s26, 1
      %p305 = por %p303, %p304
      %p306 = scmp.ne.s32.totalorder %s298, %s301
      %p307 = scmp.eq.s32.totalorder %s26, 0
      %p308 = por %p306, %p307
      %p309 = scmp.ne.s32.totalorder %s298, %s301
      %p310 = scmp.eq.s32.totalorder %s31, 1
      %p311 = por %p309, %p310
      %p312 = scmp.ne.s32.totalorder %s301, %s302
      %p313 = scmp.eq.s32.totalorder %s31, 0
      %p314 = por %p312, %p313
      %p315 = scmp.ne.s32.totalorder %s301, %s302
      %p316 = scmp.eq.s32.totalorder %s32, 1
      %p317 = por %p315, %p316
      %p319 = scmp.ne.s32.totalorder %s302, %s318
      %p320 = scmp.eq.s32.totalorder %s32, 0
      %p321 = por %p319, %p320
      %s323 = sadd.s32 %s322, 1
      %p326 = scmp.eq.s32.totalorder %s26, 1
      %p327 = scmp.ne.s32.totalorder %s322, %s324
      %p328 = scmp.eq.s32.totalorder %s26, 0
      %p329 = por %p327, %p328
      %p330 = scmp.ne.s32.totalorder %s322, %s324
      %p331 = scmp.eq.s32.totalorder %s31, 1
      %p332 = por %p330, %p331
      %p333 = scmp.ne.s32.totalorder %s324, %s325
      %p334 = scmp.eq.s32.totalorder %s31, 0
      %p335 = por %p333, %p334
      %p336 = scmp.ne.s32.totalorder %s324, %s325
      %p337 = scmp.eq.s32.totalorder %s32, 1
      %p338 = por %p336, %p337
      %p340 = scmp.ne.s32.totalorder %s325, %s339
      %p341 = scmp.eq.s32.totalorder %s32, 0
      %p342 = por %p340, %p341
      %p343 = scmp.le.s32.totalorder 1, %s26
      %p344 = scmp.lt.s32.totalorder %s26, 3
      %p345 = pnand %p343, %p344
      %p346 = pneg %p345
      // Predicated region
      $region9: #{custom_clip_forward.3} parent=5 // pred_check
        _
      $region10: #{custom_clip_forward.3} parent=5 // pred_check_branch
        %348 = sbr.rel (%p345) target = $region12
      $region11: #{custom_clip_forward.3} parent=5 // pred_region
        %s349 = ssub.s32 %s26, 1
        // Predicated region
        $region13: #{custom_clip_forward.3} parent=11 // pred_check
          %p350 = pneg %p47
        $region14: #{custom_clip_forward.3} parent=11 // pred_check_branch
          %352 = sbr.rel (%p350) target = $region16
        $region15: #{custom_clip_forward.3} parent=11 // pred_region
          %354 = vsyncadd [#allocation5], 0
          %s355 = sshll.u32 %s0, 4
          %s356 = int_to_ptr.hbm [resolvable:$true] %s355
          %s357 = sshll.u32 [#allocation4], 4
          %s358 = int_to_ptr.vmem [resolvable:$true] %s357
          %363 = dma.hbm_to_vmem [thread:$0]  %s356, 48, %s358, [#allocation5], 16, 16, 1
        $region16: #{custom_clip_forward.3} parent=11 // pred_fallthru
          _
        // Predicated region
        $region17: #{custom_clip_forward.3} parent=11 // pred_check
          %p364 = pneg %p68
        $region18: #{custom_clip_forward.3} parent=11 // pred_check_branch
          %366 = sbr.rel (%p364) target = $region20
        $region19: #{custom_clip_forward.3} parent=11 // pred_region
          %368 = vsyncadd [#allocation8], 0
          %s370 = sshll.u32 %s1, 4
          %s371 = int_to_ptr.hbm [resolvable:$true] %s370
          %s372 = sshll.u32 [#allocation7], 4
          %s373 = int_to_ptr.vmem [resolvable:$true] %s372
          %375 = dma.hbm_to_vmem [thread:$0]  %s371, 64, %s373, [#allocation8]
        $region20: #{custom_clip_forward.3} parent=11 // pred_fallthru
          _
        // Predicated region
        $region21: #{custom_clip_forward.3} parent=11 // pred_check
          %p376 = pneg %p89
        $region22: #{custom_clip_forward.3} parent=11 // pred_check_branch
          %378 = sbr.rel (%p376) target = $region24
        $region23: #{custom_clip_forward.3} parent=11 // pred_region
          _
        $region24: #{custom_clip_forward.3} parent=11 // pred_fallthru
          _
        // Predicated region
        $region25: #{custom_clip_forward.3} parent=11 // pred_check
          %p379 = pneg %p110
        $region26: #{custom_clip_forward.3} parent=11 // pred_check_branch
          %381 = sbr.rel (%p379) target = $region28
        $region27: #{custom_clip_forward.3} parent=11 // pred_region
          %383 = vsyncadd [#allocation8], 0
          %s384 = sshll.u32 %s3, 4
          %s385 = int_to_ptr.hbm [resolvable:$true] %s384
          %s386 = sshll.u32 [#allocation9], 4
          %s387 = int_to_ptr.vmem [resolvable:$true] %s386
          %392 = dma.hbm_to_vmem [thread:$0]  %s385, 256, %s387, [#allocation8], 128, 128, 8
        $region28: #{custom_clip_forward.3} parent=11 // pred_fallthru
          _
        // Predicated region
        $region29: #{custom_clip_forward.3} parent=11 // pred_check
          %p393 = pneg %p131
        $region30: #{custom_clip_forward.3} parent=11 // pred_check_branch
          %395 = sbr.rel (%p393) target = $region32
        $region31: #{custom_clip_forward.3} parent=11 // pred_region
          %397 = vsyncadd [#allocation11], 0
          %s398 = sshll.u32 %s4, 4
          %s399 = int_to_ptr.hbm [resolvable:$true] %s398
          %s400 = sshll.u32 [#allocation10], 4
          %s401 = int_to_ptr.vmem [resolvable:$true] %s400
          %406 = dma.hbm_to_vmem [thread:$0]  %s399, 256, %s401, [#allocation11], 128, 128, 8
        $region32: #{custom_clip_forward.3} parent=11 // pred_fallthru
          _
        // Predicated region
        $region33: #{custom_clip_forward.3} parent=11 // pred_check
          %p407 = pneg %p152
        $region34: #{custom_clip_forward.3} parent=11 // pred_check_branch
          %409 = sbr.rel (%p407) target = $region36
        $region35: #{custom_clip_forward.3} parent=11 // pred_region
          %411 = vsyncadd [#allocation11], 0
          %s413 = sshll.u32 %s5, 4
          %s414 = int_to_ptr.hbm [resolvable:$true] %s413
          %s415 = sshll.u32 [#allocation12], 4
          %s416 = int_to_ptr.vmem [resolvable:$true] %s415
          %418 = dma.hbm_to_vmem [thread:$0]  %s414, 64, %s416, [#allocation11]
        $region36: #{custom_clip_forward.3} parent=11 // pred_fallthru
          _
        // Predicated region
        $region37: #{custom_clip_forward.3} parent=11 // pred_check
          %p419 = pneg %p173
        $region38: #{custom_clip_forward.3} parent=11 // pred_check_branch
          %421 = sbr.rel (%p419) target = $region40
        $region39: #{custom_clip_forward.3} parent=11 // pred_region
          _
        $region40: #{custom_clip_forward.3} parent=11 // pred_fallthru
          _
        // Predicated region
        $region41: #{custom_clip_forward.3} parent=11 // pred_check
          %p422 = pneg %p194
        $region42: #{custom_clip_forward.3} parent=11 // pred_check_branch
          %424 = sbr.rel (%p422) target = $region44
        $region43: #{custom_clip_forward.3} parent=11 // pred_region
          _
        $region44: #{custom_clip_forward.3} parent=11 // pred_fallthru
          _
        // Predicated region
        $region45: #{custom_clip_forward.3} parent=11 // pred_check
          %p425 = pneg %p215
        $region46: #{custom_clip_forward.3} parent=11 // pred_check_branch
          %427 = sbr.rel (%p425) target = $region48
        $region47: #{custom_clip_forward.3} parent=11 // pred_region
          %429 = vsyncadd [#allocation14], 0
          %s430 = sshll.u32 %s8, 4
          %s431 = int_to_ptr.hbm [resolvable:$true] %s430
          %s432 = sshll.u32 [#allocation13], 4
          %s433 = int_to_ptr.vmem [resolvable:$true] %s432
          %438 = dma.hbm_to_vmem [thread:$0]  %s431, 512, %s433, [#allocation14], 128, 128, 8
        $region48: #{custom_clip_forward.3} parent=11 // pred_fallthru
          _
        // Predicated region
        $region49: #{custom_clip_forward.3} parent=11 // pred_check
          %p439 = pneg %p236
        $region50: #{custom_clip_forward.3} parent=11 // pred_check_branch
          %441 = sbr.rel (%p439) target = $region52
        $region51: #{custom_clip_forward.3} parent=11 // pred_region
          _
        $region52: #{custom_clip_forward.3} parent=11 // pred_fallthru
          _
      $region12: #{custom_clip_forward.3} parent=5 // pred_fallthru
        _
      %p442 = scmp.lt.s32.totalorder %s26, 2
      // Predicated region
      $region53: #{custom_clip_forward.3} parent=5 // pred_check
        %p443 = pneg %p442
      $region54: #{custom_clip_forward.3} parent=5 // pred_check_branch
        %445 = sbr.rel (%p443) target = $region56
      $region55: #{custom_clip_forward.3} parent=5 // pred_region
        // Predicated region
        $region57: #{custom_clip_forward.3} parent=55 // pred_check
          %p446 = pneg %p256
        $region58: #{custom_clip_forward.3} parent=55 // pred_check_branch
          %448 = sbr.rel (%p446) target = $region60
        $region59: #{custom_clip_forward.3} parent=55 // pred_region
          %s449 = sand.u32 %s26, 1
          %s450 = scalar_lea.sflag [#allocation5], %s449
          %s451 = sand.u32 %s246, 1
          %s452 = smul.addr %s451, 32
          %s453 = scalar_lea.vmem [#allocation15], %s452
          %455 = vsyncadd %s450, 0
          %s456 = smul.addr %s26, 8
          %s457 = smul.addr %s456, 4
          %s458 = scalar_lea.hbm %s10, %s457
          %s459 = sshll.u32 %s458, 4
          %s460 = int_to_ptr.hbm [resolvable:$true] %s459
          %s461 = sshll.u32 %s453, 4
          %s462 = int_to_ptr.vmem [resolvable:$true] %s461
          %467 = dma.hbm_to_vmem [thread:$0]  %s460, 512, %s462, %s450, 128, 128, 8
        $region60: #{custom_clip_forward.3} parent=55 // pred_fallthru
          _
        // Predicated region
        $region61: #{custom_clip_forward.3} parent=55 // pred_check
          %p468 = pneg %p282
        $region62: #{custom_clip_forward.3} parent=55 // pred_check_branch
          %470 = sbr.rel (%p468) target = $region64
        $region63: #{custom_clip_forward.3} parent=55 // pred_region
          %p471 = scmp.lt.s32.totalorder %s26, 1
          %s472 = scalar_select %p471, %s26, 1
          %s473 = smul.addr %s472, 16
          %s474 = smul.addr %s473, 4
          %s475 = scalar_lea.vmem %s11, %s474
        $region64: #{custom_clip_forward.3} parent=55 // pred_fallthru
          _
        // Predicated region
        $region65: #{custom_clip_forward.3} parent=55 // pred_check
          %p476 = pneg %p308
        $region66: #{custom_clip_forward.3} parent=55 // pred_check_branch
          %478 = sbr.rel (%p476) target = $region68
        $region67: #{custom_clip_forward.3} parent=55 // pred_region
          %s479 = sand.u32 %s26, 1
          %s480 = scalar_lea.sflag [#allocation5], %s479
          %s481 = sand.u32 %s298, 1
          %s482 = smul.addr %s481, 4
          %s483 = scalar_lea.vmem [#allocation16], %s482
          %485 = vsyncadd %s480, 0
          %s486 = smul.addr %s26, 4
          %s487 = scalar_lea.hbm %s12, %s486
          %s489 = sshll.u32 %s487, 4
          %s490 = int_to_ptr.hbm [resolvable:$true] %s489
          %s491 = sshll.u32 %s483, 4
          %s492 = int_to_ptr.vmem [resolvable:$true] %s491
          %494 = dma.hbm_to_vmem [thread:$0]  %s490, 64, %s492, %s480
        $region68: #{custom_clip_forward.3} parent=55 // pred_fallthru
          _
      $region56: #{custom_clip_forward.3} parent=5 // pred_fallthru
        _
      %p495 = scmp.le.s32.totalorder 1, %s26
      %p496 = scmp.lt.s32.totalorder %s26, 3
      %p497 = pnand %p495, %p496
      %p498 = pneg %p497
      // Predicated region
      $region69: #{custom_clip_forward.3} parent=5 // pred_check
        _
      $region70: #{custom_clip_forward.3} parent=5 // pred_check_branch
        %500 = sbr.rel (%p497) target = $region72
      $region71: #{custom_clip_forward.3} parent=5 // pred_region
        %s501 = ssub.s32 %s26, 1
        // Predicated region
        $region73: #{custom_clip_forward.3} parent=71 // pred_check
          %p502 = pneg %p47
        $region74: #{custom_clip_forward.3} parent=71 // pred_check_branch
          %504 = sbr.rel (%p502) target = $region76
        $region75: #{custom_clip_forward.3} parent=71 // pred_region
          %506 = dma.done [#allocation5], 48
        $region76: #{custom_clip_forward.3} parent=71 // pred_fallthru
          _
        // Predicated region
        $region77: #{custom_clip_forward.3} parent=71 // pred_check
          %p507 = pneg %p68
        $region78: #{custom_clip_forward.3} parent=71 // pred_check_branch
          %509 = sbr.rel (%p507) target = $region80
        $region79: #{custom_clip_forward.3} parent=71 // pred_region
          %511 = dma.done [#allocation8], 64
        $region80: #{custom_clip_forward.3} parent=71 // pred_fallthru
          _
        // Predicated region
        $region81: #{custom_clip_forward.3} parent=71 // pred_check
          %p512 = pneg %p110
        $region82: #{custom_clip_forward.3} parent=71 // pred_check_branch
          %514 = sbr.rel (%p512) target = $region84
        $region83: #{custom_clip_forward.3} parent=71 // pred_region
          %516 = dma.done [#allocation8], 256
        $region84: #{custom_clip_forward.3} parent=71 // pred_fallthru
          _
        // Predicated region
        $region85: #{custom_clip_forward.3} parent=71 // pred_check
          %p517 = pneg %p131
        $region86: #{custom_clip_forward.3} parent=71 // pred_check_branch
          %519 = sbr.rel (%p517) target = $region88
        $region87: #{custom_clip_forward.3} parent=71 // pred_region
          %521 = dma.done [#allocation11], 256
        $region88: #{custom_clip_forward.3} parent=71 // pred_fallthru
          _
        // Predicated region
        $region89: #{custom_clip_forward.3} parent=71 // pred_check
          %p522 = pneg %p152
        $region90: #{custom_clip_forward.3} parent=71 // pred_check_branch
          %524 = sbr.rel (%p522) target = $region92
        $region91: #{custom_clip_forward.3} parent=71 // pred_region
          %526 = dma.done [#allocation11], 64
        $region92: #{custom_clip_forward.3} parent=71 // pred_fallthru
          _
        // Predicated region
        $region93: #{custom_clip_forward.3} parent=71 // pred_check
          %p527 = pneg %p215
        $region94: #{custom_clip_forward.3} parent=71 // pred_check_branch
          %529 = sbr.rel (%p527) target = $region96
        $region95: #{custom_clip_forward.3} parent=71 // pred_region
          %531 = dma.done [#allocation14], 512
        $region96: #{custom_clip_forward.3} parent=71 // pred_fallthru
          _
        %s532 = sand.u32 %s31, 1
        %s533 = scalar_lea.sflag [#allocation5], %s532
        %s534 = sand.u32 %s249, 1
        %s535 = smul.addr %s534, 32
        %s536 = scalar_lea.vmem [#allocation15], %s535
        // Predicated region
        $region97: #{custom_clip_forward.3} parent=71 // pred_check
          %p537 = pneg %p262
        $region98: #{custom_clip_forward.3} parent=71 // pred_check_branch
          %539 = sbr.rel (%p537) target = $region100
        $region99: #{custom_clip_forward.3} parent=71 // pred_region
          %541 = dma.done %s533, 512
        $region100: #{custom_clip_forward.3} parent=71 // pred_fallthru
          _
        %s542 = sand.u32 %s31, 1
        %s543 = scalar_lea.sflag [#allocation5], %s542
        %s544 = sand.u32 %s301, 1
        %s545 = smul.addr %s544, 4
        %s546 = scalar_lea.vmem [#allocation16], %s545
        // Predicated region
        $region101: #{custom_clip_forward.3} parent=71 // pred_check
          %p547 = pneg %p314
        $region102: #{custom_clip_forward.3} parent=71 // pred_check_branch
          %549 = sbr.rel (%p547) target = $region104
        $region103: #{custom_clip_forward.3} parent=71 // pred_region
          %551 = dma.done %s543, 64
        $region104: #{custom_clip_forward.3} parent=71 // pred_fallthru
          _
        %p552 = pneg %p47
        %p553 = pneg %p44
        %p554 = pneg %p68
        %p555 = pneg %p65
        %p556 = pneg %p89
        %p557 = pneg %p86
        %p558 = pneg %p110
        %p559 = pneg %p107
        %p560 = pneg %p131
        %p561 = pneg %p128
        %p562 = pneg %p152
        %p563 = pneg %p149
        %p564 = pneg %p173
        %p565 = pneg %p170
        %p566 = pneg %p194
        %p567 = pneg %p191
        %p568 = pneg %p215
        %p569 = pneg %p212
        %p570 = pneg %p236
        %p571 = pneg %p233
        %s572 = sand.u32 %s31, 1
        %s573 = scalar_lea.sflag [#allocation5], %s572
        %s574 = sand.u32 %s249, 1
        %s575 = smul.addr %s574, 32
        %s576 = scalar_lea.vmem [#allocation15], %s575
        %p577 = pneg %p262
        %p578 = pneg %p259
        %p579 = scmp.lt.s32.totalorder %s31, 1
        %s580 = scalar_select %p579, %s31, 1
        %s581 = smul.addr %s580, 16
        %s582 = smul.addr %s581, 4
        %s583 = scalar_lea.vmem %s11, %s582
        %p584 = pneg %p288
        %p585 = pneg %p285
        %s586 = sand.u32 %s31, 1
        %s587 = scalar_lea.sflag [#allocation5], %s586
        %s588 = sand.u32 %s301, 1
        %s589 = smul.addr %s588, 4
        %s590 = scalar_lea.vmem [#allocation16], %s589
        %p591 = pneg %p314
        %p592 = pneg %p311
        %p593 = pneg %p335
        %p594 = pneg %p332
        %p595 = scmp.lt.s32.totalorder %s31, 1
        %s596 = scalar_select %p595, %s31, 1
        %s597 = smul.addr %s596, 16
        %s598 = smul.addr %s597, 4
        %s599 = scalar_lea.vmem %s11, %s598
        %p601 = scmp.eq.s32.totalorder %s31, 0
        // Predicated region
        $region105: #{custom_clip_forward.3} parent=71 // pred_check
          %p602 = pneg %p601
        $region106: #{custom_clip_forward.3} parent=71 // pred_check_branch
          %604 = sbr.rel (%p602) target = $region108
        $region107: #{custom_clip_forward.3} parent=71 // pred_region
          %v605 = vld [vmem:[#allocation7] sm:$0xf]
          %v606 = vld [vmem:[#allocation4] sm:$0x1]
          %v607 = vld [vmem:[#allocation4 + $0x1] sm:$0x1]
          %v608 = vld [vmem:[#allocation4 + $0x2] sm:$0x1]
          %v609 = vld [vmem:[%s2] sm:$0xff]
          %v610 = vld [vmem:[%s2 + $0x8] sm:$0x7]
          %v611 = vld [vmem:[%s2 + $0x10] sm:$0xff]
          %v612 = vld [vmem:[%s2 + $0x18] sm:$0x7]
          %v613 = vld [vmem:[%s2 + $0x20] sm:$0xff]
          %v614 = vld [vmem:[%s2 + $0x28] sm:$0x7]
          %v616 = vrot.slane %v605, 7
          %vm624 = vcmask 1044480
          %v625 = vrot.slane %v609, 3
          %v626 = vrot.slane %v610, 3
          %v627 = vsel %vm624, %v625, %v626
          %v628 = vrot.slane %v611, 3
          %v629 = vrot.slane %v612, 3
          %v630 = vsel %vm624, %v628, %v629
          %v631 = vrot.slane %v613, 3
          %v632 = vrot.slane %v614, 3
          %v633 = vsel %vm624, %v631, %v632
          %vm640 = vcmask 1040384
          %v641 = vsel %vm640, %v606, %v616
          %v642 = vsel %vm640, %v607, %v616
          %v643 = vsel %vm640, %v608, %v616
          %v644 = vsel %vm624, %v641, %v625
          %v645 = vsel %vm624, %v642, %v628
          %v646 = vsel %vm624, %v643, %v631
          %v647 = vld [vmem:[#allocation9] sm:$0xff]
          %v648 = vld [vmem:[#allocation9 + $0x8] sm:$0xff]
          %v649 = vadd.f32 %v644, %v647
          %v650 = vadd.f32 %v627, %v648
          %v651 = vadd.f32 %v645, %v647
          %v652 = vadd.f32 %v630, %v648
          %v653 = vadd.f32 %v646, %v647
          %v654 = vadd.f32 %v633, %v648
          %vm655 = vcmask 261120
          %656 = vst.msk [vmem:[#allocation2] sm:$0xff] %vm655, %v649
          %657 = vst.msk [vmem:[#allocation2 + $0x8] sm:$0xff] %vm655, %v650
          %658 = vst.msk [vmem:[#allocation2 + $0x10] sm:$0xff] %vm655, %v651
          %659 = vst.msk [vmem:[#allocation2 + $0x18] sm:$0xff] %vm655, %v652
          %660 = vst.msk [vmem:[#allocation2 + $0x20] sm:$0xff] %vm655, %v653
          %661 = vst.msk [vmem:[#allocation2 + $0x28] sm:$0xff] %vm655, %v654
        $region108: #{custom_clip_forward.3} parent=71 // pred_fallthru
          _
        %v662 = vld [vmem:[#allocation2] sm:$0xff]
        %v663 = vld [vmem:[#allocation2 + $0x8] sm:$0xff]
        %v664 = vld [vmem:[#allocation2 + $0x10] sm:$0xff]
        %v665 = vld [vmem:[#allocation2 + $0x18] sm:$0xff]
        %v666 = vld [vmem:[#allocation2 + $0x20] sm:$0xff]
        %v667 = vld [vmem:[#allocation2 + $0x28] sm:$0xff]
        %v668 = vld [vmem:[#allocation10] sm:$0xff]
        %v669 = vld [vmem:[#allocation10 + $0x8] sm:$0xff]
        %v670 = vld [vmem:[%s546] sm:$0xf]
        %v671 = vld [vmem:[%s536] sm:$0xf]
        %v672 = vld [vmem:[%s536 + $0x8] sm:$0xf]
        %v673 = vld [vmem:[%s536 + $0x10] sm:$0xf]
        %v674 = vld [vmem:[%s536 + $0x18] sm:$0xf]
        %v675 = vld [vmem:[%s536 + $0x4] sm:$0xf]
        %v676 = vld [vmem:[%s536 + $0xc] sm:$0xf]
        %v677 = vld [vmem:[%s536 + $0x14] sm:$0xf]
        %v678 = vld [vmem:[%s536 + $0x1c] sm:$0xf]
        %v679 = vld [vmem:[%s599] sm:$0xf]
        %v680 = vld [vmem:[%s599 + $0x4] sm:$0xf]
        %v681 = vld [vmem:[%s599 + $0x8] sm:$0xf]
        %v682 = vld [vmem:[%s599 + $0xc] sm:$0xf]
        %v683 = vld [vmem:[%s599 + $0x10] sm:$0xf]
        %v684 = vld [vmem:[%s599 + $0x14] sm:$0xf]
        %v685 = vld [vmem:[%s599 + $0x18] sm:$0xf]
        %v686 = vld [vmem:[%s599 + $0x1c] sm:$0xf]
        %v687 = vld [vmem:[%s599 + $0x20] sm:$0xf]
        %v688 = vld [vmem:[%s599 + $0x24] sm:$0xf]
        %v689 = vld [vmem:[%s599 + $0x28] sm:$0xf]
        %v690 = vld [vmem:[%s599 + $0x2c] sm:$0xf]
        %v691 = vld [vmem:[%s599 + $0x30] sm:$0xf]
        %v692 = vld [vmem:[%s599 + $0x34] sm:$0xf]
        %v693 = vld [vmem:[%s599 + $0x38] sm:$0xf]
        %v694 = vld [vmem:[%s599 + $0x3c] sm:$0xf]
        %vm695 = vcmask 261120
        %v696 = vsel %vm695, %v662, 0.0
        %697 = vadd.xlane.f32.xlu0 %v696
        %v698 = vpop.xlane.xlu0 %697
        %v699 = vsel %vm695, %v663, 0.0
        %700 = vadd.xlane.f32.xlu0 %v699
        %v701 = vpop.xlane.xlu0 %700
        %v702 = vsel %vm695, %v664, 0.0
        %703 = vadd.xlane.f32.xlu0 %v702
        %v704 = vpop.xlane.xlu0 %703
        %v705 = vsel %vm695, %v665, 0.0
        %706 = vadd.xlane.f32.xlu0 %v705
        %v707 = vpop.xlane.xlu0 %706
        %v708 = vsel %vm695, %v666, 0.0
        %709 = vadd.xlane.f32.xlu0 %v708
        %v710 = vpop.xlane.xlu0 %709
        %v711 = vsel %vm695, %v667, 0.0
        %712 = vadd.xlane.f32.xlu0 %v711
        %v713 = vpop.xlane.xlu0 %712
        %v714 = vrcp.pop 32.0
        %v715 = vmul.f32 32.0, %v714
        %v716 = vsub.f32 1.0, %v715
        %v717 = vmul.f32 %v714, %v716
        %v718 = vadd.f32 %v714, %v717
        %vm719 = vweird.f32 %v714
        %v720 = vsel %vm719, %v714, %v718
        %v721 = vmul.f32 %v698, %v720
        %v722 = vmul.f32 %v701, %v720
        %v723 = vmul.f32 %v704, %v720
        %v724 = vmul.f32 %v707, %v720
        %v725 = vmul.f32 %v710, %v720
        %v726 = vmul.f32 %v713, %v720
        %v727 = vsub.f32 %v662, %v721
        %v728 = vsub.f32 %v663, %v722
        %v729 = vsub.f32 %v664, %v723
        %v730 = vsub.f32 %v665, %v724
        %v731 = vsub.f32 %v666, %v725
        %v732 = vsub.f32 %v667, %v726
        %v733 = vmul.f32 %v727, %v727
        %v734 = vmul.f32 %v728, %v728
        %v735 = vmul.f32 %v729, %v729
        %v736 = vmul.f32 %v730, %v730
        %v737 = vmul.f32 %v731, %v731
        %v738 = vmul.f32 %v732, %v732
        %v739 = vsel %vm695, %v733, 0.0
        %740 = vadd.xlane.f32.xlu0 %v739
        %v741 = vpop.xlane.xlu0 %740
        %v742 = vsel %vm695, %v734, 0.0
        %743 = vadd.xlane.f32.xlu0 %v742
        %v744 = vpop.xlane.xlu0 %743
        %v745 = vsel %vm695, %v735, 0.0
        %746 = vadd.xlane.f32.xlu0 %v745
        %v747 = vpop.xlane.xlu0 %746
        %v748 = vsel %vm695, %v736, 0.0
        %749 = vadd.xlane.f32.xlu0 %v748
        %v750 = vpop.xlane.xlu0 %749
        %v751 = vsel %vm695, %v737, 0.0
        %752 = vadd.xlane.f32.xlu0 %v751
        %v753 = vpop.xlane.xlu0 %752
        %v754 = vsel %vm695, %v738, 0.0
        %755 = vadd.xlane.f32.xlu0 %v754
        %v756 = vpop.xlane.xlu0 %755
        %v757 = vmul.f32 %v741, %v720
        %v758 = vmul.f32 %v744, %v720
        %v759 = vmul.f32 %v747, %v720
        %v760 = vmul.f32 %v750, %v720
        %v761 = vmul.f32 %v753, %v720
        %v762 = vmul.f32 %v756, %v720
        %v763 = vadd.f32 %v757, 1e-05
        %v764 = vadd.f32 %v758, 1e-05
        %v765 = vadd.f32 %v759, 1e-05
        %v766 = vadd.f32 %v760, 1e-05
        %v767 = vadd.f32 %v761, 1e-05
        %v768 = vadd.f32 %v762, 1e-05
        %v769 = vrsqrt.pop %v763
        %v770 = vmul.f32 %v769, %v763
        %v771 = vmul.f32 %v770, %v769
        %v772 = vmul.f32 0.5, %v771
        %v773 = vsub.f32 1.5, %v772
        %v774 = vmul.f32 %v769, %v773
        %vm775 = vweird.f32 %v763
        %vm776 = vweird.f32 %v769
        %vm777 = vmor %vm775, %vm776
        %v778 = vsel %vm777, %v769, %v774
        %v779 = vrsqrt.pop %v764
        %v780 = vmul.f32 %v779, %v764
        %v781 = vmul.f32 %v780, %v779
        %v782 = vmul.f32 0.5, %v781
        %v783 = vsub.f32 1.5, %v782
        %v784 = vmul.f32 %v779, %v783
        %vm785 = vweird.f32 %v764
        %vm786 = vweird.f32 %v779
        %vm787 = vmor %vm785, %vm786
        %v788 = vsel %vm787, %v779, %v784
        %v789 = vrsqrt.pop %v765
        %v790 = vmul.f32 %v789, %v765
        %v791 = vmul.f32 %v790, %v789
        %v792 = vmul.f32 0.5, %v791
        %v793 = vsub.f32 1.5, %v792
        %v794 = vmul.f32 %v789, %v793
        %vm795 = vweird.f32 %v765
        %vm796 = vweird.f32 %v789
        %vm797 = vmor %vm795, %vm796
        %v798 = vsel %vm797, %v789, %v794
        %v799 = vrsqrt.pop %v766
        %v800 = vmul.f32 %v799, %v766
        %v801 = vmul.f32 %v800, %v799
        %v802 = vmul.f32 0.5, %v801
        %v803 = vsub.f32 1.5, %v802
        %v804 = vmul.f32 %v799, %v803
        %vm805 = vweird.f32 %v766
        %vm806 = vweird.f32 %v799
        %vm807 = vmor %vm805, %vm806
        %v808 = vsel %vm807, %v799, %v804
        %v809 = vrsqrt.pop %v767
        %v810 = vmul.f32 %v809, %v767
        %v811 = vmul.f32 %v810, %v809
        %v812 = vmul.f32 0.5, %v811
        %v813 = vsub.f32 1.5, %v812
        %v814 = vmul.f32 %v809, %v813
        %vm815 = vweird.f32 %v767
        %vm816 = vweird.f32 %v809
        %vm817 = vmor %vm815, %vm816
        %v818 = vsel %vm817, %v809, %v814
        %v819 = vrsqrt.pop %v768
        %v820 = vmul.f32 %v819, %v768
        %v821 = vmul.f32 %v820, %v819
        %v822 = vmul.f32 0.5, %v821
        %v823 = vsub.f32 1.5, %v822
        %v824 = vmul.f32 %v819, %v823
        %vm825 = vweird.f32 %v768
        %vm826 = vweird.f32 %v819
        %vm827 = vmor %vm825, %vm826
        %v828 = vsel %vm827, %v819, %v824
        %v829 = vmul.f32 %v727, %v778
        %v830 = vmul.f32 %v728, %v788
        %v831 = vmul.f32 %v729, %v798
        %v832 = vmul.f32 %v730, %v808
        %v833 = vmul.f32 %v731, %v818
        %v834 = vmul.f32 %v732, %v828
        %v836 = vperm.slane %v670, 0
        %v838 = vmul.f32 %v829, %v836
        %v839 = vmul.f32 %v830, %v836
        %v840 = vmul.f32 %v831, %v836
        %v841 = vmul.f32 %v832, %v836
        %v842 = vmul.f32 %v833, %v836
        %v843 = vmul.f32 %v834, %v836
        %844 = vrot.lane.b32.xlu0 %v836, 96
        %v845 = vpop.permute.xlu0 %844
        %v847 = vadd.f32 %v838, %v845
        %v848 = vadd.f32 %v839, %v845
        %v849 = vadd.f32 %v840, %v845
        %v850 = vadd.f32 %v841, %v845
        %v851 = vadd.f32 %v842, %v845
        %v852 = vadd.f32 %v843, %v845
        %v853 = vpack.c.bf16 %v848, %v847
        %v854 = vpack.c.bf16 %v850, %v849
        %v855 = vpack.c.bf16 %v852, %v851
        %v860 = vunpack.c.l.b16 %v671
        %v861 = vunpack.c.l.b16 %v672
        %v862 = vunpack.c.l.b16 %v673
        %v863 = vunpack.c.l.b16 %v674
        %v864 = vpack.c.b16 %v861, %v860
        %v865 = vpack.c.b16 %v863, %v862
        %v869 = vsel %vm695, %v853, 0
        %v872 = vsel %vm695, %v854, 0
        %v875 = vsel %vm695, %v855, 0
        %877 = vmatpush.bf16.msra.mxu0 0
        %878 = vmatpush.bf16.msra.mxu0 0
        %879 = vmatpush.bf16.msra.mxu0 0
        %880 = vmatpush.bf16.msra.mxu0 0
        %881 = vmatpush.bf16.msra.mxu0 0
        %882 = vmatpush.bf16.msra.mxu0 0
        %883 = vmatpush.bf16.msra.mxu0 %v865
        %884 = vmatpush.bf16.msra.mxu0 %v864
        %885 = vmatmul.bf16.gmra.mxu0 %v869
        %v886 = vpop.f32.mrf.mxu0
        %v887 = vadd.f32 0.0, %v886
        %v888 = vpop.f32.mrf.mxu0
        %v889 = vadd.f32 0.0, %v888
        %890 = vmatmul.bf16.gmra.mxu0 %v872
        %v891 = vpop.f32.mrf.mxu0
        %v892 = vadd.f32 0.0, %v891
        %v893 = vpop.f32.mrf.mxu0
        %v894 = vadd.f32 0.0, %v893
        %895 = vmatmul.bf16.gmra.mxu0 %v875
        %v896 = vpop.f32.mrf.mxu0
        %v897 = vadd.f32 0.0, %v896
        %v898 = vpop.f32.mrf.mxu0
        %v899 = vadd.f32 0.0, %v898
        %900 = vdwg.mxu0
        %v901 = vperm.slane %v670, 1
        %902 = vrot.lane.b32.xlu0 %v836, 64
        %v903 = vpop.permute.xlu0 %902
        %904 = vrot.lane.b32.xlu0 %v901, 64
        %v905 = vpop.permute.xlu0 %904
        %vm906 = vcmask 523264
        %v907 = vsel %vm906, %v903, %v905
        %v909 = vadd.f32 %v887, %v907
        %v910 = vadd.f32 %v889, %v907
        %v911 = vadd.f32 %v892, %v907
        %v912 = vadd.f32 %v894, %v907
        %v913 = vadd.f32 %v897, %v907
        %v914 = vadd.f32 %v899, %v907
        %v915 = vmul.f32 %v909, 0.25
        %v916 = vmul.f32 %v910, 0.25
        %v917 = vmul.f32 %v911, 0.25
        %v918 = vmul.f32 %v912, 0.25
        %v919 = vmul.f32 %v913, 0.25
        %v920 = vmul.f32 %v914, 0.25
        %v921 = vpack.c.bf16 %v915, %v915
        %v922 = vpack.c.bf16 %v916, %v916
        %v923 = vpack.c.bf16 %v917, %v917
        %v924 = vpack.c.bf16 %v918, %v918
        %v925 = vpack.c.bf16 %v919, %v919
        %v926 = vpack.c.bf16 %v920, %v920
        %v927 = vpack.c.bf16 %v909, %v909
        %v928 = vpack.c.bf16 %v910, %v910
        %v929 = vpack.c.bf16 %v911, %v911
        %v930 = vpack.c.bf16 %v912, %v912
        %v931 = vpack.c.bf16 %v913, %v913
        %v932 = vpack.c.bf16 %v914, %v914
        %v935 = vunpack.c.l.b16 %v921
        %v936 = vunpack.c.l.b16 %v922
        %v937 = vpack.c.b16 %v936, %v935
        %v940 = vunpack.c.l.b16 %v927
        %v941 = vunpack.c.l.b16 %v928
        %v942 = vpack.c.b16 %v941, %v940
        %943 = vrot.lane.b32.xlu0 %v942, 96
        %v944 = vpop.permute.xlu0 %943
        %vm945 = vcmask 130048
        %v947 = vsel %vm945, %v937, 0
        %v950 = vsel %vm945, %v944, 0
        %952 = vmatpush.bf16.xpose.msra.mxu0 0
        %953 = vmatpush.bf16.xpose.msra.mxu0 0
        %954 = vmatpush.bf16.xpose.msra.mxu0 0
        %955 = vmatpush.bf16.xpose.msra.mxu0 0
        %956 = vmatpush.bf16.xpose.msra.mxu0 0
        %957 = vmatpush.bf16.xpose.msra.mxu0 0
        %958 = vmatpush.bf16.xpose.msra.mxu0 0
        %959 = vmatpush.bf16.xpose.msra.mxu0 %v950
        %960 = vmatmul.bf16.gmra.mxu0 %v947
        %v961 = vpop.f32.mrf.mxu0
        %v962 = vadd.f32 %v668, %v961
        %v963 = vpop.f32.mrf.mxu0
        %v964 = vadd.f32 %v669, %v963
        %965 = vdwg.mxu0
        %v968 = vunpack.c.l.b16 %v923
        %v969 = vunpack.c.l.b16 %v924
        %v970 = vpack.c.b16 %v969, %v968
        %v973 = vunpack.c.l.b16 %v929
        %v974 = vunpack.c.l.b16 %v930
        %v975 = vpack.c.b16 %v974, %v973
        %976 = vrot.lane.b32.xlu0 %v975, 96
        %v977 = vpop.permute.xlu0 %976
        %v979 = vsel %vm945, %v970, 0
        %v982 = vsel %vm945, %v977, 0
        %984 = vmatpush.bf16.xpose.msra.mxu0 0
        %985 = vmatpush.bf16.xpose.msra.mxu0 0
        %986 = vmatpush.bf16.xpose.msra.mxu0 0
        %987 = vmatpush.bf16.xpose.msra.mxu0 0
        %988 = vmatpush.bf16.xpose.msra.mxu0 0
        %989 = vmatpush.bf16.xpose.msra.mxu0 0
        %990 = vmatpush.bf16.xpose.msra.mxu0 0
        %991 = vmatpush.bf16.xpose.msra.mxu0 %v982
        %992 = vmatmul.bf16.gmra.mxu0 %v979
        %v993 = vpop.f32.mrf.mxu0
        %v994 = vadd.f32 %v668, %v993
        %v995 = vpop.f32.mrf.mxu0
        %v996 = vadd.f32 %v669, %v995
        %997 = vdwg.mxu0
        %v1000 = vunpack.c.l.b16 %v925
        %v1001 = vunpack.c.l.b16 %v926
        %v1002 = vpack.c.b16 %v1001, %v1000
        %v1005 = vunpack.c.l.b16 %v931
        %v1006 = vunpack.c.l.b16 %v932
        %v1007 = vpack.c.b16 %v1006, %v1005
        %1008 = vrot.lane.b32.xlu0 %v1007, 96
        %v1009 = vpop.permute.xlu0 %1008
        %v1011 = vsel %vm945, %v1002, 0
        %v1014 = vsel %vm945, %v1009, 0
        %1016 = vmatpush.bf16.xpose.msra.mxu0 0
        %1017 = vmatpush.bf16.xpose.msra.mxu0 0
        %1018 = vmatpush.bf16.xpose.msra.mxu0 0
        %1019 = vmatpush.bf16.xpose.msra.mxu0 0
        %1020 = vmatpush.bf16.xpose.msra.mxu0 0
        %1021 = vmatpush.bf16.xpose.msra.mxu0 0
        %1022 = vmatpush.bf16.xpose.msra.mxu0 0
        %1023 = vmatpush.bf16.xpose.msra.mxu0 %v1014
        %1024 = vmatmul.bf16.gmra.mxu0 %v1011
        %v1025 = vpop.f32.mrf.mxu0
        %v1026 = vadd.f32 %v668, %v1025
        %v1027 = vpop.f32.mrf.mxu0
        %v1028 = vadd.f32 %v669, %v1027
        %1029 = vdwg.mxu0
        %v1030 = vsel %vm945, %v962, -inf
        %1031 = vmax.xlane.f32.xlu0 %v1030
        %v1032 = vpop.xlane.xlu0 %1031
        %v1033 = vsel %vm945, %v964, -inf
        %1034 = vmax.xlane.f32.xlu0 %v1033
        %v1035 = vpop.xlane.xlu0 %1034
        %v1036 = vsel %vm945, %v994, -inf
        %1037 = vmax.xlane.f32.xlu0 %v1036
        %v1038 = vpop.xlane.xlu0 %1037
        %v1039 = vsel %vm945, %v996, -inf
        %1040 = vmax.xlane.f32.xlu0 %v1039
        %v1041 = vpop.xlane.xlu0 %1040
        %v1042 = vsel %vm945, %v1026, -inf
        %1043 = vmax.xlane.f32.xlu0 %v1042
        %v1044 = vpop.xlane.xlu0 %1043
        %v1045 = vsel %vm945, %v1028, -inf
        %1046 = vmax.xlane.f32.xlu0 %v1045
        %v1047 = vpop.xlane.xlu0 %1046
        %v1048 = vsub.f32 %v962, %v1032
        %v1049 = vsub.f32 %v964, %v1035
        %v1050 = vsub.f32 %v994, %v1038
        %v1051 = vsub.f32 %v996, %v1041
        %v1052 = vsub.f32 %v1026, %v1044
        %v1053 = vsub.f32 %v1028, %v1047
        %v1054 = vmul.f32 %v1048, 1.442695
        %v1055 = vpow.pop %v1054
        %v1056 = vmul.f32 %v1049, 1.442695
        %v1057 = vpow.pop %v1056
        %v1058 = vmul.f32 %v1050, 1.442695
        %v1059 = vpow.pop %v1058
        %v1060 = vmul.f32 %v1051, 1.442695
        %v1061 = vpow.pop %v1060
        %v1062 = vmul.f32 %v1052, 1.442695
        %v1063 = vpow.pop %v1062
        %v1064 = vmul.f32 %v1053, 1.442695
        %v1065 = vpow.pop %v1064
        %v1066 = vsel %vm945, %v1055, 0.0
        %1067 = vadd.xlane.f32.xlu0 %v1066
        %v1068 = vpop.xlane.xlu0 %1067
        %v1069 = vsel %vm945, %v1057, 0.0
        %1070 = vadd.xlane.f32.xlu0 %v1069
        %v1071 = vpop.xlane.xlu0 %1070
        %v1072 = vsel %vm945, %v1059, 0.0
        %1073 = vadd.xlane.f32.xlu0 %v1072
        %v1074 = vpop.xlane.xlu0 %1073
        %v1075 = vsel %vm945, %v1061, 0.0
        %1076 = vadd.xlane.f32.xlu0 %v1075
        %v1077 = vpop.xlane.xlu0 %1076
        %v1078 = vsel %vm945, %v1063, 0.0
        %1079 = vadd.xlane.f32.xlu0 %v1078
        %v1080 = vpop.xlane.xlu0 %1079
        %v1081 = vsel %vm945, %v1065, 0.0
        %1082 = vadd.xlane.f32.xlu0 %v1081
        %v1083 = vpop.xlane.xlu0 %1082
        %v1084 = vrcp.pop %v1068
        %v1085 = vmul.f32 %v1068, %v1084
        %v1086 = vsub.f32 1.0, %v1085
        %v1087 = vmul.f32 %v1084, %v1086
        %v1088 = vadd.f32 %v1084, %v1087
        %vm1089 = vweird.f32 %v1068
        %vm1090 = vweird.f32 %v1084
        %vm1091 = vmor %vm1089, %vm1090
        %v1092 = vsel %vm1091, %v1084, %v1088
        %v1093 = vand.u32 2147483647, %v1068
        %vm1094 = vcmp.eq.f32.partialorder %v1093, 8.507059e+37
        %v1095 = vand.u32 %v1068, 2147483648
        %v1096 = vor.u32 1.1754944e-38, %v1095
        %v1097 = vsel %vm1094, %v1096, %v1092
        %v1098 = vmul.f32 %v1055, %v1097
        %v1099 = vrcp.pop %v1071
        %v1100 = vmul.f32 %v1071, %v1099
        %v1101 = vsub.f32 1.0, %v1100
        %v1102 = vmul.f32 %v1099, %v1101
        %v1103 = vadd.f32 %v1099, %v1102
        %vm1104 = vweird.f32 %v1071
        %vm1105 = vweird.f32 %v1099
        %vm1106 = vmor %vm1104, %vm1105
        %v1107 = vsel %vm1106, %v1099, %v1103
        %v1108 = vand.u32 2147483647, %v1071
        %vm1109 = vcmp.eq.f32.partialorder %v1108, 8.507059e+37
        %v1110 = vand.u32 %v1071, 2147483648
        %v1111 = vor.u32 1.1754944e-38, %v1110
        %v1112 = vsel %vm1109, %v1111, %v1107
        %v1113 = vmul.f32 %v1057, %v1112
        %v1114 = vrcp.pop %v1074
        %v1115 = vmul.f32 %v1074, %v1114
        %v1116 = vsub.f32 1.0, %v1115
        %v1117 = vmul.f32 %v1114, %v1116
        %v1118 = vadd.f32 %v1114, %v1117
        %vm1119 = vweird.f32 %v1074
        %vm1120 = vweird.f32 %v1114
        %vm1121 = vmor %vm1119, %vm1120
        %v1122 = vsel %vm1121, %v1114, %v1118
        %v1123 = vand.u32 2147483647, %v1074
        %vm1124 = vcmp.eq.f32.partialorder %v1123, 8.507059e+37
        %v1125 = vand.u32 %v1074, 2147483648
        %v1126 = vor.u32 1.1754944e-38, %v1125
        %v1127 = vsel %vm1124, %v1126, %v1122
        %v1128 = vmul.f32 %v1059, %v1127
        %v1129 = vrcp.pop %v1077
        %v1130 = vmul.f32 %v1077, %v1129
        %v1131 = vsub.f32 1.0, %v1130
        %v1132 = vmul.f32 %v1129, %v1131
        %v1133 = vadd.f32 %v1129, %v1132
        %vm1134 = vweird.f32 %v1077
        %vm1135 = vweird.f32 %v1129
        %vm1136 = vmor %vm1134, %vm1135
        %v1137 = vsel %vm1136, %v1129, %v1133
        %v1138 = vand.u32 2147483647, %v1077
        %vm1139 = vcmp.eq.f32.partialorder %v1138, 8.507059e+37
        %v1140 = vand.u32 %v1077, 2147483648
        %v1141 = vor.u32 1.1754944e-38, %v1140
        %v1142 = vsel %vm1139, %v1141, %v1137
        %v1143 = vmul.f32 %v1061, %v1142
        %v1144 = vrcp.pop %v1080
        %v1145 = vmul.f32 %v1080, %v1144
        %v1146 = vsub.f32 1.0, %v1145
        %v1147 = vmul.f32 %v1144, %v1146
        %v1148 = vadd.f32 %v1144, %v1147
        %vm1149 = vweird.f32 %v1080
        %vm1150 = vweird.f32 %v1144
        %vm1151 = vmor %vm1149, %vm1150
        %v1152 = vsel %vm1151, %v1144, %v1148
        %v1153 = vand.u32 2147483647, %v1080
        %vm1154 = vcmp.eq.f32.partialorder %v1153, 8.507059e+37
        %v1155 = vand.u32 %v1080, 2147483648
        %v1156 = vor.u32 1.1754944e-38, %v1155
        %v1157 = vsel %vm1154, %v1156, %v1152
        %v1158 = vmul.f32 %v1063, %v1157
        %v1159 = vrcp.pop %v1083
        %v1160 = vmul.f32 %v1083, %v1159
        %v1161 = vsub.f32 1.0, %v1160
        %v1162 = vmul.f32 %v1159, %v1161
        %v1163 = vadd.f32 %v1159, %v1162
        %vm1164 = vweird.f32 %v1083
        %vm1165 = vweird.f32 %v1159
        %vm1166 = vmor %vm1164, %vm1165
        %v1167 = vsel %vm1166, %v1159, %v1163
        %v1168 = vand.u32 2147483647, %v1083
        %vm1169 = vcmp.eq.f32.partialorder %v1168, 8.507059e+37
        %v1170 = vand.u32 %v1083, 2147483648
        %v1171 = vor.u32 1.1754944e-38, %v1170
        %v1172 = vsel %vm1169, %v1171, %v1167
        %v1173 = vmul.f32 %v1065, %v1172
        %v1174 = vpack.c.bf16 %v1098, %v1098
        %v1175 = vpack.c.bf16 %v1113, %v1113
        %v1176 = vpack.c.bf16 %v1128, %v1128
        %v1177 = vpack.c.bf16 %v1143, %v1143
        %v1178 = vpack.c.bf16 %v1158, %v1158
        %v1179 = vpack.c.bf16 %v1173, %v1173
        %v1182 = vunpack.c.l.b16 %v1174
        %v1183 = vunpack.c.l.b16 %v1175
        %v1184 = vpack.c.b16 %v1183, %v1182
        %1185 = vrot.lane.b32.xlu0 %v942, 64
        %v1186 = vpop.permute.xlu0 %1185
        %v1189 = vsel %vm945, %v1184, 0
        %1191 = vmatpush.bf16.msra.mxu0 0
        %1192 = vmatpush.bf16.msra.mxu0 0
        %1193 = vmatpush.bf16.msra.mxu0 0
        %1194 = vmatpush.bf16.msra.mxu0 0
        %1195 = vmatpush.bf16.msra.mxu0 0
        %1196 = vmatpush.bf16.msra.mxu0 0
        %1197 = vmatpush.bf16.msra.mxu0 0
        %1198 = vmatpush.bf16.msra.mxu0 %v1186
        %1199 = vmatmul.bf16.gmra.mxu0 %v1189
        %v1200 = vpop.f32.mrf.mxu0
        %v1201 = vadd.f32 0.0, %v1200
        %v1202 = vpop.f32.mrf.mxu0
        %v1203 = vadd.f32 0.0, %v1202
        %1204 = vdwg.mxu0
        %v1207 = vunpack.c.l.b16 %v1176
        %v1208 = vunpack.c.l.b16 %v1177
        %v1209 = vpack.c.b16 %v1208, %v1207
        %1210 = vrot.lane.b32.xlu0 %v975, 64
        %v1211 = vpop.permute.xlu0 %1210
        %v1214 = vsel %vm945, %v1209, 0
        %1216 = vmatpush.bf16.msra.mxu0 0
        %1217 = vmatpush.bf16.msra.mxu0 0
        %1218 = vmatpush.bf16.msra.mxu0 0
        %1219 = vmatpush.bf16.msra.mxu0 0
        %1220 = vmatpush.bf16.msra.mxu0 0
        %1221 = vmatpush.bf16.msra.mxu0 0
        %1222 = vmatpush.bf16.msra.mxu0 0
        %1223 = vmatpush.bf16.msra.mxu0 %v1211
        %1224 = vmatmul.bf16.gmra.mxu0 %v1214
        %v1225 = vpop.f32.mrf.mxu0
        %v1226 = vadd.f32 0.0, %v1225
        %v1227 = vpop.f32.mrf.mxu0
        %v1228 = vadd.f32 0.0, %v1227
        %1229 = vdwg.mxu0
        %v1232 = vunpack.c.l.b16 %v1178
        %v1233 = vunpack.c.l.b16 %v1179
        %v1234 = vpack.c.b16 %v1233, %v1232
        %1235 = vrot.lane.b32.xlu0 %v1007, 64
        %v1236 = vpop.permute.xlu0 %1235
        %v1239 = vsel %vm945, %v1234, 0
        %1241 = vmatpush.bf16.msra.mxu0 0
        %1242 = vmatpush.bf16.msra.mxu0 0
        %1243 = vmatpush.bf16.msra.mxu0 0
        %1244 = vmatpush.bf16.msra.mxu0 0
        %1245 = vmatpush.bf16.msra.mxu0 0
        %1246 = vmatpush.bf16.msra.mxu0 0
        %1247 = vmatpush.bf16.msra.mxu0 0
        %1248 = vmatpush.bf16.msra.mxu0 %v1236
        %1249 = vmatmul.bf16.gmra.mxu0 %v1239
        %v1250 = vpop.f32.mrf.mxu0
        %v1251 = vadd.f32 0.0, %v1250
        %v1252 = vpop.f32.mrf.mxu0
        %v1253 = vadd.f32 0.0, %v1252
        %1254 = vdwg.mxu0
        %v1255 = vpack.c.bf16 %v1203, %v1201
        %v1256 = vpack.c.bf16 %v1228, %v1226
        %v1257 = vpack.c.bf16 %v1253, %v1251
        %1258 = vrot.lane.b32.xlu0 %v864, 32
        %v1259 = vpop.permute.xlu0 %1258
        %v1262 = vsel %vm945, %v1255, 0
        %v1265 = vsel %vm945, %v1256, 0
        %v1268 = vsel %vm945, %v1257, 0
        %1270 = vmatpush.bf16.msra.mxu0 0
        %1271 = vmatpush.bf16.msra.mxu0 0
        %1272 = vmatpush.bf16.msra.mxu0 0
        %1273 = vmatpush.bf16.msra.mxu0 0
        %1274 = vmatpush.bf16.msra.mxu0 0
        %1275 = vmatpush.bf16.msra.mxu0 0
        %1276 = vmatpush.bf16.msra.mxu0 0
        %1277 = vmatpush.bf16.msra.mxu0 %v1259
        %1278 = vmatmul.bf16.gmra.mxu0 %v1262
        %v1279 = vpop.f32.mrf.mxu0
        %v1280 = vadd.f32 0.0, %v1279
        %v1281 = vpop.f32.mrf.mxu0
        %v1282 = vadd.f32 0.0, %v1281
        %1283 = vmatmul.bf16.gmra.mxu0 %v1265
        %v1284 = vpop.f32.mrf.mxu0
        %v1285 = vadd.f32 0.0, %v1284
        %v1286 = vpop.f32.mrf.mxu0
        %v1287 = vadd.f32 0.0, %v1286
        %1288 = vmatmul.bf16.gmra.mxu0 %v1268
        %v1289 = vpop.f32.mrf.mxu0
        %v1290 = vadd.f32 0.0, %v1289
        %v1291 = vpop.f32.mrf.mxu0
        %v1292 = vadd.f32 0.0, %v1291
        %1293 = vdwg.mxu0
        %1294 = vrot.lane.b32.xlu0 %v937, 112
        %v1295 = vpop.permute.xlu0 %1294
        %1296 = vrot.lane.b32.xlu0 %v942, 80
        %v1297 = vpop.permute.xlu0 %1296
        %v1299 = vsel %vm945, %v1295, 0
        %v1302 = vsel %vm945, %v1297, 0
        %1304 = vmatpush.bf16.xpose.msra.mxu0 0
        %1305 = vmatpush.bf16.xpose.msra.mxu0 0
        %1306 = vmatpush.bf16.xpose.msra.mxu0 0
        %1307 = vmatpush.bf16.xpose.msra.mxu0 0
        %1308 = vmatpush.bf16.xpose.msra.mxu0 0
        %1309 = vmatpush.bf16.xpose.msra.mxu0 0
        %1310 = vmatpush.bf16.xpose.msra.mxu0 0
        %1311 = vmatpush.bf16.xpose.msra.mxu0 %v1302
        %1312 = vmatmul.bf16.gmra.mxu0 %v1299
        %v1313 = vpop.f32.mrf.mxu0
        %v1314 = vadd.f32 %v668, %v1313
        %v1315 = vpop.f32.mrf.mxu0
        %v1316 = vadd.f32 %v669, %v1315
        %1317 = vdwg.mxu0
        %1318 = vrot.lane.b32.xlu0 %v970, 112
        %v1319 = vpop.permute.xlu0 %1318
        %1320 = vrot.lane.b32.xlu0 %v975, 80
        %v1321 = vpop.permute.xlu0 %1320
        %v1323 = vsel %vm945, %v1319, 0
        %v1326 = vsel %vm945, %v1321, 0
        %1328 = vmatpush.bf16.xpose.msra.mxu0 0
        %1329 = vmatpush.bf16.xpose.msra.mxu0 0
        %1330 = vmatpush.bf16.xpose.msra.mxu0 0
        %1331 = vmatpush.bf16.xpose.msra.mxu0 0
        %1332 = vmatpush.bf16.xpose.msra.mxu0 0
        %1333 = vmatpush.bf16.xpose.msra.mxu0 0
        %1334 = vmatpush.bf16.xpose.msra.mxu0 0
        %1335 = vmatpush.bf16.xpose.msra.mxu0 %v1326
        %1336 = vmatmul.bf16.gmra.mxu0 %v1323
        %v1337 = vpop.f32.mrf.mxu0
        %v1338 = vadd.f32 %v668, %v1337
        %v1339 = vpop.f32.mrf.mxu0
        %v1340 = vadd.f32 %v669, %v1339
        %1341 = vdwg.mxu0
        %1342 = vrot.lane.b32.xlu0 %v1002, 112
        %v1343 = vpop.permute.xlu0 %1342
        %1344 = vrot.lane.b32.xlu0 %v1007, 80
        %v1345 = vpop.permute.xlu0 %1344
        %v1347 = vsel %vm945, %v1343, 0
        %v1350 = vsel %vm945, %v1345, 0
        %1352 = vmatpush.bf16.xpose.msra.mxu0 0
        %1353 = vmatpush.bf16.xpose.msra.mxu0 0
        %1354 = vmatpush.bf16.xpose.msra.mxu0 0
        %1355 = vmatpush.bf16.xpose.msra.mxu0 0
        %1356 = vmatpush.bf16.xpose.msra.mxu0 0
        %1357 = vmatpush.bf16.xpose.msra.mxu0 0
        %1358 = vmatpush.bf16.xpose.msra.mxu0 0
        %1359 = vmatpush.bf16.xpose.msra.mxu0 %v1350
        %1360 = vmatmul.bf16.gmra.mxu0 %v1347
        %v1361 = vpop.f32.mrf.mxu0
        %v1362 = vadd.f32 %v668, %v1361
        %v1363 = vpop.f32.mrf.mxu0
        %v1364 = vadd.f32 %v669, %v1363
        %1365 = vdwg.mxu0
        %v1366 = vsel %vm945, %v1314, -inf
        %1367 = vmax.xlane.f32.xlu0 %v1366
        %v1368 = vpop.xlane.xlu0 %1367
        %v1369 = vsel %vm945, %v1316, -inf
        %1370 = vmax.xlane.f32.xlu0 %v1369
        %v1371 = vpop.xlane.xlu0 %1370
        %v1372 = vsel %vm945, %v1338, -inf
        %1373 = vmax.xlane.f32.xlu0 %v1372
        %v1374 = vpop.xlane.xlu0 %1373
        %v1375 = vsel %vm945, %v1340, -inf
        %1376 = vmax.xlane.f32.xlu0 %v1375
        %v1377 = vpop.xlane.xlu0 %1376
        %v1378 = vsel %vm945, %v1362, -inf
        %1379 = vmax.xlane.f32.xlu0 %v1378
        %v1380 = vpop.xlane.xlu0 %1379
        %v1381 = vsel %vm945, %v1364, -inf
        %1382 = vmax.xlane.f32.xlu0 %v1381
        %v1383 = vpop.xlane.xlu0 %1382
        %v1384 = vsub.f32 %v1314, %v1368
        %v1385 = vsub.f32 %v1316, %v1371
        %v1386 = vsub.f32 %v1338, %v1374
        %v1387 = vsub.f32 %v1340, %v1377
        %v1388 = vsub.f32 %v1362, %v1380
        %v1389 = vsub.f32 %v1364, %v1383
        %v1390 = vmul.f32 %v1384, 1.442695
        %v1391 = vpow.pop %v1390
        %v1392 = vmul.f32 %v1385, 1.442695
        %v1393 = vpow.pop %v1392
        %v1394 = vmul.f32 %v1386, 1.442695
        %v1395 = vpow.pop %v1394
        %v1396 = vmul.f32 %v1387, 1.442695
        %v1397 = vpow.pop %v1396
        %v1398 = vmul.f32 %v1388, 1.442695
        %v1399 = vpow.pop %v1398
        %v1400 = vmul.f32 %v1389, 1.442695
        %v1401 = vpow.pop %v1400
        %v1402 = vsel %vm945, %v1391, 0.0
        %1403 = vadd.xlane.f32.xlu0 %v1402
        %v1404 = vpop.xlane.xlu0 %1403
        %v1405 = vsel %vm945, %v1393, 0.0
        %1406 = vadd.xlane.f32.xlu0 %v1405
        %v1407 = vpop.xlane.xlu0 %1406
        %v1408 = vsel %vm945, %v1395, 0.0
        %1409 = vadd.xlane.f32.xlu0 %v1408
        %v1410 = vpop.xlane.xlu0 %1409
        %v1411 = vsel %vm945, %v1397, 0.0
        %1412 = vadd.xlane.f32.xlu0 %v1411
        %v1413 = vpop.xlane.xlu0 %1412
        %v1414 = vsel %vm945, %v1399, 0.0
        %1415 = vadd.xlane.f32.xlu0 %v1414
        %v1416 = vpop.xlane.xlu0 %1415
        %v1417 = vsel %vm945, %v1401, 0.0
        %1418 = vadd.xlane.f32.xlu0 %v1417
        %v1419 = vpop.xlane.xlu0 %1418
        %v1420 = vrcp.pop %v1404
        %v1421 = vmul.f32 %v1404, %v1420
        %v1422 = vsub.f32 1.0, %v1421
        %v1423 = vmul.f32 %v1420, %v1422
        %v1424 = vadd.f32 %v1420, %v1423
        %vm1425 = vweird.f32 %v1404
        %vm1426 = vweird.f32 %v1420
        %vm1427 = vmor %vm1425, %vm1426
        %v1428 = vsel %vm1427, %v1420, %v1424
        %v1429 = vand.u32 2147483647, %v1404
        %vm1430 = vcmp.eq.f32.partialorder %v1429, 8.507059e+37
        %v1431 = vand.u32 %v1404, 2147483648
        %v1432 = vor.u32 1.1754944e-38, %v1431
        %v1433 = vsel %vm1430, %v1432, %v1428
        %v1434 = vmul.f32 %v1391, %v1433
        %v1435 = vrcp.pop %v1407
        %v1436 = vmul.f32 %v1407, %v1435
        %v1437 = vsub.f32 1.0, %v1436
        %v1438 = vmul.f32 %v1435, %v1437
        %v1439 = vadd.f32 %v1435, %v1438
        %vm1440 = vweird.f32 %v1407
        %vm1441 = vweird.f32 %v1435
        %vm1442 = vmor %vm1440, %vm1441
        %v1443 = vsel %vm1442, %v1435, %v1439
        %v1444 = vand.u32 2147483647, %v1407
        %vm1445 = vcmp.eq.f32.partialorder %v1444, 8.507059e+37
        %v1446 = vand.u32 %v1407, 2147483648
        %v1447 = vor.u32 1.1754944e-38, %v1446
        %v1448 = vsel %vm1445, %v1447, %v1443
        %v1449 = vmul.f32 %v1393, %v1448
        %v1450 = vrcp.pop %v1410
        %v1451 = vmul.f32 %v1410, %v1450
        %v1452 = vsub.f32 1.0, %v1451
        %v1453 = vmul.f32 %v1450, %v1452
        %v1454 = vadd.f32 %v1450, %v1453
        %vm1455 = vweird.f32 %v1410
        %vm1456 = vweird.f32 %v1450
        %vm1457 = vmor %vm1455, %vm1456
        %v1458 = vsel %vm1457, %v1450, %v1454
        %v1459 = vand.u32 2147483647, %v1410
        %vm1460 = vcmp.eq.f32.partialorder %v1459, 8.507059e+37
        %v1461 = vand.u32 %v1410, 2147483648
        %v1462 = vor.u32 1.1754944e-38, %v1461
        %v1463 = vsel %vm1460, %v1462, %v1458
        %v1464 = vmul.f32 %v1395, %v1463
        %v1465 = vrcp.pop %v1413
        %v1466 = vmul.f32 %v1413, %v1465
        %v1467 = vsub.f32 1.0, %v1466
        %v1468 = vmul.f32 %v1465, %v1467
        %v1469 = vadd.f32 %v1465, %v1468
        %vm1470 = vweird.f32 %v1413
        %vm1471 = vweird.f32 %v1465
        %vm1472 = vmor %vm1470, %vm1471
        %v1473 = vsel %vm1472, %v1465, %v1469
        %v1474 = vand.u32 2147483647, %v1413
        %vm1475 = vcmp.eq.f32.partialorder %v1474, 8.507059e+37
        %v1476 = vand.u32 %v1413, 2147483648
        %v1477 = vor.u32 1.1754944e-38, %v1476
        %v1478 = vsel %vm1475, %v1477, %v1473
        %v1479 = vmul.f32 %v1397, %v1478
        %v1480 = vrcp.pop %v1416
        %v1481 = vmul.f32 %v1416, %v1480
        %v1482 = vsub.f32 1.0, %v1481
        %v1483 = vmul.f32 %v1480, %v1482
        %v1484 = vadd.f32 %v1480, %v1483
        %vm1485 = vweird.f32 %v1416
        %vm1486 = vweird.f32 %v1480
        %vm1487 = vmor %vm1485, %vm1486
        %v1488 = vsel %vm1487, %v1480, %v1484
        %v1489 = vand.u32 2147483647, %v1416
        %vm1490 = vcmp.eq.f32.partialorder %v1489, 8.507059e+37
        %v1491 = vand.u32 %v1416, 2147483648
        %v1492 = vor.u32 1.1754944e-38, %v1491
        %v1493 = vsel %vm1490, %v1492, %v1488
        %v1494 = vmul.f32 %v1399, %v1493
        %v1495 = vrcp.pop %v1419
        %v1496 = vmul.f32 %v1419, %v1495
        %v1497 = vsub.f32 1.0, %v1496
        %v1498 = vmul.f32 %v1495, %v1497
        %v1499 = vadd.f32 %v1495, %v1498
        %vm1500 = vweird.f32 %v1419
        %vm1501 = vweird.f32 %v1495
        %vm1502 = vmor %vm1500, %vm1501
        %v1503 = vsel %vm1502, %v1495, %v1499
        %v1504 = vand.u32 2147483647, %v1419
        %vm1505 = vcmp.eq.f32.partialorder %v1504, 8.507059e+37
        %v1506 = vand.u32 %v1419, 2147483648
        %v1507 = vor.u32 1.1754944e-38, %v1506
        %v1508 = vsel %vm1505, %v1507, %v1503
        %v1509 = vmul.f32 %v1401, %v1508
        %v1510 = vpack.c.bf16 %v1434, %v1434
        %v1511 = vpack.c.bf16 %v1449, %v1449
        %v1512 = vpack.c.bf16 %v1464, %v1464
        %v1513 = vpack.c.bf16 %v1479, %v1479
        %v1514 = vpack.c.bf16 %v1494, %v1494
        %v1515 = vpack.c.bf16 %v1509, %v1509
        %v1518 = vunpack.c.l.b16 %v1510
        %v1519 = vunpack.c.l.b16 %v1511
        %v1520 = vpack.c.b16 %v1519, %v1518
        %1521 = vrot.lane.b32.xlu0 %v942, 48
        %v1522 = vpop.permute.xlu0 %1521
        %v1525 = vsel %vm945, %v1520, 0
        %1527 = vmatpush.bf16.msra.mxu0 0
        %1528 = vmatpush.bf16.msra.mxu0 0
        %1529 = vmatpush.bf16.msra.mxu0 0
        %1530 = vmatpush.bf16.msra.mxu0 0
        %1531 = vmatpush.bf16.msra.mxu0 0
        %1532 = vmatpush.bf16.msra.mxu0 0
        %1533 = vmatpush.bf16.msra.mxu0 0
        %1534 = vmatpush.bf16.msra.mxu0 %v1522
        %1535 = vmatmul.bf16.gmra.mxu0 %v1525
        %v1536 = vpop.f32.mrf.mxu0
        %v1537 = vadd.f32 0.0, %v1536
        %v1538 = vpop.f32.mrf.mxu0
        %v1539 = vadd.f32 0.0, %v1538
        %1540 = vdwg.mxu0
        %v1543 = vunpack.c.l.b16 %v1512
        %v1544 = vunpack.c.l.b16 %v1513
        %v1545 = vpack.c.b16 %v1544, %v1543
        %1546 = vrot.lane.b32.xlu0 %v975, 48
        %v1547 = vpop.permute.xlu0 %1546
        %v1550 = vsel %vm945, %v1545, 0
        %1552 = vmatpush.bf16.msra.mxu0 0
        %1553 = vmatpush.bf16.msra.mxu0 0
        %1554 = vmatpush.bf16.msra.mxu0 0
        %1555 = vmatpush.bf16.msra.mxu0 0
        %1556 = vmatpush.bf16.msra.mxu0 0
        %1557 = vmatpush.bf16.msra.mxu0 0
        %1558 = vmatpush.bf16.msra.mxu0 0
        %1559 = vmatpush.bf16.msra.mxu0 %v1547
        %1560 = vmatmul.bf16.gmra.mxu0 %v1550
        %v1561 = vpop.f32.mrf.mxu0
        %v1562 = vadd.f32 0.0, %v1561
        %v1563 = vpop.f32.mrf.mxu0
        %v1564 = vadd.f32 0.0, %v1563
        %1565 = vdwg.mxu0
        %v1568 = vunpack.c.l.b16 %v1514
        %v1569 = vunpack.c.l.b16 %v1515
        %v1570 = vpack.c.b16 %v1569, %v1568
        %1571 = vrot.lane.b32.xlu0 %v1007, 48
        %v1572 = vpop.permute.xlu0 %1571
        %v1575 = vsel %vm945, %v1570, 0
        %1577 = vmatpush.bf16.msra.mxu0 0
        %1578 = vmatpush.bf16.msra.mxu0 0
        %1579 = vmatpush.bf16.msra.mxu0 0
        %1580 = vmatpush.bf16.msra.mxu0 0
        %1581 = vmatpush.bf16.msra.mxu0 0
        %1582 = vmatpush.bf16.msra.mxu0 0
        %1583 = vmatpush.bf16.msra.mxu0 0
        %1584 = vmatpush.bf16.msra.mxu0 %v1572
        %1585 = vmatmul.bf16.gmra.mxu0 %v1575
        %v1586 = vpop.f32.mrf.mxu0
        %v1587 = vadd.f32 0.0, %v1586
        %v1588 = vpop.f32.mrf.mxu0
        %v1589 = vadd.f32 0.0, %v1588
        %1590 = vdwg.mxu0
        %v1591 = vpack.c.bf16 %v1539, %v1537
        %v1592 = vpack.c.bf16 %v1564, %v1562
        %v1593 = vpack.c.bf16 %v1589, %v1587
        %1594 = vrot.lane.b32.xlu0 %v865, 32
        %v1595 = vpop.permute.xlu0 %1594
        %v1598 = vsel %vm945, %v1591, 0
        %v1601 = vsel %vm945, %v1592, 0
        %v1604 = vsel %vm945, %v1593, 0
        %1606 = vmatpush.bf16.msra.mxu0 0
        %1607 = vmatpush.bf16.msra.mxu0 0
        %1608 = vmatpush.bf16.msra.mxu0 0
        %1609 = vmatpush.bf16.msra.mxu0 0
        %1610 = vmatpush.bf16.msra.mxu0 0
        %1611 = vmatpush.bf16.msra.mxu0 0
        %1612 = vmatpush.bf16.msra.mxu0 0
        %1613 = vmatpush.bf16.msra.mxu0 %v1595
        %1614 = vmatmul.bf16.gmra.mxu0 %v1598
        %v1615 = vpop.f32.mrf.mxu0
        %v1616 = vadd.f32 0.0, %v1615
        %v1617 = vpop.f32.mrf.mxu0
        %v1618 = vadd.f32 0.0, %v1617
        %1619 = vmatmul.bf16.gmra.mxu0 %v1601
        %v1620 = vpop.f32.mrf.mxu0
        %v1621 = vadd.f32 0.0, %v1620
        %v1622 = vpop.f32.mrf.mxu0
        %v1623 = vadd.f32 0.0, %v1622
        %1624 = vmatmul.bf16.gmra.mxu0 %v1604
        %v1625 = vpop.f32.mrf.mxu0
        %v1626 = vadd.f32 0.0, %v1625
        %v1627 = vpop.f32.mrf.mxu0
        %v1628 = vadd.f32 0.0, %v1627
        %1629 = vdwg.mxu0
        %v1630 = vadd.f32 %v1280, %v1616
        %v1631 = vadd.f32 %v1282, %v1618
        %v1632 = vadd.f32 %v1285, %v1621
        %v1633 = vadd.f32 %v1287, %v1623
        %v1634 = vadd.f32 %v1290, %v1626
        %v1635 = vadd.f32 %v1292, %v1628
        %1636 = vrot.lane.b32.xlu0 %v670, 96
        %v1637 = vpop.permute.xlu0 %1636
        %v1638 = vrot.slane %v1637, 1
        %v1639 = vperm.slane %v1638, 0
        %v1641 = vadd.f32 %v1630, %v1639
        %v1642 = vadd.f32 %v1631, %v1639
        %v1643 = vadd.f32 %v1632, %v1639
        %v1644 = vadd.f32 %v1633, %v1639
        %v1645 = vadd.f32 %v1634, %v1639
        %v1646 = vadd.f32 %v1635, %v1639
        %v1647 = vadd.f32 %v662, %v1641
        %v1648 = vadd.f32 %v663, %v1642
        %v1649 = vadd.f32 %v664, %v1643
        %v1650 = vadd.f32 %v665, %v1644
        %v1651 = vadd.f32 %v666, %v1645
        %v1652 = vadd.f32 %v667, %v1646
        %v1653 = vsel %vm695, %v1647, 0.0
        %1654 = vadd.xlane.f32.xlu0 %v1653
        %v1655 = vpop.xlane.xlu0 %1654
        %v1656 = vsel %vm695, %v1648, 0.0
        %1657 = vadd.xlane.f32.xlu0 %v1656
        %v1658 = vpop.xlane.xlu0 %1657
        %v1659 = vsel %vm695, %v1649, 0.0
        %1660 = vadd.xlane.f32.xlu0 %v1659
        %v1661 = vpop.xlane.xlu0 %1660
        %v1662 = vsel %vm695, %v1650, 0.0
        %1663 = vadd.xlane.f32.xlu0 %v1662
        %v1664 = vpop.xlane.xlu0 %1663
        %v1665 = vsel %vm695, %v1651, 0.0
        %1666 = vadd.xlane.f32.xlu0 %v1665
        %v1667 = vpop.xlane.xlu0 %1666
        %v1668 = vsel %vm695, %v1652, 0.0
        %1669 = vadd.xlane.f32.xlu0 %v1668
        %v1670 = vpop.xlane.xlu0 %1669
        %v1671 = vmul.f32 %v1655, %v720
        %v1672 = vmul.f32 %v1658, %v720
        %v1673 = vmul.f32 %v1661, %v720
        %v1674 = vmul.f32 %v1664, %v720
        %v1675 = vmul.f32 %v1667, %v720
        %v1676 = vmul.f32 %v1670, %v720
        %v1677 = vsub.f32 %v1647, %v1671
        %v1678 = vsub.f32 %v1648, %v1672
        %v1679 = vsub.f32 %v1649, %v1673
        %v1680 = vsub.f32 %v1650, %v1674
        %v1681 = vsub.f32 %v1651, %v1675
        %v1682 = vsub.f32 %v1652, %v1676
        %v1683 = vmul.f32 %v1677, %v1677
        %v1684 = vmul.f32 %v1678, %v1678
        %v1685 = vmul.f32 %v1679, %v1679
        %v1686 = vmul.f32 %v1680, %v1680
        %v1687 = vmul.f32 %v1681, %v1681
        %v1688 = vmul.f32 %v1682, %v1682
        %v1689 = vsel %vm695, %v1683, 0.0
        %1690 = vadd.xlane.f32.xlu0 %v1689
        %v1691 = vpop.xlane.xlu0 %1690
        %v1692 = vsel %vm695, %v1684, 0.0
        %1693 = vadd.xlane.f32.xlu0 %v1692
        %v1694 = vpop.xlane.xlu0 %1693
        %v1695 = vsel %vm695, %v1685, 0.0
        %1696 = vadd.xlane.f32.xlu0 %v1695
        %v1697 = vpop.xlane.xlu0 %1696
        %v1698 = vsel %vm695, %v1686, 0.0
        %1699 = vadd.xlane.f32.xlu0 %v1698
        %v1700 = vpop.xlane.xlu0 %1699
        %v1701 = vsel %vm695, %v1687, 0.0
        %1702 = vadd.xlane.f32.xlu0 %v1701
        %v1703 = vpop.xlane.xlu0 %1702
        %v1704 = vsel %vm695, %v1688, 0.0
        %1705 = vadd.xlane.f32.xlu0 %v1704
        %v1706 = vpop.xlane.xlu0 %1705
        %v1707 = vmul.f32 %v1691, %v720
        %v1708 = vmul.f32 %v1694, %v720
        %v1709 = vmul.f32 %v1697, %v720
        %v1710 = vmul.f32 %v1700, %v720
        %v1711 = vmul.f32 %v1703, %v720
        %v1712 = vmul.f32 %v1706, %v720
        %v1713 = vadd.f32 %v1707, 1e-05
        %v1714 = vadd.f32 %v1708, 1e-05
        %v1715 = vadd.f32 %v1709, 1e-05
        %v1716 = vadd.f32 %v1710, 1e-05
        %v1717 = vadd.f32 %v1711, 1e-05
        %v1718 = vadd.f32 %v1712, 1e-05
        %v1719 = vrsqrt.pop %v1713
        %v1720 = vmul.f32 %v1719, %v1713
        %v1721 = vmul.f32 %v1720, %v1719
        %v1722 = vmul.f32 0.5, %v1721
        %v1723 = vsub.f32 1.5, %v1722
        %v1724 = vmul.f32 %v1719, %v1723
        %vm1725 = vweird.f32 %v1713
        %vm1726 = vweird.f32 %v1719
        %vm1727 = vmor %vm1725, %vm1726
        %v1728 = vsel %vm1727, %v1719, %v1724
        %v1729 = vrsqrt.pop %v1714
        %v1730 = vmul.f32 %v1729, %v1714
        %v1731 = vmul.f32 %v1730, %v1729
        %v1732 = vmul.f32 0.5, %v1731
        %v1733 = vsub.f32 1.5, %v1732
        %v1734 = vmul.f32 %v1729, %v1733
        %vm1735 = vweird.f32 %v1714
        %vm1736 = vweird.f32 %v1729
        %vm1737 = vmor %vm1735, %vm1736
        %v1738 = vsel %vm1737, %v1729, %v1734
        %v1739 = vrsqrt.pop %v1715
        %v1740 = vmul.f32 %v1739, %v1715
        %v1741 = vmul.f32 %v1740, %v1739
        %v1742 = vmul.f32 0.5, %v1741
        %v1743 = vsub.f32 1.5, %v1742
        %v1744 = vmul.f32 %v1739, %v1743
        %vm1745 = vweird.f32 %v1715
        %vm1746 = vweird.f32 %v1739
        %vm1747 = vmor %vm1745, %vm1746
        %v1748 = vsel %vm1747, %v1739, %v1744
        %v1749 = vrsqrt.pop %v1716
        %v1750 = vmul.f32 %v1749, %v1716
        %v1751 = vmul.f32 %v1750, %v1749
        %v1752 = vmul.f32 0.5, %v1751
        %v1753 = vsub.f32 1.5, %v1752
        %v1754 = vmul.f32 %v1749, %v1753
        %vm1755 = vweird.f32 %v1716
        %vm1756 = vweird.f32 %v1749
        %vm1757 = vmor %vm1755, %vm1756
        %v1758 = vsel %vm1757, %v1749, %v1754
        %v1759 = vrsqrt.pop %v1717
        %v1760 = vmul.f32 %v1759, %v1717
        %v1761 = vmul.f32 %v1760, %v1759
        %v1762 = vmul.f32 0.5, %v1761
        %v1763 = vsub.f32 1.5, %v1762
        %v1764 = vmul.f32 %v1759, %v1763
        %vm1765 = vweird.f32 %v1717
        %vm1766 = vweird.f32 %v1759
        %vm1767 = vmor %vm1765, %vm1766
        %v1768 = vsel %vm1767, %v1759, %v1764
        %v1769 = vrsqrt.pop %v1718
        %v1770 = vmul.f32 %v1769, %v1718
        %v1771 = vmul.f32 %v1770, %v1769
        %v1772 = vmul.f32 0.5, %v1771
        %v1773 = vsub.f32 1.5, %v1772
        %v1774 = vmul.f32 %v1769, %v1773
        %vm1775 = vweird.f32 %v1718
        %vm1776 = vweird.f32 %v1769
        %vm1777 = vmor %vm1775, %vm1776
        %v1778 = vsel %vm1777, %v1769, %v1774
        %v1779 = vmul.f32 %v1677, %v1728
        %v1780 = vmul.f32 %v1678, %v1738
        %v1781 = vmul.f32 %v1679, %v1748
        %v1782 = vmul.f32 %v1680, %v1758
        %v1783 = vmul.f32 %v1681, %v1768
        %v1784 = vmul.f32 %v1682, %v1778
        %1785 = vrot.lane.b32.xlu0 %v670, 64
        %v1786 = vpop.permute.xlu0 %1785
        %v1787 = vrot.slane %v1786, 1
        %v1788 = vperm.slane %v1787, 0
        %v1790 = vmul.f32 %v1779, %v1788
        %v1791 = vmul.f32 %v1780, %v1788
        %v1792 = vmul.f32 %v1781, %v1788
        %v1793 = vmul.f32 %v1782, %v1788
        %v1794 = vmul.f32 %v1783, %v1788
        %v1795 = vmul.f32 %v1784, %v1788
        %1796 = vrot.lane.b32.xlu0 %v670, 32
        %v1797 = vpop.permute.xlu0 %1796
        %v1798 = vrot.slane %v1797, 1
        %v1799 = vperm.slane %v1798, 0
        %v1801 = vadd.f32 %v1790, %v1799
        %v1802 = vadd.f32 %v1791, %v1799
        %v1803 = vadd.f32 %v1792, %v1799
        %v1804 = vadd.f32 %v1793, %v1799
        %v1805 = vadd.f32 %v1794, %v1799
        %v1806 = vadd.f32 %v1795, %v1799
        %v1807 = vpack.c.bf16 %v1802, %v1801
        %v1808 = vpack.c.bf16 %v1804, %v1803
        %v1809 = vpack.c.bf16 %v1806, %v1805
        %v1814 = vunpack.c.l.b16 %v675
        %v1815 = vunpack.c.l.b16 %v676
        %v1816 = vunpack.c.l.b16 %v677
        %v1817 = vunpack.c.l.b16 %v678
        %v1818 = vpack.c.b16 %v1815, %v1814
        %v1819 = vpack.c.b16 %v1817, %v1816
        %v1823 = vsel %vm695, %v1807, 0
        %v1826 = vsel %vm695, %v1808, 0
        %v1829 = vsel %vm695, %v1809, 0
        %1831 = vmatpush.bf16.msra.mxu0 0
        %1832 = vmatpush.bf16.msra.mxu0 0
        %1833 = vmatpush.bf16.msra.mxu0 0
        %1834 = vmatpush.bf16.msra.mxu0 0
        %1835 = vmatpush.bf16.msra.mxu0 0
        %1836 = vmatpush.bf16.msra.mxu0 0
        %1837 = vmatpush.bf16.msra.mxu0 %v1819
        %1838 = vmatpush.bf16.msra.mxu0 %v1818
        %1839 = vmatmul.bf16.gmra.mxu0 %v1823
        %v1840 = vpop.f32.mrf.mxu0
        %v1841 = vadd.f32 0.0, %v1840
        %v1842 = vpop.f32.mrf.mxu0
        %v1843 = vadd.f32 0.0, %v1842
        %1844 = vmatmul.bf16.gmra.mxu0 %v1826
        %v1845 = vpop.f32.mrf.mxu0
        %v1846 = vadd.f32 0.0, %v1845
        %v1847 = vpop.f32.mrf.mxu0
        %v1848 = vadd.f32 0.0, %v1847
        %1849 = vmatmul.bf16.gmra.mxu0 %v1829
        %v1850 = vpop.f32.mrf.mxu0
        %v1851 = vadd.f32 0.0, %v1850
        %v1852 = vpop.f32.mrf.mxu0
        %v1853 = vadd.f32 0.0, %v1852
        %1854 = vdwg.mxu0
        %v1855 = vrot.slane %v670, 2
        %v1856 = vperm.slane %v1855, 0
        %v1858 = vadd.f32 %v1841, %v1856
        %v1859 = vadd.f32 %v1843, %v1856
        %v1860 = vadd.f32 %v1846, %v1856
        %v1861 = vadd.f32 %v1848, %v1856
        %v1862 = vadd.f32 %v1851, %v1856
        %v1863 = vadd.f32 %v1853, %v1856
        %v1864 = vmul.f32 %v1858, 1.702
        %v1865 = vmul.f32 %v1859, 1.702
        %v1866 = vmul.f32 %v1860, 1.702
        %v1867 = vmul.f32 %v1861, 1.702
        %v1868 = vmul.f32 %v1862, 1.702
        %v1869 = vmul.f32 %v1863, 1.702
        %v1870 = vxor.u32 %v1864, 2147483648
        %v1871 = vxor.u32 %v1865, 2147483648
        %v1872 = vxor.u32 %v1866, 2147483648
        %v1873 = vxor.u32 %v1867, 2147483648
        %v1874 = vxor.u32 %v1868, 2147483648
        %v1875 = vxor.u32 %v1869, 2147483648
        %v1876 = vmul.f32 %v1870, 1.442695
        %v1877 = vpow.pop %v1876
        %v1878 = vmul.f32 %v1871, 1.442695
        %v1879 = vpow.pop %v1878
        %v1880 = vmul.f32 %v1872, 1.442695
        %v1881 = vpow.pop %v1880
        %v1882 = vmul.f32 %v1873, 1.442695
        %v1883 = vpow.pop %v1882
        %v1884 = vmul.f32 %v1874, 1.442695
        %v1885 = vpow.pop %v1884
        %v1886 = vmul.f32 %v1875, 1.442695
        %v1887 = vpow.pop %v1886
        %v1888 = vadd.f32 %v1877, 1.0
        %v1889 = vadd.f32 %v1879, 1.0
        %v1890 = vadd.f32 %v1881, 1.0
        %v1891 = vadd.f32 %v1883, 1.0
        %v1892 = vadd.f32 %v1885, 1.0
        %v1893 = vadd.f32 %v1887, 1.0
        %v1894 = vrcp.pop %v1888
        %v1895 = vmul.f32 %v1888, %v1894
        %v1896 = vsub.f32 1.0, %v1895
        %v1897 = vmul.f32 %v1894, %v1896
        %v1898 = vadd.f32 %v1894, %v1897
        %vm1899 = vweird.f32 %v1888
        %vm1900 = vweird.f32 %v1894
        %vm1901 = vmor %vm1899, %vm1900
        %v1902 = vsel %vm1901, %v1894, %v1898
        %v1903 = vand.u32 2147483647, %v1888
        %vm1904 = vcmp.eq.f32.partialorder %v1903, 8.507059e+37
        %v1905 = vand.u32 %v1888, 2147483648
        %v1906 = vor.u32 1.1754944e-38, %v1905
        %v1907 = vsel %vm1904, %v1906, %v1902
        %v1908 = vmul.f32 1.0, %v1907
        %v1909 = vrcp.pop %v1889
        %v1910 = vmul.f32 %v1889, %v1909
        %v1911 = vsub.f32 1.0, %v1910
        %v1912 = vmul.f32 %v1909, %v1911
        %v1913 = vadd.f32 %v1909, %v1912
        %vm1914 = vweird.f32 %v1889
        %vm1915 = vweird.f32 %v1909
        %vm1916 = vmor %vm1914, %vm1915
        %v1917 = vsel %vm1916, %v1909, %v1913
        %v1918 = vand.u32 2147483647, %v1889
        %vm1919 = vcmp.eq.f32.partialorder %v1918, 8.507059e+37
        %v1920 = vand.u32 %v1889, 2147483648
        %v1921 = vor.u32 1.1754944e-38, %v1920
        %v1922 = vsel %vm1919, %v1921, %v1917
        %v1923 = vmul.f32 1.0, %v1922
        %v1924 = vrcp.pop %v1890
        %v1925 = vmul.f32 %v1890, %v1924
        %v1926 = vsub.f32 1.0, %v1925
        %v1927 = vmul.f32 %v1924, %v1926
        %v1928 = vadd.f32 %v1924, %v1927
        %vm1929 = vweird.f32 %v1890
        %vm1930 = vweird.f32 %v1924
        %vm1931 = vmor %vm1929, %vm1930
        %v1932 = vsel %vm1931, %v1924, %v1928
        %v1933 = vand.u32 2147483647, %v1890
        %vm1934 = vcmp.eq.f32.partialorder %v1933, 8.507059e+37
        %v1935 = vand.u32 %v1890, 2147483648
        %v1936 = vor.u32 1.1754944e-38, %v1935
        %v1937 = vsel %vm1934, %v1936, %v1932
        %v1938 = vmul.f32 1.0, %v1937
        %v1939 = vrcp.pop %v1891
        %v1940 = vmul.f32 %v1891, %v1939
        %v1941 = vsub.f32 1.0, %v1940
        %v1942 = vmul.f32 %v1939, %v1941
        %v1943 = vadd.f32 %v1939, %v1942
        %vm1944 = vweird.f32 %v1891
        %vm1945 = vweird.f32 %v1939
        %vm1946 = vmor %vm1944, %vm1945
        %v1947 = vsel %vm1946, %v1939, %v1943
        %v1948 = vand.u32 2147483647, %v1891
        %vm1949 = vcmp.eq.f32.partialorder %v1948, 8.507059e+37
        %v1950 = vand.u32 %v1891, 2147483648
        %v1951 = vor.u32 1.1754944e-38, %v1950
        %v1952 = vsel %vm1949, %v1951, %v1947
        %v1953 = vmul.f32 1.0, %v1952
        %v1954 = vrcp.pop %v1892
        %v1955 = vmul.f32 %v1892, %v1954
        %v1956 = vsub.f32 1.0, %v1955
        %v1957 = vmul.f32 %v1954, %v1956
        %v1958 = vadd.f32 %v1954, %v1957
        %vm1959 = vweird.f32 %v1892
        %vm1960 = vweird.f32 %v1954
        %vm1961 = vmor %vm1959, %vm1960
        %v1962 = vsel %vm1961, %v1954, %v1958
        %v1963 = vand.u32 2147483647, %v1892
        %vm1964 = vcmp.eq.f32.partialorder %v1963, 8.507059e+37
        %v1965 = vand.u32 %v1892, 2147483648
        %v1966 = vor.u32 1.1754944e-38, %v1965
        %v1967 = vsel %vm1964, %v1966, %v1962
        %v1968 = vmul.f32 1.0, %v1967
        %v1969 = vrcp.pop %v1893
        %v1970 = vmul.f32 %v1893, %v1969
        %v1971 = vsub.f32 1.0, %v1970
        %v1972 = vmul.f32 %v1969, %v1971
        %v1973 = vadd.f32 %v1969, %v1972
        %vm1974 = vweird.f32 %v1893
        %vm1975 = vweird.f32 %v1969
        %vm1976 = vmor %vm1974, %vm1975
        %v1977 = vsel %vm1976, %v1969, %v1973
        %v1978 = vand.u32 2147483647, %v1893
        %vm1979 = vcmp.eq.f32.partialorder %v1978, 8.507059e+37
        %v1980 = vand.u32 %v1893, 2147483648
        %v1981 = vor.u32 1.1754944e-38, %v1980
        %v1982 = vsel %vm1979, %v1981, %v1977
        %v1983 = vmul.f32 1.0, %v1982
        %v1984 = vmul.f32 %v1858, %v1908
        %v1985 = vmul.f32 %v1859, %v1923
        %v1986 = vmul.f32 %v1860, %v1938
        %v1987 = vmul.f32 %v1861, %v1953
        %v1988 = vmul.f32 %v1862, %v1968
        %v1989 = vmul.f32 %v1863, %v1983
        %v1990 = vpack.c.bf16 %v1985, %v1984
        %v1991 = vpack.c.bf16 %v1987, %v1986
        %v1992 = vpack.c.bf16 %v1989, %v1988
        %v2009 = vunpack.c.l.b16 %v679
        %v2010 = vunpack.c.l.b16 %v680
        %v2011 = vunpack.c.l.b16 %v681
        %v2012 = vunpack.c.l.b16 %v682
        %v2013 = vunpack.c.l.b16 %v683
        %v2014 = vunpack.c.l.b16 %v684
        %v2015 = vunpack.c.l.b16 %v685
        %v2016 = vunpack.c.l.b16 %v686
        %v2017 = vunpack.c.l.b16 %v687
        %v2018 = vunpack.c.l.b16 %v688
        %v2019 = vunpack.c.l.b16 %v689
        %v2020 = vunpack.c.l.b16 %v690
        %v2021 = vunpack.c.l.b16 %v691
        %v2022 = vunpack.c.l.b16 %v692
        %v2023 = vunpack.c.l.b16 %v693
        %v2024 = vunpack.c.l.b16 %v694
        %v2025 = vpack.c.b16 %v2010, %v2009
        %v2026 = vpack.c.b16 %v2012, %v2011
        %v2027 = vpack.c.b16 %v2014, %v2013
        %v2028 = vpack.c.b16 %v2016, %v2015
        %v2029 = vpack.c.b16 %v2018, %v2017
        %v2030 = vpack.c.b16 %v2020, %v2019
        %v2031 = vpack.c.b16 %v2022, %v2021
        %v2032 = vpack.c.b16 %v2024, %v2023
        %2041 = vmatpush.bf16.msra.mxu0 %v2032
        %2042 = vmatpush.bf16.msra.mxu0 %v2031
        %2043 = vmatpush.bf16.msra.mxu0 %v2030
        %2044 = vmatpush.bf16.msra.mxu0 %v2029
        %2045 = vmatpush.bf16.msra.mxu0 %v2028
        %2046 = vmatpush.bf16.msra.mxu0 %v2027
        %2047 = vmatpush.bf16.msra.mxu0 %v2026
        %2048 = vmatpush.bf16.msra.mxu0 %v2025
        %2049 = vmatmul.bf16.gmra.mxu0 %v1990
        %v2050 = vpop.f32.mrf.mxu0
        %v2051 = vadd.f32 0.0, %v2050
        %v2052 = vpop.f32.mrf.mxu0
        %v2053 = vadd.f32 0.0, %v2052
        %2054 = vmatmul.bf16.gmra.mxu0 %v1991
        %v2055 = vpop.f32.mrf.mxu0
        %v2056 = vadd.f32 0.0, %v2055
        %v2057 = vpop.f32.mrf.mxu0
        %v2058 = vadd.f32 0.0, %v2057
        %2059 = vmatmul.bf16.gmra.mxu0 %v1992
        %v2060 = vpop.f32.mrf.mxu0
        %v2061 = vadd.f32 0.0, %v2060
        %v2062 = vpop.f32.mrf.mxu0
        %v2063 = vadd.f32 0.0, %v2062
        %2064 = vdwg.mxu0
        %v2065 = vrot.slane %v670, 3
        %v2066 = vperm.slane %v2065, 0
        %v2068 = vadd.f32 %v2051, %v2066
        %v2069 = vadd.f32 %v2053, %v2066
        %v2070 = vadd.f32 %v2056, %v2066
        %v2071 = vadd.f32 %v2058, %v2066
        %v2072 = vadd.f32 %v2061, %v2066
        %v2073 = vadd.f32 %v2063, %v2066
        %v2074 = vadd.f32 %v1647, %v2068
        %v2075 = vadd.f32 %v1648, %v2069
        %v2076 = vadd.f32 %v1649, %v2070
        %v2077 = vadd.f32 %v1650, %v2071
        %v2078 = vadd.f32 %v1651, %v2072
        %v2079 = vadd.f32 %v1652, %v2073
        %2080 = vst.msk [vmem:[#allocation2] sm:$0xff] %vm695, %v2074
        %2081 = vst.msk [vmem:[#allocation2 + $0x8] sm:$0xff] %vm695, %v2075
        %2082 = vst.msk [vmem:[#allocation2 + $0x10] sm:$0xff] %vm695, %v2076
        %2083 = vst.msk [vmem:[#allocation2 + $0x18] sm:$0xff] %vm695, %v2077
        %2084 = vst.msk [vmem:[#allocation2 + $0x20] sm:$0xff] %vm695, %v2078
        %2085 = vst.msk [vmem:[#allocation2 + $0x28] sm:$0xff] %vm695, %v2079
        %p2086 = scmp.eq.s32.totalorder %s31, 1
        // Predicated region
        $region109: #{custom_clip_forward.3} parent=71 // pred_check
          %p2087 = pneg %p2086
        $region110: #{custom_clip_forward.3} parent=71 // pred_check_branch
          %2089 = sbr.rel (%p2087) target = $region112
        $region111: #{custom_clip_forward.3} parent=71 // pred_region
          %v2090 = vld [vmem:[#allocation12] sm:$0x7]
          %v2091 = vperm.slane %v2090, 0
          %v2092 = vlaneseq
          %v2093 = vshrl.u32 %v2092, 7
          %2095 = vset.pattern.permute.xlu0 %v2093
          %2096 = vperm.xlu0 %2095, %v2091
          %v2097 = vpop.permute.xlu0 %2096
          %v2098 = vlaneseq
          %v2099 = vshrl.u32 %v2098, 7
          %v2100 = vadd.s32 %v2099, 8
          %2101 = vset.pattern.permute.xlu0 %v2100
          %2102 = vperm.xlu0 %2101, %v2091
          %v2103 = vpop.permute.xlu0 %2102
          %v2104 = vperm.slane %v2090, 1
          %v2105 = vlaneseq
          %v2106 = vshrl.u32 %v2105, 7
          %2108 = vset.pattern.permute.xlu0 %v2106
          %2109 = vperm.xlu0 %2108, %v2104
          %v2110 = vpop.permute.xlu0 %2109
          %v2111 = vlaneseq
          %v2112 = vshrl.u32 %v2111, 7
          %v2113 = vadd.s32 %v2112, 8
          %2114 = vset.pattern.permute.xlu0 %v2113
          %2115 = vperm.xlu0 %2114, %v2104
          %v2116 = vpop.permute.xlu0 %2115
          %v2117 = vperm.slane %v2090, 2
          %v2118 = vlaneseq
          %v2119 = vshrl.u32 %v2118, 7
          %2121 = vset.pattern.permute.xlu0 %v2119
          %2122 = vperm.xlu0 %2121, %v2117
          %v2123 = vpop.permute.xlu0 %2122
          %v2124 = vlaneseq
          %v2125 = vshrl.u32 %v2124, 7
          %v2126 = vadd.s32 %v2125, 8
          %2127 = vset.pattern.permute.xlu0 %v2126
          %2128 = vperm.xlu0 %2127, %v2117
          %v2129 = vpop.permute.xlu0 %2128
          %v2130 = vmul.f32 %v2097, %v2074
          %v2131 = vmul.f32 %v2103, %v2075
          %v2132 = vmul.f32 %v2110, %v2076
          %v2133 = vmul.f32 %v2116, %v2077
          %v2134 = vmul.f32 %v2123, %v2078
          %v2135 = vmul.f32 %v2129, %v2079
          %v2136 = vsel %vm695, %v2130, 0.0
          %v2137 = vsel %vm695, %v2131, 0.0
          %v2138 = vadd.f32 %v2136, %v2137
          %v2139 = vrot.slane %v2138, 4
          %v2140 = vadd.f32 %v2138, %v2139
          %v2141 = vrot.slane %v2140, 2
          %v2142 = vadd.f32 %v2140, %v2141
          %v2143 = vrot.slane %v2142, 1
          %v2144 = vadd.f32 %v2142, %v2143
          %v2145 = vsel %vm695, %v2132, 0.0
          %v2146 = vsel %vm695, %v2133, 0.0
          %v2147 = vadd.f32 %v2145, %v2146
          %v2148 = vrot.slane %v2147, 4
          %v2149 = vadd.f32 %v2147, %v2148
          %v2150 = vrot.slane %v2149, 2
          %v2151 = vadd.f32 %v2149, %v2150
          %v2152 = vrot.slane %v2151, 1
          %v2153 = vadd.f32 %v2151, %v2152
          %v2154 = vsel %vm695, %v2134, 0.0
          %v2155 = vsel %vm695, %v2135, 0.0
          %v2156 = vadd.f32 %v2154, %v2155
          %v2157 = vrot.slane %v2156, 4
          %v2158 = vadd.f32 %v2156, %v2157
          %v2159 = vrot.slane %v2158, 2
          %v2160 = vadd.f32 %v2158, %v2159
          %v2161 = vrot.slane %v2160, 1
          %v2162 = vadd.f32 %v2160, %v2161
          %v2163 = vld [vmem:[%s7] sm:$0x1]
          %v2164 = vld [vmem:[%s7 + $0x1] sm:$0x1]
          %vm2168 = vcmask 1041409
          %v2169 = vsel %vm2168, %v2153, %v2144
          %vm2170 = vcmask 1042434
          %v2171 = vsel %vm2170, %v2162, %v2169
          %vm2173 = vcmask 256000
          %v2174 = vsel %vm2173, %v2171, 0.0
          %2175 = vadd.xlane.f32.xlu0 %v2174
          %v2176 = vpop.xlane.xlu0 %2175
          %v2177 = vmul.f32 %v2176, %v720
          %v2179 = vrot.slane %v2177, 1
          %v2180 = vrot.slane %v2177, 2
          %v2184 = vsub.f32 %v2144, %v2177
          %v2185 = vsub.f32 %v2153, %v2179
          %v2186 = vsub.f32 %v2162, %v2180
          %v2187 = vmul.f32 %v2184, %v2184
          %v2188 = vmul.f32 %v2185, %v2185
          %v2189 = vmul.f32 %v2186, %v2186
          %v2193 = vrot.slane %v2188, 7
          %v2194 = vsel %vm2168, %v2193, %v2187
          %v2195 = vrot.slane %v2189, 6
          %v2196 = vsel %vm2170, %v2195, %v2194
          %v2198 = vsel %vm2173, %v2196, 0.0
          %2199 = vadd.xlane.f32.xlu0 %v2198
          %v2200 = vpop.xlane.xlu0 %2199
          %v2201 = vmul.f32 %v2200, %v720
          %v2202 = vadd.f32 %v2201, 1e-05
          %v2203 = vrsqrt.pop %v2202
          %v2204 = vmul.f32 %v2203, %v2202
          %v2205 = vmul.f32 %v2204, %v2203
          %v2206 = vmul.f32 0.5, %v2205
          %v2207 = vsub.f32 1.5, %v2206
          %v2208 = vmul.f32 %v2203, %v2207
          %vm2209 = vweird.f32 %v2202
          %vm2210 = vweird.f32 %v2203
          %vm2211 = vmor %vm2209, %vm2210
          %v2212 = vsel %vm2211, %v2203, %v2208
          %v2214 = vrot.slane %v2212, 1
          %v2215 = vrot.slane %v2212, 2
          %v2219 = vmul.f32 %v2184, %v2212
          %v2220 = vmul.f32 %v2185, %v2214
          %v2221 = vmul.f32 %v2186, %v2215
          %v2222 = vperm.slane %v2163, 0
          %v2223 = vmul.f32 %v2219, %v2222
          %v2224 = vmul.f32 %v2220, %v2222
          %v2225 = vmul.f32 %v2221, %v2222
          %v2226 = vperm.slane %v2164, 0
          %v2227 = vadd.f32 %v2223, %v2226
          %v2228 = vadd.f32 %v2224, %v2226
          %v2229 = vadd.f32 %v2225, %v2226
          %v2230 = vld [vmem:[#allocation13] sm:$0xff]
          %v2231 = vld [vmem:[#allocation13 + $0x8] sm:$0xff]
          %v2232 = vld [vmem:[#allocation13 + $0x10] sm:$0xff]
          %v2233 = vld [vmem:[#allocation13 + $0x18] sm:$0xff]
          %v2234 = vpack.c.bf16 %v2227, %v2227
          %v2235 = vpack.c.bf16 %v2228, %v2228
          %v2236 = vpack.c.bf16 %v2229, %v2229
          %v2237 = vpack.c.bf16 %v2231, %v2230
          %v2238 = vpack.c.bf16 %v2233, %v2232
          %v2242 = vunpack.c.l.b16 %v2234
          %v2243 = vunpack.c.l.b16 %v2235
          %v2244 = vunpack.c.l.b16 %v2236
          %v2245 = vrot.slane %v2243, 7
          %v2246 = vsel %vm2168, %v2245, %v2242
          %v2247 = vrot.slane %v2244, 6
          %v2248 = vsel %vm2170, %v2247, %v2246
          %v2249 = vpack.c.b16 %v2248, %v2248
          %v2251 = vsel %vm695, %v2249, 0
          %2253 = vmatpush.bf16.msra.mxu0 0
          %2254 = vmatpush.bf16.msra.mxu0 0
          %2255 = vmatpush.bf16.msra.mxu0 0
          %2256 = vmatpush.bf16.msra.mxu0 0
          %2257 = vmatpush.bf16.msra.mxu0 0
          %2258 = vmatpush.bf16.msra.mxu0 0
          %2259 = vmatpush.bf16.msra.mxu0 %v2238
          %2260 = vmatpush.bf16.msra.mxu0 %v2237
          %2261 = vmatmul.bf16.gmra.mxu0 %v2251
          %v2262 = vpop.f32.mrf.mxu0
          %v2263 = vadd.f32 0.0, %v2262
          %v2264 = vpop.f32.mrf.mxu0
          %2265 = vdwg.mxu0
          %v2266 = vld [vmem:[%s6] sm:$0x3]
          %v2267 = vmul.f32 %v2266, %v2266
          %vm2268 = vcmask 254976
          %v2269 = vsel %vm2268, %v2267, 0.0
          %2270 = vadd.xlane.f32.xlu0 %v2269
          %v2271 = vpop.xlane.xlu0 %2270
          %v2272 = vadd.f32 %v2271, 1e-12
          %v2273 = vrsqrt.pop %v2272
          %v2274 = vmul.f32 %v2273, %v2272
          %v2275 = vmul.f32 %v2274, %v2273
          %v2276 = vmul.f32 0.5, %v2275
          %v2277 = vsub.f32 1.5, %v2276
          %v2278 = vmul.f32 %v2273, %v2277
          %vm2279 = vweird.f32 %v2272
          %vm2280 = vweird.f32 %v2273
          %vm2281 = vmor %vm2279, %vm2280
          %v2282 = vsel %vm2281, %v2273, %v2278
          %v2283 = vmul.f32 %v2266, %v2282
          %v2284 = vmul.f32 %v2263, %v2263
          %v2285 = vsel %vm2173, %v2284, 0.0
          %2286 = vadd.xlane.f32.xlu0 %v2285
          %v2287 = vpop.xlane.xlu0 %2286
          %v2288 = vadd.f32 %v2287, 1e-12
          %v2289 = vrsqrt.pop %v2288
          %v2290 = vmul.f32 %v2289, %v2288
          %v2291 = vmul.f32 %v2290, %v2289
          %v2292 = vmul.f32 0.5, %v2291
          %v2293 = vsub.f32 1.5, %v2292
          %v2294 = vmul.f32 %v2289, %v2293
          %vm2295 = vweird.f32 %v2288
          %vm2296 = vweird.f32 %v2289
          %vm2297 = vmor %vm2295, %vm2296
          %v2298 = vsel %vm2297, %v2289, %v2294
          %v2299 = vmul.f32 %v2263, %v2298
          %v2301 = vsel %vm695, %v2283, 0
          %v2304 = vsel %vm695, %v2299, 0
          %2306 = vmatpush.xpose.msra.mxu0 0.0
          %2307 = vmatpush.xpose.msra.mxu0 0.0
          %2308 = vmatpush.xpose.msra.mxu0 0.0
          %2309 = vmatpush.xpose.msra.mxu0 0.0
          %2310 = vmatpush.xpose.msra.mxu0 0.0
          %2311 = vmatpush.xpose.msra.mxu0 0.0
          %2312 = vmatpush.xpose.msra.mxu0 0.0
          %2313 = vmatpush.xpose.msra.mxu0 0.0
          %2314 = vmatpush.xpose.msra.mxu0 0.0
          %2315 = vmatpush.xpose.msra.mxu0 0.0
          %2316 = vmatpush.xpose.msra.mxu0 0.0
          %2317 = vmatpush.xpose.msra.mxu0 0.0
          %2318 = vmatpush.xpose.msra.mxu0 0.0
          %2319 = vmatpush.xpose.msra.mxu0 0.0
          %2320 = vmatpush.xpose.msra.mxu0 0.0
          %2321 = vmatpush.xpose.msra.mxu0 %v2304
          %2322 = vmatmul.f32.gmra.mxu0 %v2301
          %v2323 = vpop.f32.mrf.mxu0
          %v2324 = vadd.f32 0.0, %v2323
          %2325 = vdwg.mxu0
          %v2326 = vld [vmem:[#allocation3] sm:$0x1]
          %v2328 = vperm.slane %v2326, 0
          %2329 = vset.pattern.permute.xlu0 0
          %2330 = vperm.xlu0 %2329, %v2328
          %v2331 = vpop.permute.xlu0 %2330
          %v2333 = vmul.f32 %v2331, %v2324
          %vm2334 = vcmask 17408
          %2335 = vst.msk [vmem:[#allocation17] sm:$0x3] %vm2334, %v2333
        $region112: #{custom_clip_forward.3} parent=71 // pred_fallthru
          _
        // Predicated region
        $region113: #{custom_clip_forward.3} parent=71 // pred_check
          %p2336 = pneg %p332
        $region114: #{custom_clip_forward.3} parent=71 // pred_check_branch
          %2338 = sbr.rel (%p2336) target = $region116
        $region115: #{custom_clip_forward.3} parent=71 // pred_region
          %2340 = vsyncadd [#allocation6], 0
          %s2342 = sshll.u32 [#allocation17], 4
          %s2343 = int_to_ptr.vmem [resolvable:$true] %s2342
          %s2344 = sshll.u32 %s13, 4
          %s2345 = int_to_ptr.hbm [resolvable:$true] %s2344
          %2347 = dma.vmem_to_hbm [thread:$0]  %s2343, 32, %s2345, [#allocation6]
        $region116: #{custom_clip_forward.3} parent=71 // pred_fallthru
          _
        // Predicated region
        $region117: #{custom_clip_forward.3} parent=71 // pred_check
          %p2348 = pneg %p332
        $region118: #{custom_clip_forward.3} parent=71 // pred_check_branch
          %2350 = sbr.rel (%p2348) target = $region120
        $region119: #{custom_clip_forward.3} parent=71 // pred_region
          %2352 = dma.done [#allocation6], 32
        $region120: #{custom_clip_forward.3} parent=71 // pred_fallthru
          _
      $region72: #{custom_clip_forward.3} parent=5 // pred_fallthru
        _
      %p2353 = scmp.le.s32.totalorder 2, %s26
      // Predicated region
      $region121: #{custom_clip_forward.3} parent=5 // pred_check
        %p2354 = pneg %p2353
      $region122: #{custom_clip_forward.3} parent=5 // pred_check_branch
        %2356 = sbr.rel (%p2354) target = $region124
      $region123: #{custom_clip_forward.3} parent=5 // pred_region
        %s2357 = ssub.s32 %s26, 2
      $region124: #{custom_clip_forward.3} parent=5 // pred_fallthru
        _
    $region6: #{custom_clip_forward.3} parent=1 // loop_footer
      %s30 = sadd.s32 1, %s26
    $region7: #{custom_clip_forward.3} parent=1 // loop_footer_branch
      %25 = sbr.rel target = $region3
    $region8: #{custom_clip_forward.3} parent=1 // loop_exit
      _
    %2358 = vsyncpa [#allocation5], 1
    %s2359 = scalar_lea.sflag [#allocation5], 1
    %2360 = vsyncpa %s2359, 1
    %2361 = vsyncpa [#allocation8], 1
    %2362 = vsyncpa [#allocation11], 1
    %2363 = vsyncpa [#allocation14], 1
    %2364 = vsyncpa [#allocation6], 1
    %s2365 = scalar_lea.sflag [#allocation6], 1
    %2366 = vsyncpa %s2365, 1

// kernel: custom_clip_forward.2
$region0: #{custom_clip_forward.2}
  #allocation0 [shape = 'u32[]', space=smem, size = 0x4, offset = 0x4, fixed_abs, tag = 'smem constant byte address 0x4 - core index']
  #allocation1 [shape = 'u32[72,128]{1,0:T(1,128)}', space=vmem, size = 0x9000, scoped, tag = 'internal scratch']
  #allocation2 [shape = 'f32[2,8,64]{2,1,0:T(8,128)}', space=vmem, size = 0x2000, scoped, tag = 'scratch operand']
  %s0 = inlined_call_operand.vmem [shape: f32[2,4,768], index: 0, kind: input, shape index: {}]
  %s1 = inlined_call_operand.hbm [shape: f32[768,64], index: 1, kind: input, shape index: {}]
  %s2 = inlined_call_operand.hbm [shape: f32[1,64], index: 2, kind: input, shape index: {}]
  %s3 = inlined_call_operand.hbm [shape: f32[5,64], index: 3, kind: input, shape index: {}]
  %s4 = inlined_call_operand.hbm [shape: f32[2,64], index: 4, kind: input, shape index: {}, may-alias: {4,6}]
  %s5 = inlined_call_operand.hbm [shape: f32[2,64], index: 5, kind: input, shape index: {}]
  %s6 = inlined_call_operand.hbm [shape: f32[2,64], index: 6, kind: input, shape index: {}, may-alias: {4,6}]
  %s7 = inlined_call_operand.hbm [shape: f32[64,32], index: 7, kind: input, shape index: {}]
  %s8 = inlined_call_operand.hbm [shape: f32[8,8], index: 8, kind: input, shape index: {}]
  %s9 = inlined_call_operand.hbm [shape: f32[11,2,64], index: 9, kind: input, shape index: {}]
  %s10 = inlined_call_operand.hbm [shape: bf16[12,64,512], index: 10, kind: input, shape index: {}]
  %s11 = inlined_call_operand.vmem [shape: bf16[12,256,64], index: 11, kind: input, shape index: {}]
  %s12 = inlined_call_operand.vmem [shape: f32[12,1,832], index: 12, kind: input, shape index: {}]
  %s13 = inlined_call_operand.vmem [shape: f32[2,32], index: 13, kind: output, shape index: {}]
  %s14 = sld [smem:[#allocation0]]
  $region137: #{custom_clip_forward.2} parent=0
    _
  %s16 = ssub.s32 1, %s14
  %s17 = scalar_select 0, %s16, %s14
  $region1: #{custom_clip_forward.2} parent=0
    #allocation3 [shape = 'u8[393216]{0}', space=vmem, size = 0x60000, scoped, tag = 'input window, operand 1, single buffered']
    #allocation4 [shape = 's32[2]{0}', space=sflag, size = 0x8, scoped, tag = 'scoped memory for custom_clip_forward.2']
    #allocation5 [shape = 'u8[512]{0}', space=vmem, size = 0x400, scoped, tag = 'input window, operand 2, single buffered']
    #allocation6 [shape = 's32[1]{0}', space=sflag, size = 0x4, scoped, tag = 'scoped memory for custom_clip_forward.2']
    #allocation7 [shape = 'u8[4096]{0}', space=vmem, size = 0x1000, scoped, tag = 'input window, operand 3, single buffered']
    #allocation8 [shape = 'u8[1024]{0}', space=vmem, size = 0x400, scoped, tag = 'input window, operand 4, single buffered']
    #allocation9 [shape = 's32[1]{0}', space=sflag, size = 0x4, scoped, tag = 'scoped memory for custom_clip_forward.2']
    #allocation10 [shape = 'u8[1024]{0}', space=vmem, size = 0x400, scoped, tag = 'input window, operand 5, single buffered']
    #allocation11 [shape = 'u8[1024]{0}', space=vmem, size = 0x400, scoped, tag = 'input window, operand 6, single buffered']
    #allocation12 [shape = 's32[1]{0}', space=sflag, size = 0x4, scoped, tag = 'scoped memory for custom_clip_forward.2']
    #allocation13 [shape = 'u8[32768]{0}', space=vmem, size = 0x8000, scoped, tag = 'input window, operand 7, single buffered']
    #allocation14 [shape = 'u8[4096]{0}', space=vmem, size = 0x1000, scoped, tag = 'input window, operand 8, single buffered']
    #allocation15 [shape = 's32[1]{0}', space=sflag, size = 0x4, scoped, tag = 'scoped memory for custom_clip_forward.2']
    #allocation16 [shape = 'u8[2048]{0}', space=vmem, size = 0x800, scoped, tag = 'input window, operand 9']
    #allocation17 [shape = 'u8[131072]{0}', space=vmem, size = 0x20000, scoped, tag = 'input window, operand 10']
    %18 = vsyncpa [#allocation4], 0
    %19 = vsyncpa [#allocation6], 0
    %20 = vsyncpa [#allocation9], 0
    %21 = vsyncpa [#allocation12], 0
    %22 = vsyncpa [#allocation15], 0
    loop: start=0, step=1, limit=14
    $region2: #{custom_clip_forward.2} parent=1 // loop_pre_header
      _
    $region3: #{custom_clip_forward.2} parent=1 // loop_header
      %s24 = sphi 0, %s28
      %p25 = scmp.ge.s32.totalorder %s24, 14
      %s32 = sphi 0, %s32
      %s34 = sphi 0, %s32
      %s35 = sphi 0, %s34
      %s49 = sphi 0, %s35
      %s53 = sphi 0, %s53
      %s55 = sphi 0, %s53
      %s56 = sphi 0, %s55
      %s70 = sphi 0, %s56
      %s74 = sphi 0, %s74
      %s76 = sphi 0, %s74
      %s77 = sphi 0, %s76
      %s91 = sphi 0, %s77
      %s95 = sphi 0, %s95
      %s97 = sphi 0, %s95
      %s98 = sphi 0, %s97
      %s112 = sphi 0, %s98
      %s116 = sphi 0, %s116
      %s118 = sphi 0, %s116
      %s119 = sphi 0, %s118
      %s133 = sphi 0, %s119
      %s137 = sphi 0, %s137
      %s139 = sphi 0, %s137
      %s140 = sphi 0, %s139
      %s154 = sphi 0, %s140
      %s158 = sphi 0, %s158
      %s160 = sphi 0, %s158
      %s161 = sphi 0, %s160
      %s175 = sphi 0, %s161
      %s179 = sphi 0, %s179
      %s181 = sphi 0, %s179
      %s182 = sphi 0, %s181
      %s196 = sphi 0, %s182
      %s200 = sphi 0, %s200
      %s202 = sphi 0, %s200
      %s203 = sphi 0, %s202
      %s217 = sphi 0, %s203
      %s229 = sphi 0, %s231
      %s232 = sphi 0, %s229
      %s233 = sphi 0, %s232
      %s249 = sphi 0, %s233
      %s255 = sphi 0, %s257
      %s258 = sphi 0, %s255
      %s259 = sphi 0, %s258
      %s275 = sphi 0, %s259
      %s281 = sphi 0, %s283
      %s284 = sphi 0, %s281
      %s285 = sphi 0, %s284
      %s301 = sphi 0, %s285
      %s307 = sphi 0, %s309
      %s310 = sphi 0, %s307
      %s311 = sphi 0, %s310
      %s327 = sphi 0, %s311
      %s331 = sphi 0, %s331
      %s333 = sphi 0, %s331
      %s334 = sphi 0, %s333
      %s348 = sphi 0, %s334
    $region4: #{custom_clip_forward.2} parent=1 // loop_header_branch
      %27 = sbr.rel (%p25) target = $region8
    $region5: #{custom_clip_forward.2} parent=1 // loop_body
      %s29 = ssub.s32 %s24, 1
      %s30 = ssub.s32 %s24, 2
      %s31 = sadd.s32 %s24, 1
      %s33 = sadd.s32 %s32, 1
      %p36 = scmp.eq.s32.totalorder %s24, 11
      %p37 = scmp.ne.s32.totalorder %s32, %s34
      %p38 = scmp.eq.s32.totalorder %s24, 0
      %p39 = por %p37, %p38
      %p40 = scmp.ne.s32.totalorder %s32, %s34
      %p41 = scmp.eq.s32.totalorder %s29, 11
      %p42 = por %p40, %p41
      %p43 = scmp.ne.s32.totalorder %s34, %s35
      %p44 = scmp.eq.s32.totalorder %s29, 0
      %p45 = por %p43, %p44
      %p46 = scmp.ne.s32.totalorder %s34, %s35
      %p47 = scmp.eq.s32.totalorder %s30, 11
      %p48 = por %p46, %p47
      %p50 = scmp.ne.s32.totalorder %s35, %s49
      %p51 = scmp.eq.s32.totalorder %s30, 0
      %p52 = por %p50, %p51
      %s54 = sadd.s32 %s53, 1
      %p57 = scmp.eq.s32.totalorder %s24, 11
      %p58 = scmp.ne.s32.totalorder %s53, %s55
      %p59 = scmp.eq.s32.totalorder %s24, 0
      %p60 = por %p58, %p59
      %p61 = scmp.ne.s32.totalorder %s53, %s55
      %p62 = scmp.eq.s32.totalorder %s29, 11
      %p63 = por %p61, %p62
      %p64 = scmp.ne.s32.totalorder %s55, %s56
      %p65 = scmp.eq.s32.totalorder %s29, 0
      %p66 = por %p64, %p65
      %p67 = scmp.ne.s32.totalorder %s55, %s56
      %p68 = scmp.eq.s32.totalorder %s30, 11
      %p69 = por %p67, %p68
      %p71 = scmp.ne.s32.totalorder %s56, %s70
      %p72 = scmp.eq.s32.totalorder %s30, 0
      %p73 = por %p71, %p72
      %s75 = sadd.s32 %s74, 1
      %p78 = scmp.eq.s32.totalorder %s24, 11
      %p79 = scmp.ne.s32.totalorder %s74, %s76
      %p80 = scmp.eq.s32.totalorder %s24, 0
      %p81 = por %p79, %p80
      %p82 = scmp.ne.s32.totalorder %s74, %s76
      %p83 = scmp.eq.s32.totalorder %s29, 11
      %p84 = por %p82, %p83
      %p85 = scmp.ne.s32.totalorder %s76, %s77
      %p86 = scmp.eq.s32.totalorder %s29, 0
      %p87 = por %p85, %p86
      %p88 = scmp.ne.s32.totalorder %s76, %s77
      %p89 = scmp.eq.s32.totalorder %s30, 11
      %p90 = por %p88, %p89
      %p92 = scmp.ne.s32.totalorder %s77, %s91
      %p93 = scmp.eq.s32.totalorder %s30, 0
      %p94 = por %p92, %p93
      %s96 = sadd.s32 %s95, 1
      %p99 = scmp.eq.s32.totalorder %s24, 11
      %p100 = scmp.ne.s32.totalorder %s95, %s97
      %p101 = scmp.eq.s32.totalorder %s24, 0
      %p102 = por %p100, %p101
      %p103 = scmp.ne.s32.totalorder %s95, %s97
      %p104 = scmp.eq.s32.totalorder %s29, 11
      %p105 = por %p103, %p104
      %p106 = scmp.ne.s32.totalorder %s97, %s98
      %p107 = scmp.eq.s32.totalorder %s29, 0
      %p108 = por %p106, %p107
      %p109 = scmp.ne.s32.totalorder %s97, %s98
      %p110 = scmp.eq.s32.totalorder %s30, 11
      %p111 = por %p109, %p110
      %p113 = scmp.ne.s32.totalorder %s98, %s112
      %p114 = scmp.eq.s32.totalorder %s30, 0
      %p115 = por %p113, %p114
      %s117 = sadd.s32 %s116, 1
      %p120 = scmp.eq.s32.totalorder %s24, 11
      %p121 = scmp.ne.s32.totalorder %s116, %s118
      %p122 = scmp.eq.s32.totalorder %s24, 0
      %p123 = por %p121, %p122
      %p124 = scmp.ne.s32.totalorder %s116, %s118
      %p125 = scmp.eq.s32.totalorder %s29, 11
      %p126 = por %p124, %p125
      %p127 = scmp.ne.s32.totalorder %s118, %s119
      %p128 = scmp.eq.s32.totalorder %s29, 0
      %p129 = por %p127, %p128
      %p130 = scmp.ne.s32.totalorder %s118, %s119
      %p131 = scmp.eq.s32.totalorder %s30, 11
      %p132 = por %p130, %p131
      %p134 = scmp.ne.s32.totalorder %s119, %s133
      %p135 = scmp.eq.s32.totalorder %s30, 0
      %p136 = por %p134, %p135
      %s138 = sadd.s32 %s137, 1
      %p141 = scmp.eq.s32.totalorder %s24, 11
      %p142 = scmp.ne.s32.totalorder %s137, %s139
      %p143 = scmp.eq.s32.totalorder %s24, 0
      %p144 = por %p142, %p143
      %p145 = scmp.ne.s32.totalorder %s137, %s139
      %p146 = scmp.eq.s32.totalorder %s29, 11
      %p147 = por %p145, %p146
      %p148 = scmp.ne.s32.totalorder %s139, %s140
      %p149 = scmp.eq.s32.totalorder %s29, 0
      %p150 = por %p148, %p149
      %p151 = scmp.ne.s32.totalorder %s139, %s140
      %p152 = scmp.eq.s32.totalorder %s30, 11
      %p153 = por %p151, %p152
      %p155 = scmp.ne.s32.totalorder %s140, %s154
      %p156 = scmp.eq.s32.totalorder %s30, 0
      %p157 = por %p155, %p156
      %s159 = sadd.s32 %s158, 1
      %p162 = scmp.eq.s32.totalorder %s24, 11
      %p163 = scmp.ne.s32.totalorder %s158, %s160
      %p164 = scmp.eq.s32.totalorder %s24, 0
      %p165 = por %p163, %p164
      %p166 = scmp.ne.s32.totalorder %s158, %s160
      %p167 = scmp.eq.s32.totalorder %s29, 11
      %p168 = por %p166, %p167
      %p169 = scmp.ne.s32.totalorder %s160, %s161
      %p170 = scmp.eq.s32.totalorder %s29, 0
      %p171 = por %p169, %p170
      %p172 = scmp.ne.s32.totalorder %s160, %s161
      %p173 = scmp.eq.s32.totalorder %s30, 11
      %p174 = por %p172, %p173
      %p176 = scmp.ne.s32.totalorder %s161, %s175
      %p177 = scmp.eq.s32.totalorder %s30, 0
      %p178 = por %p176, %p177
      %s180 = sadd.s32 %s179, 1
      %p183 = scmp.eq.s32.totalorder %s24, 11
      %p184 = scmp.ne.s32.totalorder %s179, %s181
      %p185 = scmp.eq.s32.totalorder %s24, 0
      %p186 = por %p184, %p185
      %p187 = scmp.ne.s32.totalorder %s179, %s181
      %p188 = scmp.eq.s32.totalorder %s29, 11
      %p189 = por %p187, %p188
      %p190 = scmp.ne.s32.totalorder %s181, %s182
      %p191 = scmp.eq.s32.totalorder %s29, 0
      %p192 = por %p190, %p191
      %p193 = scmp.ne.s32.totalorder %s181, %s182
      %p194 = scmp.eq.s32.totalorder %s30, 11
      %p195 = por %p193, %p194
      %p197 = scmp.ne.s32.totalorder %s182, %s196
      %p198 = scmp.eq.s32.totalorder %s30, 0
      %p199 = por %p197, %p198
      %s201 = sadd.s32 %s200, 1
      %p204 = scmp.eq.s32.totalorder %s24, 11
      %p205 = scmp.ne.s32.totalorder %s200, %s202
      %p206 = scmp.eq.s32.totalorder %s24, 0
      %p207 = por %p205, %p206
      %p208 = scmp.ne.s32.totalorder %s200, %s202
      %p209 = scmp.eq.s32.totalorder %s29, 11
      %p210 = por %p208, %p209
      %p211 = scmp.ne.s32.totalorder %s202, %s203
      %p212 = scmp.eq.s32.totalorder %s29, 0
      %p213 = por %p211, %p212
      %p214 = scmp.ne.s32.totalorder %s202, %s203
      %p215 = scmp.eq.s32.totalorder %s30, 11
      %p216 = por %p214, %p215
      %p218 = scmp.ne.s32.totalorder %s203, %s217
      %p219 = scmp.eq.s32.totalorder %s30, 0
      %p220 = por %p218, %p219
      %s221 = ssub.s32 %s24, 1
      %p222 = scmp.gt.s32.totalorder %s221, 0
      %s223 = scalar_select %p222, %s221, 0
      %s224 = ssub.s32 %s31, 1
      %p225 = scmp.gt.s32.totalorder %s224, 0
      %s226 = scalar_select %p225, %s224, 0
      %s227 = ssub.s32 %s223, %s226
      %p228 = scmp.eq.s32.totalorder %s227, 0
      %s230 = sadd.s32 %s229, 1
      %s231 = scalar_select %p228, %s229, %s230
      %p234 = pneg %p228
      %p235 = scmp.eq.s32.totalorder %s24, 11
      %p236 = por %p234, %p235
      %p237 = scmp.ne.s32.totalorder %s229, %s232
      %p238 = scmp.eq.s32.totalorder %s24, 0
      %p239 = por %p237, %p238
      %p240 = scmp.ne.s32.totalorder %s229, %s232
      %p241 = scmp.eq.s32.totalorder %s29, 11
      %p242 = por %p240, %p241
      %p243 = scmp.ne.s32.totalorder %s232, %s233
      %p244 = scmp.eq.s32.totalorder %s29, 0
      %p245 = por %p243, %p244
      %p246 = scmp.ne.s32.totalorder %s232, %s233
      %p247 = scmp.eq.s32.totalorder %s30, 11
      %p248 = por %p246, %p247
      %p250 = scmp.ne.s32.totalorder %s233, %s249
      %p251 = scmp.eq.s32.totalorder %s30, 0
      %p252 = por %p250, %p251
      %s253 = ssub.s32 %s24, %s31
      %p254 = scmp.eq.s32.totalorder %s253, 0
      %s256 = sadd.s32 %s255, 1
      %s257 = scalar_select %p254, %s255, %s256
      %p260 = pneg %p254
      %p261 = scmp.eq.s32.totalorder %s24, 11
      %p262 = por %p260, %p261
      %p263 = scmp.ne.s32.totalorder %s255, %s258
      %p264 = scmp.eq.s32.totalorder %s24, 0
      %p265 = por %p263, %p264
      %p266 = scmp.ne.s32.totalorder %s255, %s258
      %p267 = scmp.eq.s32.totalorder %s29, 11
      %p268 = por %p266, %p267
      %p269 = scmp.ne.s32.totalorder %s258, %s259
      %p270 = scmp.eq.s32.totalorder %s29, 0
      %p271 = por %p269, %p270
      %p272 = scmp.ne.s32.totalorder %s258, %s259
      %p273 = scmp.eq.s32.totalorder %s30, 11
      %p274 = por %p272, %p273
      %p276 = scmp.ne.s32.totalorder %s259, %s275
      %p277 = scmp.eq.s32.totalorder %s30, 0
      %p278 = por %p276, %p277
      %s279 = ssub.s32 %s24, %s31
      %p280 = scmp.eq.s32.totalorder %s279, 0
      %s282 = sadd.s32 %s281, 1
      %s283 = scalar_select %p280, %s281, %s282
      %p286 = pneg %p280
      %p287 = scmp.eq.s32.totalorder %s24, 11
      %p288 = por %p286, %p287
      %p289 = scmp.ne.s32.totalorder %s281, %s284
      %p290 = scmp.eq.s32.totalorder %s24, 0
      %p291 = por %p289, %p290
      %p292 = scmp.ne.s32.totalorder %s281, %s284
      %p293 = scmp.eq.s32.totalorder %s29, 11
      %p294 = por %p292, %p293
      %p295 = scmp.ne.s32.totalorder %s284, %s285
      %p296 = scmp.eq.s32.totalorder %s29, 0
      %p297 = por %p295, %p296
      %p298 = scmp.ne.s32.totalorder %s284, %s285
      %p299 = scmp.eq.s32.totalorder %s30, 11
      %p300 = por %p298, %p299
      %p302 = scmp.ne.s32.totalorder %s285, %s301
      %p303 = scmp.eq.s32.totalorder %s30, 0
      %p304 = por %p302, %p303
      %s305 = ssub.s32 %s24, %s31
      %p306 = scmp.eq.s32.totalorder %s305, 0
      %s308 = sadd.s32 %s307, 1
      %s309 = scalar_select %p306, %s307, %s308
      %p312 = pneg %p306
      %p313 = scmp.eq.s32.totalorder %s24, 11
      %p314 = por %p312, %p313
      %p315 = scmp.ne.s32.totalorder %s307, %s310
      %p316 = scmp.eq.s32.totalorder %s24, 0
      %p317 = por %p315, %p316
      %p318 = scmp.ne.s32.totalorder %s307, %s310
      %p319 = scmp.eq.s32.totalorder %s29, 11
      %p320 = por %p318, %p319
      %p321 = scmp.ne.s32.totalorder %s310, %s311
      %p322 = scmp.eq.s32.totalorder %s29, 0
      %p323 = por %p321, %p322
      %p324 = scmp.ne.s32.totalorder %s310, %s311
      %p325 = scmp.eq.s32.totalorder %s30, 11
      %p326 = por %p324, %p325
      %p328 = scmp.ne.s32.totalorder %s311, %s327
      %p329 = scmp.eq.s32.totalorder %s30, 0
      %p330 = por %p328, %p329
      %s332 = sadd.s32 %s331, 1
      %p335 = scmp.eq.s32.totalorder %s24, 11
      %p336 = scmp.ne.s32.totalorder %s331, %s333
      %p337 = scmp.eq.s32.totalorder %s24, 0
      %p338 = por %p336, %p337
      %p339 = scmp.ne.s32.totalorder %s331, %s333
      %p340 = scmp.eq.s32.totalorder %s29, 11
      %p341 = por %p339, %p340
      %p342 = scmp.ne.s32.totalorder %s333, %s334
      %p343 = scmp.eq.s32.totalorder %s29, 0
      %p344 = por %p342, %p343
      %p345 = scmp.ne.s32.totalorder %s333, %s334
      %p346 = scmp.eq.s32.totalorder %s30, 11
      %p347 = por %p345, %p346
      %p349 = scmp.ne.s32.totalorder %s334, %s348
      %p350 = scmp.eq.s32.totalorder %s30, 0
      %p351 = por %p349, %p350
      %p352 = scmp.le.s32.totalorder 1, %s24
      %p353 = scmp.lt.s32.totalorder %s24, 13
      %p354 = pnand %p352, %p353
      %p355 = pneg %p354
      // Predicated region
      $region9: #{custom_clip_forward.2} parent=5 // pred_check
        _
      $region10: #{custom_clip_forward.2} parent=5 // pred_check_branch
        %357 = sbr.rel (%p354) target = $region12
      $region11: #{custom_clip_forward.2} parent=5 // pred_region
        %s358 = ssub.s32 %s24, 1
        // Predicated region
        $region13: #{custom_clip_forward.2} parent=11 // pred_check
          %p359 = pneg %p45
        $region14: #{custom_clip_forward.2} parent=11 // pred_check_branch
          %361 = sbr.rel (%p359) target = $region16
        $region15: #{custom_clip_forward.2} parent=11 // pred_region
          _
        $region16: #{custom_clip_forward.2} parent=11 // pred_fallthru
          _
        // Predicated region
        $region17: #{custom_clip_forward.2} parent=11 // pred_check
          %p362 = pneg %p66
        $region18: #{custom_clip_forward.2} parent=11 // pred_check_branch
          %364 = sbr.rel (%p362) target = $region20
        $region19: #{custom_clip_forward.2} parent=11 // pred_region
          %366 = vsyncadd [#allocation4], 0
          %s367 = sshll.u32 %s1, 4
          %s368 = int_to_ptr.hbm [resolvable:$true] %s367
          %s369 = sshll.u32 [#allocation3], 4
          %s370 = int_to_ptr.vmem [resolvable:$true] %s369
          %375 = dma.hbm_to_vmem [thread:$0]  %s368, 12288, %s370, [#allocation4], 128, 128, 8
        $region20: #{custom_clip_forward.2} parent=11 // pred_fallthru
          _
        // Predicated region
        $region21: #{custom_clip_forward.2} parent=11 // pred_check
          %p376 = pneg %p87
        $region22: #{custom_clip_forward.2} parent=11 // pred_check_branch
          %378 = sbr.rel (%p376) target = $region24
        $region23: #{custom_clip_forward.2} parent=11 // pred_region
          %380 = vsyncadd [#allocation6], 0
          %s382 = sshll.u32 %s2, 4
          %s383 = int_to_ptr.hbm [resolvable:$true] %s382
          %s384 = sshll.u32 [#allocation5], 4
          %s385 = int_to_ptr.vmem [resolvable:$true] %s384
          %387 = dma.hbm_to_vmem [thread:$0]  %s383, 16, %s385, [#allocation6]
        $region24: #{custom_clip_forward.2} parent=11 // pred_fallthru
          _
        // Predicated region
        $region25: #{custom_clip_forward.2} parent=11 // pred_check
          %p388 = pneg %p108
        $region26: #{custom_clip_forward.2} parent=11 // pred_check_branch
          %390 = sbr.rel (%p388) target = $region28
        $region27: #{custom_clip_forward.2} parent=11 // pred_region
          %392 = vsyncadd [#allocation6], 0
          %s394 = sshll.u32 %s3, 4
          %s395 = int_to_ptr.hbm [resolvable:$true] %s394
          %s396 = sshll.u32 [#allocation7], 4
          %s397 = int_to_ptr.vmem [resolvable:$true] %s396
          %399 = dma.hbm_to_vmem [thread:$0]  %s395, 128, %s397, [#allocation6]
        $region28: #{custom_clip_forward.2} parent=11 // pred_fallthru
          _
        // Predicated region
        $region29: #{custom_clip_forward.2} parent=11 // pred_check
          %p400 = pneg %p129
        $region30: #{custom_clip_forward.2} parent=11 // pred_check_branch
          %402 = sbr.rel (%p400) target = $region32
        $region31: #{custom_clip_forward.2} parent=11 // pred_region
          %404 = vsyncadd [#allocation9], 0
          %s406 = sshll.u32 %s4, 4
          %s407 = int_to_ptr.hbm [resolvable:$true] %s406
          %s408 = sshll.u32 [#allocation8], 4
          %s409 = int_to_ptr.vmem [resolvable:$true] %s408
          %411 = dma.hbm_to_vmem [thread:$0]  %s407, 32, %s409, [#allocation9]
        $region32: #{custom_clip_forward.2} parent=11 // pred_fallthru
          _
        // Predicated region
        $region33: #{custom_clip_forward.2} parent=11 // pred_check
          %p412 = pneg %p150
        $region34: #{custom_clip_forward.2} parent=11 // pred_check_branch
          %414 = sbr.rel (%p412) target = $region36
        $region35: #{custom_clip_forward.2} parent=11 // pred_region
          %416 = vsyncadd [#allocation9], 0
          %s418 = sshll.u32 %s5, 4
          %s419 = int_to_ptr.hbm [resolvable:$true] %s418
          %s420 = sshll.u32 [#allocation10], 4
          %s421 = int_to_ptr.vmem [resolvable:$true] %s420
          %423 = dma.hbm_to_vmem [thread:$0]  %s419, 32, %s421, [#allocation9]
        $region36: #{custom_clip_forward.2} parent=11 // pred_fallthru
          _
        // Predicated region
        $region37: #{custom_clip_forward.2} parent=11 // pred_check
          %p424 = pneg %p171
        $region38: #{custom_clip_forward.2} parent=11 // pred_check_branch
          %426 = sbr.rel (%p424) target = $region40
        $region39: #{custom_clip_forward.2} parent=11 // pred_region
          %428 = vsyncadd [#allocation12], 0
          %s430 = sshll.u32 %s6, 4
          %s431 = int_to_ptr.hbm [resolvable:$true] %s430
          %s432 = sshll.u32 [#allocation11], 4
          %s433 = int_to_ptr.vmem [resolvable:$true] %s432
          %435 = dma.hbm_to_vmem [thread:$0]  %s431, 32, %s433, [#allocation12]
        $region40: #{custom_clip_forward.2} parent=11 // pred_fallthru
          _
        // Predicated region
        $region41: #{custom_clip_forward.2} parent=11 // pred_check
          %p436 = pneg %p192
        $region42: #{custom_clip_forward.2} parent=11 // pred_check_branch
          %438 = sbr.rel (%p436) target = $region44
        $region43: #{custom_clip_forward.2} parent=11 // pred_region
          %440 = vsyncadd [#allocation12], 0
          %s441 = sshll.u32 %s7, 4
          %s442 = int_to_ptr.hbm [resolvable:$true] %s441
          %s443 = sshll.u32 [#allocation13], 4
          %s444 = int_to_ptr.vmem [resolvable:$true] %s443
          %449 = dma.hbm_to_vmem [thread:$0]  %s442, 1024, %s444, [#allocation12], 128, 128, 8
        $region44: #{custom_clip_forward.2} parent=11 // pred_fallthru
          _
        // Predicated region
        $region45: #{custom_clip_forward.2} parent=11 // pred_check
          %p450 = pneg %p213
        $region46: #{custom_clip_forward.2} parent=11 // pred_check_branch
          %452 = sbr.rel (%p450) target = $region48
        $region47: #{custom_clip_forward.2} parent=11 // pred_region
          %454 = vsyncadd [#allocation15], 0
          %s456 = sshll.u32 %s8, 4
          %s457 = int_to_ptr.hbm [resolvable:$true] %s456
          %s458 = sshll.u32 [#allocation14], 4
          %s459 = int_to_ptr.vmem [resolvable:$true] %s458
          %461 = dma.hbm_to_vmem [thread:$0]  %s457, 128, %s459, [#allocation15]
        $region48: #{custom_clip_forward.2} parent=11 // pred_fallthru
          _
      $region12: #{custom_clip_forward.2} parent=5 // pred_fallthru
        _
      %p462 = scmp.lt.s32.totalorder %s24, 12
      // Predicated region
      $region49: #{custom_clip_forward.2} parent=5 // pred_check
        %p463 = pneg %p462
      $region50: #{custom_clip_forward.2} parent=5 // pred_check_branch
        %465 = sbr.rel (%p463) target = $region52
      $region51: #{custom_clip_forward.2} parent=5 // pred_region
        // Predicated region
        $region53: #{custom_clip_forward.2} parent=51 // pred_check
          %p466 = pneg %p239
        $region54: #{custom_clip_forward.2} parent=51 // pred_check_branch
          %468 = sbr.rel (%p466) target = $region56
        $region55: #{custom_clip_forward.2} parent=51 // pred_region
          %s469 = sand.u32 %s24, 1
          %s470 = scalar_lea.sflag [#allocation4], %s469
          %s471 = sand.u32 %s229, 1
          %s472 = smul.addr %s471, 2
          %s473 = scalar_lea.vmem [#allocation16], %s472
          %s474 = ssub.s32 %s24, 1
          %p475 = scmp.gt.s32.totalorder %s474, 0
          %s476 = scalar_select %p475, %s474, 0
          %478 = vsyncadd %s470, 0
          %s479 = smul.addr %s476, 2
          %s480 = scalar_lea.hbm %s9, %s479
          %s482 = sshll.u32 %s480, 4
          %s483 = int_to_ptr.hbm [resolvable:$true] %s482
          %s484 = sshll.u32 %s473, 4
          %s485 = int_to_ptr.vmem [resolvable:$true] %s484
          %487 = dma.hbm_to_vmem [thread:$0]  %s483, 32, %s485, %s470
        $region56: #{custom_clip_forward.2} parent=51 // pred_fallthru
          _
        // Predicated region
        $region57: #{custom_clip_forward.2} parent=51 // pred_check
          %p488 = pneg %p265
        $region58: #{custom_clip_forward.2} parent=51 // pred_check_branch
          %490 = sbr.rel (%p488) target = $region60
        $region59: #{custom_clip_forward.2} parent=51 // pred_region
          %s491 = sand.u32 %s24, 1
          %s492 = scalar_lea.sflag [#allocation4], %s491
          %s493 = sand.u32 %s255, 1
          %s494 = smul.addr %s493, 128
          %s495 = scalar_lea.vmem [#allocation17], %s494
          %497 = vsyncadd %s492, 0
          %s498 = smul.addr %s24, 32
          %s499 = smul.addr %s498, 4
          %s500 = scalar_lea.hbm %s10, %s499
          %s501 = sshll.u32 %s500, 4
          %s502 = int_to_ptr.hbm [resolvable:$true] %s501
          %s503 = sshll.u32 %s495, 4
          %s504 = int_to_ptr.vmem [resolvable:$true] %s503
          %509 = dma.hbm_to_vmem [thread:$0]  %s502, 2048, %s504, %s492, 256, 256, 16
        $region60: #{custom_clip_forward.2} parent=51 // pred_fallthru
          _
        // Predicated region
        $region61: #{custom_clip_forward.2} parent=51 // pred_check
          %p510 = pneg %p291
        $region62: #{custom_clip_forward.2} parent=51 // pred_check_branch
          %512 = sbr.rel (%p510) target = $region64
        $region63: #{custom_clip_forward.2} parent=51 // pred_region
          %p513 = scmp.lt.s32.totalorder %s24, 11
          %s514 = scalar_select %p513, %s24, 11
          %s515 = smul.addr %s514, 32
          %s516 = smul.addr %s515, 4
          %s517 = scalar_lea.vmem %s11, %s516
        $region64: #{custom_clip_forward.2} parent=51 // pred_fallthru
          _
        // Predicated region
        $region65: #{custom_clip_forward.2} parent=51 // pred_check
          %p518 = pneg %p317
        $region66: #{custom_clip_forward.2} parent=51 // pred_check_branch
          %520 = sbr.rel (%p518) target = $region68
        $region67: #{custom_clip_forward.2} parent=51 // pred_region
          %p521 = scmp.lt.s32.totalorder %s24, 11
          %s522 = scalar_select %p521, %s24, 11
          %s523 = smul.addr %s522, 7
          %s524 = scalar_lea.vmem %s12, %s523
        $region68: #{custom_clip_forward.2} parent=51 // pred_fallthru
          _
      $region52: #{custom_clip_forward.2} parent=5 // pred_fallthru
        _
      %p525 = scmp.le.s32.totalorder 1, %s24
      %p526 = scmp.lt.s32.totalorder %s24, 13
      %p527 = pnand %p525, %p526
      %p528 = pneg %p527
      // Predicated region
      $region69: #{custom_clip_forward.2} parent=5 // pred_check
        _
      $region70: #{custom_clip_forward.2} parent=5 // pred_check_branch
        %530 = sbr.rel (%p527) target = $region72
      $region71: #{custom_clip_forward.2} parent=5 // pred_region
        %s531 = ssub.s32 %s24, 1
        // Predicated region
        $region73: #{custom_clip_forward.2} parent=71 // pred_check
          %p532 = pneg %p66
        $region74: #{custom_clip_forward.2} parent=71 // pred_check_branch
          %534 = sbr.rel (%p532) target = $region76
        $region75: #{custom_clip_forward.2} parent=71 // pred_region
          %536 = dma.done [#allocation4], 12288
        $region76: #{custom_clip_forward.2} parent=71 // pred_fallthru
          _
        // Predicated region
        $region77: #{custom_clip_forward.2} parent=71 // pred_check
          %p537 = pneg %p87
        $region78: #{custom_clip_forward.2} parent=71 // pred_check_branch
          %539 = sbr.rel (%p537) target = $region80
        $region79: #{custom_clip_forward.2} parent=71 // pred_region
          %541 = dma.done [#allocation6], 16
        $region80: #{custom_clip_forward.2} parent=71 // pred_fallthru
          _
        // Predicated region
        $region81: #{custom_clip_forward.2} parent=71 // pred_check
          %p542 = pneg %p108
        $region82: #{custom_clip_forward.2} parent=71 // pred_check_branch
          %544 = sbr.rel (%p542) target = $region84
        $region83: #{custom_clip_forward.2} parent=71 // pred_region
          %546 = dma.done [#allocation6], 128
        $region84: #{custom_clip_forward.2} parent=71 // pred_fallthru
          _
        // Predicated region
        $region85: #{custom_clip_forward.2} parent=71 // pred_check
          %p547 = pneg %p129
        $region86: #{custom_clip_forward.2} parent=71 // pred_check_branch
          %549 = sbr.rel (%p547) target = $region88
        $region87: #{custom_clip_forward.2} parent=71 // pred_region
          %551 = dma.done [#allocation9], 32
        $region88: #{custom_clip_forward.2} parent=71 // pred_fallthru
          _
        // Predicated region
        $region89: #{custom_clip_forward.2} parent=71 // pred_check
          %p552 = pneg %p150
        $region90: #{custom_clip_forward.2} parent=71 // pred_check_branch
          %554 = sbr.rel (%p552) target = $region92
        $region91: #{custom_clip_forward.2} parent=71 // pred_region
          %556 = dma.done [#allocation9], 32
        $region92: #{custom_clip_forward.2} parent=71 // pred_fallthru
          _
        // Predicated region
        $region93: #{custom_clip_forward.2} parent=71 // pred_check
          %p557 = pneg %p171
        $region94: #{custom_clip_forward.2} parent=71 // pred_check_branch
          %559 = sbr.rel (%p557) target = $region96
        $region95: #{custom_clip_forward.2} parent=71 // pred_region
          %561 = dma.done [#allocation12], 32
        $region96: #{custom_clip_forward.2} parent=71 // pred_fallthru
          _
        // Predicated region
        $region97: #{custom_clip_forward.2} parent=71 // pred_check
          %p562 = pneg %p192
        $region98: #{custom_clip_forward.2} parent=71 // pred_check_branch
          %564 = sbr.rel (%p562) target = $region100
        $region99: #{custom_clip_forward.2} parent=71 // pred_region
          %566 = dma.done [#allocation12], 1024
        $region100: #{custom_clip_forward.2} parent=71 // pred_fallthru
          _
        // Predicated region
        $region101: #{custom_clip_forward.2} parent=71 // pred_check
          %p567 = pneg %p213
        $region102: #{custom_clip_forward.2} parent=71 // pred_check_branch
          %569 = sbr.rel (%p567) target = $region104
        $region103: #{custom_clip_forward.2} parent=71 // pred_region
          %571 = dma.done [#allocation15], 128
        $region104: #{custom_clip_forward.2} parent=71 // pred_fallthru
          _
        %s572 = sand.u32 %s29, 1
        %s573 = scalar_lea.sflag [#allocation4], %s572
        %s574 = sand.u32 %s232, 1
        %s575 = smul.addr %s574, 2
        %s576 = scalar_lea.vmem [#allocation16], %s575
        // Predicated region
        $region105: #{custom_clip_forward.2} parent=71 // pred_check
          %p577 = pneg %p245
        $region106: #{custom_clip_forward.2} parent=71 // pred_check_branch
          %579 = sbr.rel (%p577) target = $region108
        $region107: #{custom_clip_forward.2} parent=71 // pred_region
          %581 = dma.done %s573, 32
        $region108: #{custom_clip_forward.2} parent=71 // pred_fallthru
          _
        %s582 = sand.u32 %s29, 1
        %s583 = scalar_lea.sflag [#allocation4], %s582
        %s584 = sand.u32 %s258, 1
        %s585 = smul.addr %s584, 128
        %s586 = scalar_lea.vmem [#allocation17], %s585
        // Predicated region
        $region109: #{custom_clip_forward.2} parent=71 // pred_check
          %p587 = pneg %p271
        $region110: #{custom_clip_forward.2} parent=71 // pred_check_branch
          %589 = sbr.rel (%p587) target = $region112
        $region111: #{custom_clip_forward.2} parent=71 // pred_region
          %591 = dma.done %s583, 2048
        $region112: #{custom_clip_forward.2} parent=71 // pred_fallthru
          _
        %p592 = pneg %p45
        %p593 = pneg %p42
        %p594 = pneg %p66
        %p595 = pneg %p63
        %p596 = pneg %p87
        %p597 = pneg %p84
        %p598 = pneg %p108
        %p599 = pneg %p105
        %p600 = pneg %p129
        %p601 = pneg %p126
        %p602 = pneg %p150
        %p603 = pneg %p147
        %p604 = pneg %p171
        %p605 = pneg %p168
        %p606 = pneg %p192
        %p607 = pneg %p189
        %p608 = pneg %p213
        %p609 = pneg %p210
        %s610 = sand.u32 %s29, 1
        %s611 = scalar_lea.sflag [#allocation4], %s610
        %s612 = sand.u32 %s232, 1
        %s613 = smul.addr %s612, 2
        %s614 = scalar_lea.vmem [#allocation16], %s613
        %p615 = pneg %p245
        %p616 = pneg %p242
        %s617 = sand.u32 %s29, 1
        %s618 = scalar_lea.sflag [#allocation4], %s617
        %s619 = sand.u32 %s258, 1
        %s620 = smul.addr %s619, 128
        %s621 = scalar_lea.vmem [#allocation17], %s620
        %p622 = pneg %p271
        %p623 = pneg %p268
        %p624 = scmp.lt.s32.totalorder %s29, 11
        %s625 = scalar_select %p624, %s29, 11
        %s626 = smul.addr %s625, 32
        %s627 = smul.addr %s626, 4
        %s628 = scalar_lea.vmem %s11, %s627
        %p629 = pneg %p297
        %p630 = pneg %p294
        %p631 = scmp.lt.s32.totalorder %s29, 11
        %s632 = scalar_select %p631, %s29, 11
        %s633 = smul.addr %s632, 7
        %s634 = scalar_lea.vmem %s12, %s633
        %p635 = pneg %p323
        %p636 = pneg %p320
        %p637 = pneg %p344
        %p638 = pneg %p341
        %s639 = ssub.s32 %s29, 1
        %p640 = scmp.gt.s32.totalorder %s639, 0
        %s641 = scalar_select %p640, %s639, 0
        %p642 = scmp.lt.s32.totalorder %s29, 11
        %s643 = scalar_select %p642, %s29, 11
        %s644 = smul.addr %s643, 32
        %s645 = smul.addr %s644, 4
        %s646 = scalar_lea.vmem %s11, %s645
        %p647 = scmp.lt.s32.totalorder %s29, 11
        %s648 = scalar_select %p647, %s29, 11
        %s649 = smul.addr %s648, 7
        %s650 = scalar_lea.vmem %s12, %s649
        %p652 = scmp.eq.s32.totalorder %s29, 0
        // Predicated region
        $region113: #{custom_clip_forward.2} parent=71 // pred_check
          %p653 = pneg %p652
        $region114: #{custom_clip_forward.2} parent=71 // pred_check_branch
          %655 = sbr.rel (%p653) target = $region116
        $region115: #{custom_clip_forward.2} parent=71 // pred_region
          %v656 = vld [vmem:[%s0] sm:$0xff]
          %v657 = vld [vmem:[%s0 + $0x8] sm:$0xff]
          %v658 = vld [vmem:[%s0 + $0x10] sm:$0xff]
          %v659 = vld [vmem:[%s0 + $0x18] sm:$0xff]
          %v660 = vld [vmem:[%s0 + $0x20] sm:$0xff]
          %v661 = vld [vmem:[%s0 + $0x28] sm:$0xff]
          %v662 = vld [vmem:[#allocation3] sm:$0xff]
          %v663 = vld [vmem:[#allocation3 + $0x8] sm:$0xff]
          %v664 = vld [vmem:[#allocation3 + $0x10] sm:$0xff]
          %v665 = vld [vmem:[#allocation3 + $0x18] sm:$0xff]
          %v666 = vld [vmem:[#allocation3 + $0x20] sm:$0xff]
          %v667 = vld [vmem:[#allocation3 + $0x28] sm:$0xff]
          %v668 = vld [vmem:[#allocation3 + $0x30] sm:$0xff]
          %v669 = vld [vmem:[#allocation3 + $0x38] sm:$0xff]
          %v670 = vld [vmem:[#allocation3 + $0x40] sm:$0xff]
          %v671 = vld [vmem:[#allocation3 + $0x48] sm:$0xff]
          %v672 = vld [vmem:[#allocation3 + $0x50] sm:$0xff]
          %v673 = vld [vmem:[#allocation3 + $0x58] sm:$0xff]
          %v674 = vld [vmem:[#allocation3 + $0x60] sm:$0xff]
          %v675 = vld [vmem:[#allocation3 + $0x68] sm:$0xff]
          %v676 = vld [vmem:[#allocation3 + $0x70] sm:$0xff]
          %v677 = vld [vmem:[#allocation3 + $0x78] sm:$0xff]
          %v678 = vld [vmem:[#allocation3 + $0x80] sm:$0xff]
          %v679 = vld [vmem:[#allocation3 + $0x88] sm:$0xff]
          %v680 = vld [vmem:[#allocation3 + $0x90] sm:$0xff]
          %v681 = vld [vmem:[#allocation3 + $0x98] sm:$0xff]
          %v682 = vld [vmem:[#allocation3 + $0xa0] sm:$0xff]
          %v683 = vld [vmem:[#allocation3 + $0xa8] sm:$0xff]
          %v684 = vld [vmem:[#allocation3 + $0xb0] sm:$0xff]
          %v685 = vld [vmem:[#allocation3 + $0xb8] sm:$0xff]
          %v686 = vld [vmem:[#allocation3 + $0xc0] sm:$0xff]
          %v687 = vld [vmem:[#allocation3 + $0xc8] sm:$0xff]
          %v688 = vld [vmem:[#allocation3 + $0xd0] sm:$0xff]
          %v689 = vld [vmem:[#allocation3 + $0xd8] sm:$0xff]
          %v690 = vld [vmem:[#allocation3 + $0xe0] sm:$0xff]
          %v691 = vld [vmem:[#allocation3 + $0xe8] sm:$0xff]
          %v692 = vld [vmem:[#allocation3 + $0xf0] sm:$0xff]
          %v693 = vld [vmem:[#allocation3 + $0xf8] sm:$0xff]
          %v694 = vld [vmem:[#allocation3 + $0x100] sm:$0xff]
          %v695 = vld [vmem:[#allocation3 + $0x108] sm:$0xff]
          %v696 = vld [vmem:[#allocation3 + $0x110] sm:$0xff]
          %v697 = vld [vmem:[#allocation3 + $0x118] sm:$0xff]
          %v698 = vld [vmem:[#allocation3 + $0x120] sm:$0xff]
          %v699 = vld [vmem:[#allocation3 + $0x128] sm:$0xff]
          %v700 = vld [vmem:[#allocation3 + $0x130] sm:$0xff]
          %v701 = vld [vmem:[#allocation3 + $0x138] sm:$0xff]
          %v702 = vld [vmem:[#allocation3 + $0x140] sm:$0xff]
          %v703 = vld [vmem:[#allocation3 + $0x148] sm:$0xff]
          %v704 = vld [vmem:[#allocation3 + $0x150] sm:$0xff]
          %v705 = vld [vmem:[#allocation3 + $0x158] sm:$0xff]
          %v706 = vld [vmem:[#allocation3 + $0x160] sm:$0xff]
          %v707 = vld [vmem:[#allocation3 + $0x168] sm:$0xff]
          %v708 = vld [vmem:[#allocation3 + $0x170] sm:$0xff]
          %v709 = vld [vmem:[#allocation3 + $0x178] sm:$0xff]
          %v710 = vld [vmem:[#allocation3 + $0x180] sm:$0xff]
          %v711 = vld [vmem:[#allocation3 + $0x188] sm:$0xff]
          %v712 = vld [vmem:[#allocation3 + $0x190] sm:$0xff]
          %v713 = vld [vmem:[#allocation3 + $0x198] sm:$0xff]
          %v714 = vld [vmem:[#allocation3 + $0x1a0] sm:$0xff]
          %v715 = vld [vmem:[#allocation3 + $0x1a8] sm:$0xff]
          %v716 = vld [vmem:[#allocation3 + $0x1b0] sm:$0xff]
          %v717 = vld [vmem:[#allocation3 + $0x1b8] sm:$0xff]
          %v718 = vld [vmem:[#allocation3 + $0x1c0] sm:$0xff]
          %v719 = vld [vmem:[#allocation3 + $0x1c8] sm:$0xff]
          %v720 = vld [vmem:[#allocation3 + $0x1d0] sm:$0xff]
          %v721 = vld [vmem:[#allocation3 + $0x1d8] sm:$0xff]
          %v722 = vld [vmem:[#allocation3 + $0x1e0] sm:$0xff]
          %v723 = vld [vmem:[#allocation3 + $0x1e8] sm:$0xff]
          %v724 = vld [vmem:[#allocation3 + $0x1f0] sm:$0xff]
          %v725 = vld [vmem:[#allocation3 + $0x1f8] sm:$0xff]
          %v726 = vld [vmem:[#allocation3 + $0x200] sm:$0xff]
          %v727 = vld [vmem:[#allocation3 + $0x208] sm:$0xff]
          %v728 = vld [vmem:[#allocation3 + $0x210] sm:$0xff]
          %v729 = vld [vmem:[#allocation3 + $0x218] sm:$0xff]
          %v730 = vld [vmem:[#allocation3 + $0x220] sm:$0xff]
          %v731 = vld [vmem:[#allocation3 + $0x228] sm:$0xff]
          %v732 = vld [vmem:[#allocation3 + $0x230] sm:$0xff]
          %v733 = vld [vmem:[#allocation3 + $0x238] sm:$0xff]
          %v734 = vld [vmem:[#allocation3 + $0x240] sm:$0xff]
          %v735 = vld [vmem:[#allocation3 + $0x248] sm:$0xff]
          %v736 = vld [vmem:[#allocation3 + $0x250] sm:$0xff]
          %v737 = vld [vmem:[#allocation3 + $0x258] sm:$0xff]
          %v738 = vld [vmem:[#allocation3 + $0x260] sm:$0xff]
          %v739 = vld [vmem:[#allocation3 + $0x268] sm:$0xff]
          %v740 = vld [vmem:[#allocation3 + $0x270] sm:$0xff]
          %v741 = vld [vmem:[#allocation3 + $0x278] sm:$0xff]
          %v742 = vld [vmem:[#allocation3 + $0x280] sm:$0xff]
          %v743 = vld [vmem:[#allocation3 + $0x288] sm:$0xff]
          %v744 = vld [vmem:[#allocation3 + $0x290] sm:$0xff]
          %v745 = vld [vmem:[#allocation3 + $0x298] sm:$0xff]
          %v746 = vld [vmem:[#allocation3 + $0x2a0] sm:$0xff]
          %v747 = vld [vmem:[#allocation3 + $0x2a8] sm:$0xff]
          %v748 = vld [vmem:[#allocation3 + $0x2b0] sm:$0xff]
          %v749 = vld [vmem:[#allocation3 + $0x2b8] sm:$0xff]
          %v750 = vld [vmem:[#allocation3 + $0x2c0] sm:$0xff]
          %v751 = vld [vmem:[#allocation3 + $0x2c8] sm:$0xff]
          %v752 = vld [vmem:[#allocation3 + $0x2d0] sm:$0xff]
          %v753 = vld [vmem:[#allocation3 + $0x2d8] sm:$0xff]
          %v754 = vld [vmem:[#allocation3 + $0x2e0] sm:$0xff]
          %v755 = vld [vmem:[#allocation3 + $0x2e8] sm:$0xff]
          %v756 = vld [vmem:[#allocation3 + $0x2f0] sm:$0xff]
          %v757 = vld [vmem:[#allocation3 + $0x2f8] sm:$0xff]
          %764 = vst [vmem:[#allocation1] ss:$2 sm:$0xff] %v656
          %s765 = scalar_lea.vmem [#allocation1], 1
          %766 = vst [vmem:[%s765] ss:$2 sm:$0xff] %v659
          %s767 = scalar_lea.vmem [#allocation1], 16
          %768 = vst [vmem:[%s767] ss:$2 sm:$0xff] %v657
          %s769 = scalar_lea.vmem [#allocation1], 17
          %770 = vst [vmem:[%s769] ss:$2 sm:$0xff] %v660
          %s771 = scalar_lea.vmem [#allocation1], 32
          %772 = vst [vmem:[%s771] ss:$2 sm:$0xff] %v658
          %s773 = scalar_lea.vmem [#allocation1], 33
          %774 = vst [vmem:[%s773] ss:$2 sm:$0xff] %v661
          %v775 = vld.sshfl [vmem:[#allocation1] sm:$0xff pattern:$0x75316420]
          %v776 = vld.sshfl [vmem:[#allocation1 + $0x8] sm:$0xff pattern:$0x75316420]
          %v777 = vld.sshfl [vmem:[#allocation1 + $0x10] sm:$0xff pattern:$0x75316420]
          %v778 = vld.sshfl [vmem:[#allocation1 + $0x18] sm:$0xff pattern:$0x75316420]
          %v779 = vld.sshfl [vmem:[#allocation1 + $0x20] sm:$0xff pattern:$0x75316420]
          %v780 = vld.sshfl [vmem:[#allocation1 + $0x28] sm:$0xff pattern:$0x75316420]
          %v787 = vpack.c.bf16 %v775, %v775
          %v788 = vpack.c.bf16 %v776, %v776
          %v789 = vpack.c.bf16 %v777, %v777
          %v790 = vpack.c.bf16 %v778, %v778
          %v791 = vpack.c.bf16 %v779, %v779
          %v792 = vpack.c.bf16 %v780, %v780
          %v793 = vpack.c.bf16 %v663, %v662
          %v794 = vpack.c.bf16 %v665, %v664
          %v795 = vpack.c.bf16 %v667, %v666
          %v796 = vpack.c.bf16 %v669, %v668
          %v797 = vpack.c.bf16 %v671, %v670
          %v798 = vpack.c.bf16 %v673, %v672
          %v799 = vpack.c.bf16 %v675, %v674
          %v800 = vpack.c.bf16 %v677, %v676
          %v801 = vpack.c.bf16 %v679, %v678
          %v802 = vpack.c.bf16 %v681, %v680
          %v803 = vpack.c.bf16 %v683, %v682
          %v804 = vpack.c.bf16 %v685, %v684
          %v805 = vpack.c.bf16 %v687, %v686
          %v806 = vpack.c.bf16 %v689, %v688
          %v807 = vpack.c.bf16 %v691, %v690
          %v808 = vpack.c.bf16 %v693, %v692
          %v809 = vpack.c.bf16 %v695, %v694
          %v810 = vpack.c.bf16 %v697, %v696
          %v811 = vpack.c.bf16 %v699, %v698
          %v812 = vpack.c.bf16 %v701, %v700
          %v813 = vpack.c.bf16 %v703, %v702
          %v814 = vpack.c.bf16 %v705, %v704
          %v815 = vpack.c.bf16 %v707, %v706
          %v816 = vpack.c.bf16 %v709, %v708
          %v817 = vpack.c.bf16 %v711, %v710
          %v818 = vpack.c.bf16 %v713, %v712
          %v819 = vpack.c.bf16 %v715, %v714
          %v820 = vpack.c.bf16 %v717, %v716
          %v821 = vpack.c.bf16 %v719, %v718
          %v822 = vpack.c.bf16 %v721, %v720
          %v823 = vpack.c.bf16 %v723, %v722
          %v824 = vpack.c.bf16 %v725, %v724
          %v825 = vpack.c.bf16 %v727, %v726
          %v826 = vpack.c.bf16 %v729, %v728
          %v827 = vpack.c.bf16 %v731, %v730
          %v828 = vpack.c.bf16 %v733, %v732
          %v829 = vpack.c.bf16 %v735, %v734
          %v830 = vpack.c.bf16 %v737, %v736
          %v831 = vpack.c.bf16 %v739, %v738
          %v832 = vpack.c.bf16 %v741, %v740
          %v833 = vpack.c.bf16 %v743, %v742
          %v834 = vpack.c.bf16 %v745, %v744
          %v835 = vpack.c.bf16 %v747, %v746
          %v836 = vpack.c.bf16 %v749, %v748
          %v837 = vpack.c.bf16 %v751, %v750
          %v838 = vpack.c.bf16 %v753, %v752
          %v839 = vpack.c.bf16 %v755, %v754
          %v840 = vpack.c.bf16 %v757, %v756
          %841 = vmatpush.bf16.msra.mxu0 %v800
          %842 = vmatpush.bf16.msra.mxu0 %v799
          %843 = vmatpush.bf16.msra.mxu0 %v798
          %844 = vmatpush.bf16.msra.mxu0 %v797
          %845 = vmatpush.bf16.msra.mxu0 %v796
          %846 = vmatpush.bf16.msra.mxu0 %v795
          %847 = vmatpush.bf16.msra.mxu0 %v794
          %848 = vmatpush.bf16.msra.mxu0 %v793
          %849 = vmatmul.bf16.gmra.mxu0 %v787
          %v850 = vpop.f32.mrf.mxu0
          %v851 = vadd.f32 0.0, %v850
          %v852 = vpop.f32.mrf.mxu0
          %853 = vdwg.mxu0
          %854 = vmatpush.bf16.msra.mxu0 %v808
          %855 = vmatpush.bf16.msra.mxu0 %v807
          %856 = vmatpush.bf16.msra.mxu0 %v806
          %857 = vmatpush.bf16.msra.mxu0 %v805
          %858 = vmatpush.bf16.msra.mxu0 %v804
          %859 = vmatpush.bf16.msra.mxu0 %v803
          %860 = vmatpush.bf16.msra.mxu0 %v802
          %861 = vmatpush.bf16.msra.mxu0 %v801
          %862 = vmatmul.bf16.gmra.mxu0 %v788
          %v863 = vpop.f32.mrf.mxu0
          %v864 = vadd.f32 %v851, %v863
          %v865 = vpop.f32.mrf.mxu0
          %866 = vdwg.mxu0
          %867 = vmatpush.bf16.msra.mxu0 %v816
          %868 = vmatpush.bf16.msra.mxu0 %v815
          %869 = vmatpush.bf16.msra.mxu0 %v814
          %870 = vmatpush.bf16.msra.mxu0 %v813
          %871 = vmatpush.bf16.msra.mxu0 %v812
          %872 = vmatpush.bf16.msra.mxu0 %v811
          %873 = vmatpush.bf16.msra.mxu0 %v810
          %874 = vmatpush.bf16.msra.mxu0 %v809
          %875 = vmatmul.bf16.gmra.mxu0 %v789
          %v876 = vpop.f32.mrf.mxu0
          %v877 = vadd.f32 %v864, %v876
          %v878 = vpop.f32.mrf.mxu0
          %879 = vdwg.mxu0
          %880 = vmatpush.bf16.msra.mxu0 %v824
          %881 = vmatpush.bf16.msra.mxu0 %v823
          %882 = vmatpush.bf16.msra.mxu0 %v822
          %883 = vmatpush.bf16.msra.mxu0 %v821
          %884 = vmatpush.bf16.msra.mxu0 %v820
          %885 = vmatpush.bf16.msra.mxu0 %v819
          %886 = vmatpush.bf16.msra.mxu0 %v818
          %887 = vmatpush.bf16.msra.mxu0 %v817
          %888 = vmatmul.bf16.gmra.mxu0 %v790
          %v889 = vpop.f32.mrf.mxu0
          %v890 = vadd.f32 %v877, %v889
          %v891 = vpop.f32.mrf.mxu0
          %892 = vdwg.mxu0
          %893 = vmatpush.bf16.msra.mxu0 %v832
          %894 = vmatpush.bf16.msra.mxu0 %v831
          %895 = vmatpush.bf16.msra.mxu0 %v830
          %896 = vmatpush.bf16.msra.mxu0 %v829
          %897 = vmatpush.bf16.msra.mxu0 %v828
          %898 = vmatpush.bf16.msra.mxu0 %v827
          %899 = vmatpush.bf16.msra.mxu0 %v826
          %900 = vmatpush.bf16.msra.mxu0 %v825
          %901 = vmatmul.bf16.gmra.mxu0 %v791
          %v902 = vpop.f32.mrf.mxu0
          %v903 = vadd.f32 %v890, %v902
          %v904 = vpop.f32.mrf.mxu0
          %905 = vdwg.mxu0
          %906 = vmatpush.bf16.msra.mxu0 %v840
          %907 = vmatpush.bf16.msra.mxu0 %v839
          %908 = vmatpush.bf16.msra.mxu0 %v838
          %909 = vmatpush.bf16.msra.mxu0 %v837
          %910 = vmatpush.bf16.msra.mxu0 %v836
          %911 = vmatpush.bf16.msra.mxu0 %v835
          %912 = vmatpush.bf16.msra.mxu0 %v834
          %913 = vmatpush.bf16.msra.mxu0 %v833
          %914 = vmatmul.bf16.gmra.mxu0 %v792
          %v915 = vpop.f32.mrf.mxu0
          %v916 = vadd.f32 %v903, %v915
          %v917 = vpop.f32.mrf.mxu0
          %918 = vdwg.mxu0
          %v920 = vrot.slane %v916, 4
          %v921 = vld [vmem:[#allocation5] sm:$0x1]
          %922 = vst [vmem:[#allocation1] ss:$2 sm:$0xff] %v916
          %v923 = vld.sshfl [vmem:[#allocation1] sm:$0xff pattern:$0x75316420]
          %s924 = scalar_lea.vmem [#allocation1], 16
          %925 = vst [vmem:[%s924] ss:$2 sm:$0xff] %v920
          %v926 = vld.sshfl [vmem:[#allocation1 + $0x10] sm:$0xff pattern:$0x75316420]
          %v927 = vrot.slane %v923, 7
          %v928 = vrot.slane %v926, 7
          %vm931 = vcmask 1040384
          %v932 = vsel %vm931, %v921, %v927
          %v933 = vsel %vm931, %v921, %v928
          %v934 = vld [vmem:[#allocation7] sm:$0x1f]
          %v935 = vadd.f32 %v932, %v934
          %v936 = vadd.f32 %v933, %v934
          %v937 = vld [vmem:[#allocation8] sm:$0x1]
          %v938 = vld [vmem:[#allocation8 + $0x1] sm:$0x1]
          %vm939 = vcmask 520192
          %v940 = vsel %vm939, %v935, 0.0
          %941 = vadd.xlane.f32.xlu0 %v940
          %v942 = vpop.xlane.xlu0 %941
          %v943 = vsel %vm939, %v936, 0.0
          %944 = vadd.xlane.f32.xlu0 %v943
          %v945 = vpop.xlane.xlu0 %944
          %v946 = vrcp.pop 64.0
          %v947 = vmul.f32 64.0, %v946
          %v948 = vsub.f32 1.0, %v947
          %v949 = vmul.f32 %v946, %v948
          %v950 = vadd.f32 %v946, %v949
          %vm951 = vweird.f32 %v946
          %v952 = vsel %vm951, %v946, %v950
          %v953 = vmul.f32 %v942, %v952
          %v954 = vmul.f32 %v945, %v952
          %v955 = vsub.f32 %v935, %v953
          %v956 = vsub.f32 %v936, %v954
          %v957 = vmul.f32 %v955, %v955
          %v958 = vmul.f32 %v956, %v956
          %v959 = vsel %vm939, %v957, 0.0
          %960 = vadd.xlane.f32.xlu0 %v959
          %v961 = vpop.xlane.xlu0 %960
          %v962 = vsel %vm939, %v958, 0.0
          %963 = vadd.xlane.f32.xlu0 %v962
          %v964 = vpop.xlane.xlu0 %963
          %v965 = vmul.f32 %v961, %v952
          %v966 = vmul.f32 %v964, %v952
          %v967 = vadd.f32 %v965, 1e-05
          %v968 = vadd.f32 %v966, 1e-05
          %v969 = vrsqrt.pop %v967
          %v970 = vmul.f32 %v969, %v967
          %v971 = vmul.f32 %v970, %v969
          %v972 = vmul.f32 0.5, %v971
          %v973 = vsub.f32 1.5, %v972
          %v974 = vmul.f32 %v969, %v973
          %vm975 = vweird.f32 %v967
          %vm976 = vweird.f32 %v969
          %vm977 = vmor %vm975, %vm976
          %v978 = vsel %vm977, %v969, %v974
          %v979 = vrsqrt.pop %v968
          %v980 = vmul.f32 %v979, %v968
          %v981 = vmul.f32 %v980, %v979
          %v982 = vmul.f32 0.5, %v981
          %v983 = vsub.f32 1.5, %v982
          %v984 = vmul.f32 %v979, %v983
          %vm985 = vweird.f32 %v968
          %vm986 = vweird.f32 %v979
          %vm987 = vmor %vm985, %vm986
          %v988 = vsel %vm987, %v979, %v984
          %v989 = vmul.f32 %v955, %v978
          %v990 = vmul.f32 %v956, %v988
          %v991 = vperm.slane %v937, 0
          %v992 = vmul.f32 %v989, %v991
          %v993 = vmul.f32 %v990, %v991
          %v994 = vperm.slane %v938, 0
          %v995 = vadd.f32 %v992, %v994
          %v996 = vadd.f32 %v993, %v994
          %v997 = vld [vmem:[#allocation10] sm:$0x3]
          %v999 = vrot.slane %v997, 7
          %v1003 = vrot.slane %v995, 6
          %v1004 = vrot.slane %v996, 6
          %v1007 = vsel %vm931, %v995, %v999
          %v1008 = vsel %vm931, %v996, %v999
          %vm1009 = vcmask 1042432
          %v1010 = vsel %vm1009, %v1007, %v1003
          %v1011 = vsel %vm1009, %v1008, %v1004
          %vm1012 = vcmask 1046528
          %v1013 = vsel %vm1012, %v1010, 0.0
          %v1014 = vsel %vm1012, %v1011, 0.0
          %vm1015 = vcmask 523264
          %1016 = vst.msk [vmem:[#allocation2] sm:$0xff] %vm1015, %v1013
          %1017 = vst.msk [vmem:[#allocation2 + $0x8] sm:$0xff] %vm1015, %v1014
        $region116: #{custom_clip_forward.2} parent=71 // pred_fallthru
          _
        %p1018 = scmp.gt.s32.totalorder %s29, 0
        %p1019 = scmp.le.s32.totalorder %s29, 11
        %p1020 = pnand %p1018, %p1019
        %p1021 = pneg %p1020
        // Predicated region
        $region117: #{custom_clip_forward.2} parent=71 // pred_check
          _
        $region118: #{custom_clip_forward.2} parent=71 // pred_check_branch
          %1023 = sbr.rel (%p1020) target = $region120
        $region119: #{custom_clip_forward.2} parent=71 // pred_region
          %v1024 = vld [vmem:[%s576] sm:$0x3]
          %v1026 = vrot.slane %v1024, 7
          %vm1028 = vcmask 1040384
          %v1029 = vsel %vm1028, 0.0, %v1026
          %vm1030 = vcmask 1042432
          %v1031 = vsel %vm1030, %v1029, 0.0
          %v1032 = vlaneseq
          %v1033 = vshrl.u32 %v1032, 7
          %vm1034 = vcmp.lt.s32.totalorder %v1033, 1
          %vm1035 = vcmp.ge.s32.totalorder %v1033, 3
          %vm1036 = vmor %vm1034, %vm1035
          %v1037 = vld [vmem:[#allocation2] sm:$0xff]
          %v1038 = vld [vmem:[#allocation2 + $0x8] sm:$0xff]
          %v1039 = vsel %vm1036, 1, 0
          %vm1040 = vcmp.eq.s32.totalorder %v1039, 1
          %v1041 = vsel %vm1040, %v1037, %v1031
          %v1042 = vsel %vm1040, %v1038, %v1031
          %vm1043 = vcmask 523264
          %1044 = vst.msk [vmem:[#allocation2] sm:$0xff] %vm1043, %v1041
          %1045 = vst.msk [vmem:[#allocation2 + $0x8] sm:$0xff] %vm1043, %v1042
        $region120: #{custom_clip_forward.2} parent=71 // pred_fallthru
          _
        %v1046 = vld [vmem:[#allocation2] sm:$0xff]
        %v1047 = vld [vmem:[#allocation2 + $0x8] sm:$0xff]
        %v1048 = vld [vmem:[#allocation14] sm:$0xff]
        %v1049 = vld [vmem:[%s650] sm:$0x7f]
        %v1050 = vld [vmem:[%s586] sm:$0xff]
        %v1051 = vld [vmem:[%s586 + $0x10] sm:$0xff]
        %v1052 = vld [vmem:[%s586 + $0x20] sm:$0xff]
        %v1053 = vld [vmem:[%s586 + $0x30] sm:$0xff]
        %v1054 = vld [vmem:[%s586 + $0x40] sm:$0xff]
        %v1055 = vld [vmem:[%s586 + $0x50] sm:$0xff]
        %v1056 = vld [vmem:[%s586 + $0x60] sm:$0xff]
        %v1057 = vld [vmem:[%s586 + $0x70] sm:$0xff]
        %v1058 = vld [vmem:[%s586 + $0x4] sm:$0xf]
        %v1059 = vld [vmem:[%s586 + $0x14] sm:$0xf]
        %v1060 = vld [vmem:[%s586 + $0x24] sm:$0xf]
        %v1061 = vld [vmem:[%s586 + $0x34] sm:$0xf]
        %v1062 = vld [vmem:[%s586 + $0x44] sm:$0xf]
        %v1063 = vld [vmem:[%s586 + $0x54] sm:$0xf]
        %v1064 = vld [vmem:[%s586 + $0x64] sm:$0xf]
        %v1065 = vld [vmem:[%s586 + $0x74] sm:$0xf]
        %v1066 = vld [vmem:[%s586 + $0x8] sm:$0xff]
        %v1067 = vld [vmem:[%s586 + $0x18] sm:$0xff]
        %v1068 = vld [vmem:[%s586 + $0x28] sm:$0xff]
        %v1069 = vld [vmem:[%s586 + $0x38] sm:$0xff]
        %v1070 = vld [vmem:[%s586 + $0x48] sm:$0xff]
        %v1071 = vld [vmem:[%s586 + $0x58] sm:$0xff]
        %v1072 = vld [vmem:[%s586 + $0x68] sm:$0xff]
        %v1073 = vld [vmem:[%s586 + $0x78] sm:$0xff]
        %v1074 = vld [vmem:[%s646] sm:$0xf]
        %v1075 = vld [vmem:[%s646 + $0x4] sm:$0xf]
        %v1076 = vld [vmem:[%s646 + $0x8] sm:$0xf]
        %v1077 = vld [vmem:[%s646 + $0xc] sm:$0xf]
        %v1078 = vld [vmem:[%s646 + $0x10] sm:$0xf]
        %v1079 = vld [vmem:[%s646 + $0x14] sm:$0xf]
        %v1080 = vld [vmem:[%s646 + $0x18] sm:$0xf]
        %v1081 = vld [vmem:[%s646 + $0x1c] sm:$0xf]
        %v1082 = vld [vmem:[%s646 + $0x20] sm:$0xf]
        %v1083 = vld [vmem:[%s646 + $0x24] sm:$0xf]
        %v1084 = vld [vmem:[%s646 + $0x28] sm:$0xf]
        %v1085 = vld [vmem:[%s646 + $0x2c] sm:$0xf]
        %v1086 = vld [vmem:[%s646 + $0x30] sm:$0xf]
        %v1087 = vld [vmem:[%s646 + $0x34] sm:$0xf]
        %v1088 = vld [vmem:[%s646 + $0x38] sm:$0xf]
        %v1089 = vld [vmem:[%s646 + $0x3c] sm:$0xf]
        %v1090 = vld [vmem:[%s646 + $0x40] sm:$0xf]
        %v1091 = vld [vmem:[%s646 + $0x44] sm:$0xf]
        %v1092 = vld [vmem:[%s646 + $0x48] sm:$0xf]
        %v1093 = vld [vmem:[%s646 + $0x4c] sm:$0xf]
        %v1094 = vld [vmem:[%s646 + $0x50] sm:$0xf]
        %v1095 = vld [vmem:[%s646 + $0x54] sm:$0xf]
        %v1096 = vld [vmem:[%s646 + $0x58] sm:$0xf]
        %v1097 = vld [vmem:[%s646 + $0x5c] sm:$0xf]
        %v1098 = vld [vmem:[%s646 + $0x60] sm:$0xf]
        %v1099 = vld [vmem:[%s646 + $0x64] sm:$0xf]
        %v1100 = vld [vmem:[%s646 + $0x68] sm:$0xf]
        %v1101 = vld [vmem:[%s646 + $0x6c] sm:$0xf]
        %v1102 = vld [vmem:[%s646 + $0x70] sm:$0xf]
        %v1103 = vld [vmem:[%s646 + $0x74] sm:$0xf]
        %v1104 = vld [vmem:[%s646 + $0x78] sm:$0xf]
        %v1105 = vld [vmem:[%s646 + $0x7c] sm:$0xf]
        %vm1106 = vcmask 523264
        %v1107 = vsel %vm1106, %v1046, 0.0
        %1108 = vadd.xlane.f32.xlu0 %v1107
        %v1109 = vpop.xlane.xlu0 %1108
        %v1110 = vsel %vm1106, %v1047, 0.0
        %1111 = vadd.xlane.f32.xlu0 %v1110
        %v1112 = vpop.xlane.xlu0 %1111
        %v1113 = vrcp.pop 64.0
        %v1114 = vmul.f32 64.0, %v1113
        %v1115 = vsub.f32 1.0, %v1114
        %v1116 = vmul.f32 %v1113, %v1115
        %v1117 = vadd.f32 %v1113, %v1116
        %vm1118 = vweird.f32 %v1113
        %v1119 = vsel %vm1118, %v1113, %v1117
        %v1120 = vmul.f32 %v1109, %v1119
        %v1121 = vmul.f32 %v1112, %v1119
        %v1122 = vsub.f32 %v1046, %v1120
        %v1123 = vsub.f32 %v1047, %v1121
        %v1124 = vmul.f32 %v1122, %v1122
        %v1125 = vmul.f32 %v1123, %v1123
        %v1126 = vsel %vm1106, %v1124, 0.0
        %1127 = vadd.xlane.f32.xlu0 %v1126
        %v1128 = vpop.xlane.xlu0 %1127
        %v1129 = vsel %vm1106, %v1125, 0.0
        %1130 = vadd.xlane.f32.xlu0 %v1129
        %v1131 = vpop.xlane.xlu0 %1130
        %v1132 = vmul.f32 %v1128, %v1119
        %v1133 = vmul.f32 %v1131, %v1119
        %v1134 = vadd.f32 %v1132, 1e-05
        %v1135 = vadd.f32 %v1133, 1e-05
        %v1136 = vrsqrt.pop %v1134
        %v1137 = vmul.f32 %v1136, %v1134
        %v1138 = vmul.f32 %v1137, %v1136
        %v1139 = vmul.f32 0.5, %v1138
        %v1140 = vsub.f32 1.5, %v1139
        %v1141 = vmul.f32 %v1136, %v1140
        %vm1142 = vweird.f32 %v1134
        %vm1143 = vweird.f32 %v1136
        %vm1144 = vmor %vm1142, %vm1143
        %v1145 = vsel %vm1144, %v1136, %v1141
        %v1146 = vrsqrt.pop %v1135
        %v1147 = vmul.f32 %v1146, %v1135
        %v1148 = vmul.f32 %v1147, %v1146
        %v1149 = vmul.f32 0.5, %v1148
        %v1150 = vsub.f32 1.5, %v1149
        %v1151 = vmul.f32 %v1146, %v1150
        %vm1152 = vweird.f32 %v1135
        %vm1153 = vweird.f32 %v1146
        %vm1154 = vmor %vm1152, %vm1153
        %v1155 = vsel %vm1154, %v1146, %v1151
        %v1156 = vmul.f32 %v1122, %v1145
        %v1157 = vmul.f32 %v1123, %v1155
        %v1159 = vperm.slane %v1049, 0
        %v1161 = vmul.f32 %v1156, %v1159
        %v1162 = vmul.f32 %v1157, %v1159
        %1163 = vrot.lane.b32.xlu0 %v1159, 64
        %v1164 = vpop.permute.xlu0 %1163
        %v1166 = vadd.f32 %v1161, %v1164
        %v1167 = vadd.f32 %v1162, %v1164
        %v1168 = vpack.c.bf16 %v1167, %v1166
        %v1177 = vunpack.c.l.b16 %v1050
        %v1178 = vunpack.c.h.b16 %v1050
        %v1179 = vunpack.c.l.b16 %v1051
        %v1180 = vunpack.c.h.b16 %v1051
        %v1181 = vunpack.c.l.b16 %v1052
        %v1182 = vunpack.c.h.b16 %v1052
        %v1183 = vunpack.c.l.b16 %v1053
        %v1184 = vunpack.c.h.b16 %v1053
        %v1185 = vunpack.c.l.b16 %v1054
        %v1186 = vunpack.c.h.b16 %v1054
        %v1187 = vunpack.c.l.b16 %v1055
        %v1188 = vunpack.c.h.b16 %v1055
        %v1189 = vunpack.c.l.b16 %v1056
        %v1190 = vunpack.c.h.b16 %v1056
        %v1191 = vunpack.c.l.b16 %v1057
        %v1192 = vunpack.c.h.b16 %v1057
        %v1193 = vpack.c.b16 %v1179, %v1177
        %v1194 = vpack.c.b16 %v1180, %v1178
        %v1195 = vpack.c.b16 %v1183, %v1181
        %v1196 = vpack.c.b16 %v1184, %v1182
        %v1197 = vpack.c.b16 %v1187, %v1185
        %v1198 = vpack.c.b16 %v1188, %v1186
        %v1199 = vpack.c.b16 %v1191, %v1189
        %v1200 = vpack.c.b16 %v1192, %v1190
        %v1210 = vsel %vm1106, %v1168, 0
        %1212 = vmatpush.bf16.msra.mxu0 0
        %1213 = vmatpush.bf16.msra.mxu0 0
        %1214 = vmatpush.bf16.msra.mxu0 0
        %1215 = vmatpush.bf16.msra.mxu0 0
        %1216 = vmatpush.bf16.msra.mxu0 %v1199
        %1217 = vmatpush.bf16.msra.mxu0 %v1197
        %1218 = vmatpush.bf16.msra.mxu0 %v1195
        %1219 = vmatpush.bf16.msra.mxu0 %v1193
        %1220 = vmatmul.bf16.gmra.mxu0 %v1210
        %v1221 = vpop.f32.mrf.mxu0
        %v1222 = vadd.f32 0.0, %v1221
        %v1223 = vpop.f32.mrf.mxu0
        %v1224 = vadd.f32 0.0, %v1223
        %1225 = vdwg.mxu0
        %1226 = vmatpush.bf16.msra.mxu0 0
        %1227 = vmatpush.bf16.msra.mxu0 0
        %1228 = vmatpush.bf16.msra.mxu0 0
        %1229 = vmatpush.bf16.msra.mxu0 0
        %1230 = vmatpush.bf16.msra.mxu0 %v1200
        %1231 = vmatpush.bf16.msra.mxu0 %v1198
        %1232 = vmatpush.bf16.msra.mxu0 %v1196
        %1233 = vmatpush.bf16.msra.mxu0 %v1194
        %1234 = vmatmul.bf16.gmra.mxu0 %v1210
        %v1235 = vpop.f32.mrf.mxu0
        %v1236 = vadd.f32 0.0, %v1235
        %v1237 = vpop.f32.mrf.mxu0
        %v1238 = vadd.f32 0.0, %v1237
        %1239 = vdwg.mxu0
        %v1240 = vrot.slane %v1049, 1
        %v1241 = vperm.slane %v1240, 0
        %v1242 = vperm.slane %v1240, 1
        %v1245 = vadd.f32 %v1222, %v1241
        %v1246 = vadd.f32 %v1236, %v1242
        %v1247 = vadd.f32 %v1224, %v1241
        %v1248 = vadd.f32 %v1238, %v1242
        %v1249 = vmul.f32 %v1245, 0.25
        %v1250 = vmul.f32 %v1247, 0.25
        %v1251 = vpack.c.bf16 %v1249, %v1249
        %v1252 = vpack.c.bf16 %v1250, %v1250
        %v1253 = vpack.c.bf16 %v1245, %v1245
        %v1254 = vpack.c.bf16 %v1247, %v1247
        %v1256 = vunpack.c.l.b16 %v1253
        %v1257 = vpack.c.b16 %v1256, %v1256
        %1258 = vrot.lane.b32.xlu0 %v1257, 64
        %v1259 = vpop.permute.xlu0 %1258
        %vm1260 = vcmask 130048
        %v1262 = vsel %vm1260, %v1251, 0
        %v1265 = vsel %vm1260, %v1259, 0
        %1267 = vmatpush.bf16.xpose.msra.mxu0 0
        %1268 = vmatpush.bf16.xpose.msra.mxu0 0
        %1269 = vmatpush.bf16.xpose.msra.mxu0 0
        %1270 = vmatpush.bf16.xpose.msra.mxu0 0
        %1271 = vmatpush.bf16.xpose.msra.mxu0 0
        %1272 = vmatpush.bf16.xpose.msra.mxu0 0
        %1273 = vmatpush.bf16.xpose.msra.mxu0 0
        %1274 = vmatpush.bf16.xpose.msra.mxu0 %v1265
        %1275 = vmatmul.bf16.gmra.mxu0 %v1262
        %v1276 = vpop.f32.mrf.mxu0
        %v1277 = vadd.f32 %v1048, %v1276
        %v1278 = vpop.f32.mrf.mxu0
        %1279 = vdwg.mxu0
        %v1281 = vunpack.c.l.b16 %v1254
        %v1282 = vpack.c.b16 %v1281, %v1281
        %1283 = vrot.lane.b32.xlu0 %v1282, 64
        %v1284 = vpop.permute.xlu0 %1283
        %v1286 = vsel %vm1260, %v1252, 0
        %v1289 = vsel %vm1260, %v1284, 0
        %1291 = vmatpush.bf16.xpose.msra.mxu0 0
        %1292 = vmatpush.bf16.xpose.msra.mxu0 0
        %1293 = vmatpush.bf16.xpose.msra.mxu0 0
        %1294 = vmatpush.bf16.xpose.msra.mxu0 0
        %1295 = vmatpush.bf16.xpose.msra.mxu0 0
        %1296 = vmatpush.bf16.xpose.msra.mxu0 0
        %1297 = vmatpush.bf16.xpose.msra.mxu0 0
        %1298 = vmatpush.bf16.xpose.msra.mxu0 %v1289
        %1299 = vmatmul.bf16.gmra.mxu0 %v1286
        %v1300 = vpop.f32.mrf.mxu0
        %v1301 = vadd.f32 %v1048, %v1300
        %v1302 = vpop.f32.mrf.mxu0
        %1303 = vdwg.mxu0
        %vm1304 = vcmask 64512
        %v1305 = vsel %vm1304, %v1277, -inf
        %1306 = vmax.xlane.f32.xlu0 %v1305
        %v1307 = vpop.xlane.xlu0 %1306
        %v1308 = vsel %vm1304, %v1301, -inf
        %1309 = vmax.xlane.f32.xlu0 %v1308
        %v1310 = vpop.xlane.xlu0 %1309
        %v1311 = vsub.f32 %v1277, %v1307
        %v1312 = vsub.f32 %v1301, %v1310
        %v1313 = vmul.f32 %v1311, 1.442695
        %v1314 = vpow.pop %v1313
        %v1315 = vmul.f32 %v1312, 1.442695
        %v1316 = vpow.pop %v1315
        %v1317 = vsel %vm1304, %v1314, 0.0
        %1318 = vadd.xlane.f32.xlu0 %v1317
        %v1319 = vpop.xlane.xlu0 %1318
        %v1320 = vsel %vm1304, %v1316, 0.0
        %1321 = vadd.xlane.f32.xlu0 %v1320
        %v1322 = vpop.xlane.xlu0 %1321
        %v1323 = vrcp.pop %v1319
        %v1324 = vmul.f32 %v1319, %v1323
        %v1325 = vsub.f32 1.0, %v1324
        %v1326 = vmul.f32 %v1323, %v1325
        %v1327 = vadd.f32 %v1323, %v1326
        %vm1328 = vweird.f32 %v1319
        %vm1329 = vweird.f32 %v1323
        %vm1330 = vmor %vm1328, %vm1329
        %v1331 = vsel %vm1330, %v1323, %v1327
        %v1332 = vand.u32 2147483647, %v1319
        %vm1333 = vcmp.eq.f32.partialorder %v1332, 8.507059e+37
        %v1334 = vand.u32 %v1319, 2147483648
        %v1335 = vor.u32 1.1754944e-38, %v1334
        %v1336 = vsel %vm1333, %v1335, %v1331
        %v1337 = vmul.f32 %v1314, %v1336
        %v1338 = vrcp.pop %v1322
        %v1339 = vmul.f32 %v1322, %v1338
        %v1340 = vsub.f32 1.0, %v1339
        %v1341 = vmul.f32 %v1338, %v1340
        %v1342 = vadd.f32 %v1338, %v1341
        %vm1343 = vweird.f32 %v1322
        %vm1344 = vweird.f32 %v1338
        %vm1345 = vmor %vm1343, %vm1344
        %v1346 = vsel %vm1345, %v1338, %v1342
        %v1347 = vand.u32 2147483647, %v1322
        %vm1348 = vcmp.eq.f32.partialorder %v1347, 8.507059e+37
        %v1349 = vand.u32 %v1322, 2147483648
        %v1350 = vor.u32 1.1754944e-38, %v1349
        %v1351 = vsel %vm1348, %v1350, %v1346
        %v1352 = vmul.f32 %v1316, %v1351
        %v1353 = vpack.c.bf16 %v1337, %v1337
        %v1354 = vpack.c.bf16 %v1352, %v1352
        %v1355 = vpack.c.bf16 %v1246, %v1246
        %v1356 = vpack.c.bf16 %v1248, %v1248
        %v1358 = vsel %vm1304, %v1353, 0
        %vm1360 = vcmask 1043456
        %v1362 = vsel %vm1360, %v1355, 0
        %1364 = vmatpush.bf16.msra.mxu0 0
        %1365 = vmatpush.bf16.msra.mxu0 0
        %1366 = vmatpush.bf16.msra.mxu0 0
        %1367 = vmatpush.bf16.msra.mxu0 0
        %1368 = vmatpush.bf16.msra.mxu0 0
        %1369 = vmatpush.bf16.msra.mxu0 0
        %1370 = vmatpush.bf16.msra.mxu0 0
        %1371 = vmatpush.bf16.msra.mxu0 %v1362
        %1372 = vmatmul.bf16.gmra.mxu0 %v1358
        %v1373 = vpop.f32.mrf.mxu0
        %v1374 = vadd.f32 0.0, %v1373
        %v1375 = vpop.f32.mrf.mxu0
        %1376 = vdwg.mxu0
        %v1378 = vsel %vm1304, %v1354, 0
        %v1381 = vsel %vm1360, %v1356, 0
        %1383 = vmatpush.bf16.msra.mxu0 0
        %1384 = vmatpush.bf16.msra.mxu0 0
        %1385 = vmatpush.bf16.msra.mxu0 0
        %1386 = vmatpush.bf16.msra.mxu0 0
        %1387 = vmatpush.bf16.msra.mxu0 0
        %1388 = vmatpush.bf16.msra.mxu0 0
        %1389 = vmatpush.bf16.msra.mxu0 0
        %1390 = vmatpush.bf16.msra.mxu0 %v1381
        %1391 = vmatmul.bf16.gmra.mxu0 %v1378
        %v1392 = vpop.f32.mrf.mxu0
        %v1393 = vadd.f32 0.0, %v1392
        %v1394 = vpop.f32.mrf.mxu0
        %1395 = vdwg.mxu0
        %v1396 = vpack.c.bf16 %v1393, %v1374
        %v1399 = vunpack.c.l.b16 %v1058
        %v1400 = vunpack.c.l.b16 %v1059
        %v1401 = vpack.c.b16 %v1400, %v1399
        %1402 = vrot.lane.b32.xlu0 %v1401, 64
        %v1403 = vpop.permute.xlu0 %1402
        %v1406 = vsel %vm1260, %v1396, 0
        %1408 = vmatpush.bf16.msra.mxu0 0
        %1409 = vmatpush.bf16.msra.mxu0 0
        %1410 = vmatpush.bf16.msra.mxu0 0
        %1411 = vmatpush.bf16.msra.mxu0 0
        %1412 = vmatpush.bf16.msra.mxu0 0
        %1413 = vmatpush.bf16.msra.mxu0 0
        %1414 = vmatpush.bf16.msra.mxu0 0
        %1415 = vmatpush.bf16.msra.mxu0 %v1403
        %1416 = vmatmul.bf16.gmra.mxu0 %v1406
        %v1417 = vpop.f32.mrf.mxu0
        %v1418 = vadd.f32 0.0, %v1417
        %v1419 = vpop.f32.mrf.mxu0
        %v1420 = vadd.f32 0.0, %v1419
        %1421 = vdwg.mxu0
        %v1423 = vunpack.c.l.b16 %v1251
        %v1424 = vpack.c.b16 %v1423, %v1423
        %1425 = vrot.lane.b32.xlu0 %v1424, 112
        %v1426 = vpop.permute.xlu0 %1425
        %1427 = vrot.lane.b32.xlu0 %v1257, 48
        %v1428 = vpop.permute.xlu0 %1427
        %v1430 = vsel %vm1260, %v1426, 0
        %v1433 = vsel %vm1260, %v1428, 0
        %1435 = vmatpush.bf16.xpose.msra.mxu0 0
        %1436 = vmatpush.bf16.xpose.msra.mxu0 0
        %1437 = vmatpush.bf16.xpose.msra.mxu0 0
        %1438 = vmatpush.bf16.xpose.msra.mxu0 0
        %1439 = vmatpush.bf16.xpose.msra.mxu0 0
        %1440 = vmatpush.bf16.xpose.msra.mxu0 0
        %1441 = vmatpush.bf16.xpose.msra.mxu0 0
        %1442 = vmatpush.bf16.xpose.msra.mxu0 %v1433
        %1443 = vmatmul.bf16.gmra.mxu0 %v1430
        %v1444 = vpop.f32.mrf.mxu0
        %v1445 = vadd.f32 %v1048, %v1444
        %v1446 = vpop.f32.mrf.mxu0
        %1447 = vdwg.mxu0
        %v1449 = vunpack.c.l.b16 %v1252
        %v1450 = vpack.c.b16 %v1449, %v1449
        %1451 = vrot.lane.b32.xlu0 %v1450, 112
        %v1452 = vpop.permute.xlu0 %1451
        %1453 = vrot.lane.b32.xlu0 %v1282, 48
        %v1454 = vpop.permute.xlu0 %1453
        %v1456 = vsel %vm1260, %v1452, 0
        %v1459 = vsel %vm1260, %v1454, 0
        %1461 = vmatpush.bf16.xpose.msra.mxu0 0
        %1462 = vmatpush.bf16.xpose.msra.mxu0 0
        %1463 = vmatpush.bf16.xpose.msra.mxu0 0
        %1464 = vmatpush.bf16.xpose.msra.mxu0 0
        %1465 = vmatpush.bf16.xpose.msra.mxu0 0
        %1466 = vmatpush.bf16.xpose.msra.mxu0 0
        %1467 = vmatpush.bf16.xpose.msra.mxu0 0
        %1468 = vmatpush.bf16.xpose.msra.mxu0 %v1459
        %1469 = vmatmul.bf16.gmra.mxu0 %v1456
        %v1470 = vpop.f32.mrf.mxu0
        %v1471 = vadd.f32 %v1048, %v1470
        %v1472 = vpop.f32.mrf.mxu0
        %1473 = vdwg.mxu0
        %v1474 = vsel %vm1304, %v1445, -inf
        %1475 = vmax.xlane.f32.xlu0 %v1474
        %v1476 = vpop.xlane.xlu0 %1475
        %v1477 = vsel %vm1304, %v1471, -inf
        %1478 = vmax.xlane.f32.xlu0 %v1477
        %v1479 = vpop.xlane.xlu0 %1478
        %v1480 = vsub.f32 %v1445, %v1476
        %v1481 = vsub.f32 %v1471, %v1479
        %v1482 = vmul.f32 %v1480, 1.442695
        %v1483 = vpow.pop %v1482
        %v1484 = vmul.f32 %v1481, 1.442695
        %v1485 = vpow.pop %v1484
        %v1486 = vsel %vm1304, %v1483, 0.0
        %1487 = vadd.xlane.f32.xlu0 %v1486
        %v1488 = vpop.xlane.xlu0 %1487
        %v1489 = vsel %vm1304, %v1485, 0.0
        %1490 = vadd.xlane.f32.xlu0 %v1489
        %v1491 = vpop.xlane.xlu0 %1490
        %v1492 = vrcp.pop %v1488
        %v1493 = vmul.f32 %v1488, %v1492
        %v1494 = vsub.f32 1.0, %v1493
        %v1495 = vmul.f32 %v1492, %v1494
        %v1496 = vadd.f32 %v1492, %v1495
        %vm1497 = vweird.f32 %v1488
        %vm1498 = vweird.f32 %v1492
        %vm1499 = vmor %vm1497, %vm1498
        %v1500 = vsel %vm1499, %v1492, %v1496
        %v1501 = vand.u32 2147483647, %v1488
        %vm1502 = vcmp.eq.f32.partialorder %v1501, 8.507059e+37
        %v1503 = vand.u32 %v1488, 2147483648
        %v1504 = vor.u32 1.1754944e-38, %v1503
        %v1505 = vsel %vm1502, %v1504, %v1500
        %v1506 = vmul.f32 %v1483, %v1505
        %v1507 = vrcp.pop %v1491
        %v1508 = vmul.f32 %v1491, %v1507
        %v1509 = vsub.f32 1.0, %v1508
        %v1510 = vmul.f32 %v1507, %v1509
        %v1511 = vadd.f32 %v1507, %v1510
        %vm1512 = vweird.f32 %v1491
        %vm1513 = vweird.f32 %v1507
        %vm1514 = vmor %vm1512, %vm1513
        %v1515 = vsel %vm1514, %v1507, %v1511
        %v1516 = vand.u32 2147483647, %v1491
        %vm1517 = vcmp.eq.f32.partialorder %v1516, 8.507059e+37
        %v1518 = vand.u32 %v1491, 2147483648
        %v1519 = vor.u32 1.1754944e-38, %v1518
        %v1520 = vsel %vm1517, %v1519, %v1515
        %v1521 = vmul.f32 %v1485, %v1520
        %v1522 = vpack.c.bf16 %v1506, %v1506
        %v1523 = vpack.c.bf16 %v1521, %v1521
        %v1525 = vunpack.c.l.b16 %v1355
        %v1526 = vpack.c.b16 %v1525, %v1525
        %1527 = vrot.lane.b32.xlu0 %v1526, 112
        %v1528 = vpop.permute.xlu0 %1527
        %v1530 = vsel %vm1304, %v1522, 0
        %v1533 = vsel %vm1360, %v1528, 0
        %1535 = vmatpush.bf16.msra.mxu0 0
        %1536 = vmatpush.bf16.msra.mxu0 0
        %1537 = vmatpush.bf16.msra.mxu0 0
        %1538 = vmatpush.bf16.msra.mxu0 0
        %1539 = vmatpush.bf16.msra.mxu0 0
        %1540 = vmatpush.bf16.msra.mxu0 0
        %1541 = vmatpush.bf16.msra.mxu0 0
        %1542 = vmatpush.bf16.msra.mxu0 %v1533
        %1543 = vmatmul.bf16.gmra.mxu0 %v1530
        %v1544 = vpop.f32.mrf.mxu0
        %v1545 = vadd.f32 0.0, %v1544
        %v1546 = vpop.f32.mrf.mxu0
        %1547 = vdwg.mxu0
        %v1549 = vunpack.c.l.b16 %v1356
        %v1550 = vpack.c.b16 %v1549, %v1549
        %1551 = vrot.lane.b32.xlu0 %v1550, 112
        %v1552 = vpop.permute.xlu0 %1551
        %v1554 = vsel %vm1304, %v1523, 0
        %v1557 = vsel %vm1360, %v1552, 0
        %1559 = vmatpush.bf16.msra.mxu0 0
        %1560 = vmatpush.bf16.msra.mxu0 0
        %1561 = vmatpush.bf16.msra.mxu0 0
        %1562 = vmatpush.bf16.msra.mxu0 0
        %1563 = vmatpush.bf16.msra.mxu0 0
        %1564 = vmatpush.bf16.msra.mxu0 0
        %1565 = vmatpush.bf16.msra.mxu0 0
        %1566 = vmatpush.bf16.msra.mxu0 %v1557
        %1567 = vmatmul.bf16.gmra.mxu0 %v1554
        %v1568 = vpop.f32.mrf.mxu0
        %v1569 = vadd.f32 0.0, %v1568
        %v1570 = vpop.f32.mrf.mxu0
        %1571 = vdwg.mxu0
        %v1572 = vpack.c.bf16 %v1569, %v1545
        %v1575 = vunpack.c.l.b16 %v1060
        %v1576 = vunpack.c.l.b16 %v1061
        %v1577 = vpack.c.b16 %v1576, %v1575
        %1578 = vrot.lane.b32.xlu0 %v1577, 64
        %v1579 = vpop.permute.xlu0 %1578
        %v1582 = vsel %vm1260, %v1572, 0
        %1584 = vmatpush.bf16.msra.mxu0 0
        %1585 = vmatpush.bf16.msra.mxu0 0
        %1586 = vmatpush.bf16.msra.mxu0 0
        %1587 = vmatpush.bf16.msra.mxu0 0
        %1588 = vmatpush.bf16.msra.mxu0 0
        %1589 = vmatpush.bf16.msra.mxu0 0
        %1590 = vmatpush.bf16.msra.mxu0 0
        %1591 = vmatpush.bf16.msra.mxu0 %v1579
        %1592 = vmatmul.bf16.gmra.mxu0 %v1582
        %v1593 = vpop.f32.mrf.mxu0
        %v1594 = vadd.f32 0.0, %v1593
        %v1595 = vpop.f32.mrf.mxu0
        %v1596 = vadd.f32 0.0, %v1595
        %1597 = vdwg.mxu0
        %v1598 = vadd.f32 %v1418, %v1594
        %v1599 = vadd.f32 %v1420, %v1596
        %1600 = vrot.lane.b32.xlu0 %v1424, 96
        %v1601 = vpop.permute.xlu0 %1600
        %1602 = vrot.lane.b32.xlu0 %v1257, 32
        %v1603 = vpop.permute.xlu0 %1602
        %v1605 = vsel %vm1260, %v1601, 0
        %v1608 = vsel %vm1260, %v1603, 0
        %1610 = vmatpush.bf16.xpose.msra.mxu0 0
        %1611 = vmatpush.bf16.xpose.msra.mxu0 0
        %1612 = vmatpush.bf16.xpose.msra.mxu0 0
        %1613 = vmatpush.bf16.xpose.msra.mxu0 0
        %1614 = vmatpush.bf16.xpose.msra.mxu0 0
        %1615 = vmatpush.bf16.xpose.msra.mxu0 0
        %1616 = vmatpush.bf16.xpose.msra.mxu0 0
        %1617 = vmatpush.bf16.xpose.msra.mxu0 %v1608
        %1618 = vmatmul.bf16.gmra.mxu0 %v1605
        %v1619 = vpop.f32.mrf.mxu0
        %v1620 = vadd.f32 %v1048, %v1619
        %v1621 = vpop.f32.mrf.mxu0
        %1622 = vdwg.mxu0
        %1623 = vrot.lane.b32.xlu0 %v1450, 96
        %v1624 = vpop.permute.xlu0 %1623
        %1625 = vrot.lane.b32.xlu0 %v1282, 32
        %v1626 = vpop.permute.xlu0 %1625
        %v1628 = vsel %vm1260, %v1624, 0
        %v1631 = vsel %vm1260, %v1626, 0
        %1633 = vmatpush.bf16.xpose.msra.mxu0 0
        %1634 = vmatpush.bf16.xpose.msra.mxu0 0
        %1635 = vmatpush.bf16.xpose.msra.mxu0 0
        %1636 = vmatpush.bf16.xpose.msra.mxu0 0
        %1637 = vmatpush.bf16.xpose.msra.mxu0 0
        %1638 = vmatpush.bf16.xpose.msra.mxu0 0
        %1639 = vmatpush.bf16.xpose.msra.mxu0 0
        %1640 = vmatpush.bf16.xpose.msra.mxu0 %v1631
        %1641 = vmatmul.bf16.gmra.mxu0 %v1628
        %v1642 = vpop.f32.mrf.mxu0
        %v1643 = vadd.f32 %v1048, %v1642
        %v1644 = vpop.f32.mrf.mxu0
        %1645 = vdwg.mxu0
        %v1646 = vsel %vm1304, %v1620, -inf
        %1647 = vmax.xlane.f32.xlu0 %v1646
        %v1648 = vpop.xlane.xlu0 %1647
        %v1649 = vsel %vm1304, %v1643, -inf
        %1650 = vmax.xlane.f32.xlu0 %v1649
        %v1651 = vpop.xlane.xlu0 %1650
        %v1652 = vsub.f32 %v1620, %v1648
        %v1653 = vsub.f32 %v1643, %v1651
        %v1654 = vmul.f32 %v1652, 1.442695
        %v1655 = vpow.pop %v1654
        %v1656 = vmul.f32 %v1653, 1.442695
        %v1657 = vpow.pop %v1656
        %v1658 = vsel %vm1304, %v1655, 0.0
        %1659 = vadd.xlane.f32.xlu0 %v1658
        %v1660 = vpop.xlane.xlu0 %1659
        %v1661 = vsel %vm1304, %v1657, 0.0
        %1662 = vadd.xlane.f32.xlu0 %v1661
        %v1663 = vpop.xlane.xlu0 %1662
        %v1664 = vrcp.pop %v1660
        %v1665 = vmul.f32 %v1660, %v1664
        %v1666 = vsub.f32 1.0, %v1665
        %v1667 = vmul.f32 %v1664, %v1666
        %v1668 = vadd.f32 %v1664, %v1667
        %vm1669 = vweird.f32 %v1660
        %vm1670 = vweird.f32 %v1664
        %vm1671 = vmor %vm1669, %vm1670
        %v1672 = vsel %vm1671, %v1664, %v1668
        %v1673 = vand.u32 2147483647, %v1660
        %vm1674 = vcmp.eq.f32.partialorder %v1673, 8.507059e+37
        %v1675 = vand.u32 %v1660, 2147483648
        %v1676 = vor.u32 1.1754944e-38, %v1675
        %v1677 = vsel %vm1674, %v1676, %v1672
        %v1678 = vmul.f32 %v1655, %v1677
        %v1679 = vrcp.pop %v1663
        %v1680 = vmul.f32 %v1663, %v1679
        %v1681 = vsub.f32 1.0, %v1680
        %v1682 = vmul.f32 %v1679, %v1681
        %v1683 = vadd.f32 %v1679, %v1682
        %vm1684 = vweird.f32 %v1663
        %vm1685 = vweird.f32 %v1679
        %vm1686 = vmor %vm1684, %vm1685
        %v1687 = vsel %vm1686, %v1679, %v1683
        %v1688 = vand.u32 2147483647, %v1663
        %vm1689 = vcmp.eq.f32.partialorder %v1688, 8.507059e+37
        %v1690 = vand.u32 %v1663, 2147483648
        %v1691 = vor.u32 1.1754944e-38, %v1690
        %v1692 = vsel %vm1689, %v1691, %v1687
        %v1693 = vmul.f32 %v1657, %v1692
        %v1694 = vpack.c.bf16 %v1678, %v1678
        %v1695 = vpack.c.bf16 %v1693, %v1693
        %1696 = vrot.lane.b32.xlu0 %v1526, 96
        %v1697 = vpop.permute.xlu0 %1696
        %v1699 = vsel %vm1304, %v1694, 0
        %v1702 = vsel %vm1360, %v1697, 0
        %1704 = vmatpush.bf16.msra.mxu0 0
        %1705 = vmatpush.bf16.msra.mxu0 0
        %1706 = vmatpush.bf16.msra.mxu0 0
        %1707 = vmatpush.bf16.msra.mxu0 0
        %1708 = vmatpush.bf16.msra.mxu0 0
        %1709 = vmatpush.bf16.msra.mxu0 0
        %1710 = vmatpush.bf16.msra.mxu0 0
        %1711 = vmatpush.bf16.msra.mxu0 %v1702
        %1712 = vmatmul.bf16.gmra.mxu0 %v1699
        %v1713 = vpop.f32.mrf.mxu0
        %v1714 = vadd.f32 0.0, %v1713
        %v1715 = vpop.f32.mrf.mxu0
        %1716 = vdwg.mxu0
        %1717 = vrot.lane.b32.xlu0 %v1550, 96
        %v1718 = vpop.permute.xlu0 %1717
        %v1720 = vsel %vm1304, %v1695, 0
        %v1723 = vsel %vm1360, %v1718, 0
        %1725 = vmatpush.bf16.msra.mxu0 0
        %1726 = vmatpush.bf16.msra.mxu0 0
        %1727 = vmatpush.bf16.msra.mxu0 0
        %1728 = vmatpush.bf16.msra.mxu0 0
        %1729 = vmatpush.bf16.msra.mxu0 0
        %1730 = vmatpush.bf16.msra.mxu0 0
        %1731 = vmatpush.bf16.msra.mxu0 0
        %1732 = vmatpush.bf16.msra.mxu0 %v1723
        %1733 = vmatmul.bf16.gmra.mxu0 %v1720
        %v1734 = vpop.f32.mrf.mxu0
        %v1735 = vadd.f32 0.0, %v1734
        %v1736 = vpop.f32.mrf.mxu0
        %1737 = vdwg.mxu0
        %v1738 = vpack.c.bf16 %v1735, %v1714
        %v1741 = vunpack.c.l.b16 %v1062
        %v1742 = vunpack.c.l.b16 %v1063
        %v1743 = vpack.c.b16 %v1742, %v1741
        %1744 = vrot.lane.b32.xlu0 %v1743, 64
        %v1745 = vpop.permute.xlu0 %1744
        %v1748 = vsel %vm1260, %v1738, 0
        %1750 = vmatpush.bf16.msra.mxu0 0
        %1751 = vmatpush.bf16.msra.mxu0 0
        %1752 = vmatpush.bf16.msra.mxu0 0
        %1753 = vmatpush.bf16.msra.mxu0 0
        %1754 = vmatpush.bf16.msra.mxu0 0
        %1755 = vmatpush.bf16.msra.mxu0 0
        %1756 = vmatpush.bf16.msra.mxu0 0
        %1757 = vmatpush.bf16.msra.mxu0 %v1745
        %1758 = vmatmul.bf16.gmra.mxu0 %v1748
        %v1759 = vpop.f32.mrf.mxu0
        %v1760 = vadd.f32 0.0, %v1759
        %v1761 = vpop.f32.mrf.mxu0
        %v1762 = vadd.f32 0.0, %v1761
        %1763 = vdwg.mxu0
        %v1764 = vadd.f32 %v1598, %v1760
        %v1765 = vadd.f32 %v1599, %v1762
        %1766 = vrot.lane.b32.xlu0 %v1424, 80
        %v1767 = vpop.permute.xlu0 %1766
        %1768 = vrot.lane.b32.xlu0 %v1257, 16
        %v1769 = vpop.permute.xlu0 %1768
        %v1771 = vsel %vm1260, %v1767, 0
        %v1774 = vsel %vm1260, %v1769, 0
        %1776 = vmatpush.bf16.xpose.msra.mxu0 0
        %1777 = vmatpush.bf16.xpose.msra.mxu0 0
        %1778 = vmatpush.bf16.xpose.msra.mxu0 0
        %1779 = vmatpush.bf16.xpose.msra.mxu0 0
        %1780 = vmatpush.bf16.xpose.msra.mxu0 0
        %1781 = vmatpush.bf16.xpose.msra.mxu0 0
        %1782 = vmatpush.bf16.xpose.msra.mxu0 0
        %1783 = vmatpush.bf16.xpose.msra.mxu0 %v1774
        %1784 = vmatmul.bf16.gmra.mxu0 %v1771
        %v1785 = vpop.f32.mrf.mxu0
        %v1786 = vadd.f32 %v1048, %v1785
        %v1787 = vpop.f32.mrf.mxu0
        %1788 = vdwg.mxu0
        %1789 = vrot.lane.b32.xlu0 %v1450, 80
        %v1790 = vpop.permute.xlu0 %1789
        %1791 = vrot.lane.b32.xlu0 %v1282, 16
        %v1792 = vpop.permute.xlu0 %1791
        %v1794 = vsel %vm1260, %v1790, 0
        %v1797 = vsel %vm1260, %v1792, 0
        %1799 = vmatpush.bf16.xpose.msra.mxu0 0
        %1800 = vmatpush.bf16.xpose.msra.mxu0 0
        %1801 = vmatpush.bf16.xpose.msra.mxu0 0
        %1802 = vmatpush.bf16.xpose.msra.mxu0 0
        %1803 = vmatpush.bf16.xpose.msra.mxu0 0
        %1804 = vmatpush.bf16.xpose.msra.mxu0 0
        %1805 = vmatpush.bf16.xpose.msra.mxu0 0
        %1806 = vmatpush.bf16.xpose.msra.mxu0 %v1797
        %1807 = vmatmul.bf16.gmra.mxu0 %v1794
        %v1808 = vpop.f32.mrf.mxu0
        %v1809 = vadd.f32 %v1048, %v1808
        %v1810 = vpop.f32.mrf.mxu0
        %1811 = vdwg.mxu0
        %v1812 = vsel %vm1304, %v1786, -inf
        %1813 = vmax.xlane.f32.xlu0 %v1812
        %v1814 = vpop.xlane.xlu0 %1813
        %v1815 = vsel %vm1304, %v1809, -inf
        %1816 = vmax.xlane.f32.xlu0 %v1815
        %v1817 = vpop.xlane.xlu0 %1816
        %v1818 = vsub.f32 %v1786, %v1814
        %v1819 = vsub.f32 %v1809, %v1817
        %v1820 = vmul.f32 %v1818, 1.442695
        %v1821 = vpow.pop %v1820
        %v1822 = vmul.f32 %v1819, 1.442695
        %v1823 = vpow.pop %v1822
        %v1824 = vsel %vm1304, %v1821, 0.0
        %1825 = vadd.xlane.f32.xlu0 %v1824
        %v1826 = vpop.xlane.xlu0 %1825
        %v1827 = vsel %vm1304, %v1823, 0.0
        %1828 = vadd.xlane.f32.xlu0 %v1827
        %v1829 = vpop.xlane.xlu0 %1828
        %v1830 = vrcp.pop %v1826
        %v1831 = vmul.f32 %v1826, %v1830
        %v1832 = vsub.f32 1.0, %v1831
        %v1833 = vmul.f32 %v1830, %v1832
        %v1834 = vadd.f32 %v1830, %v1833
        %vm1835 = vweird.f32 %v1826
        %vm1836 = vweird.f32 %v1830
        %vm1837 = vmor %vm1835, %vm1836
        %v1838 = vsel %vm1837, %v1830, %v1834
        %v1839 = vand.u32 2147483647, %v1826
        %vm1840 = vcmp.eq.f32.partialorder %v1839, 8.507059e+37
        %v1841 = vand.u32 %v1826, 2147483648
        %v1842 = vor.u32 1.1754944e-38, %v1841
        %v1843 = vsel %vm1840, %v1842, %v1838
        %v1844 = vmul.f32 %v1821, %v1843
        %v1845 = vrcp.pop %v1829
        %v1846 = vmul.f32 %v1829, %v1845
        %v1847 = vsub.f32 1.0, %v1846
        %v1848 = vmul.f32 %v1845, %v1847
        %v1849 = vadd.f32 %v1845, %v1848
        %vm1850 = vweird.f32 %v1829
        %vm1851 = vweird.f32 %v1845
        %vm1852 = vmor %vm1850, %vm1851
        %v1853 = vsel %vm1852, %v1845, %v1849
        %v1854 = vand.u32 2147483647, %v1829
        %vm1855 = vcmp.eq.f32.partialorder %v1854, 8.507059e+37
        %v1856 = vand.u32 %v1829, 2147483648
        %v1857 = vor.u32 1.1754944e-38, %v1856
        %v1858 = vsel %vm1855, %v1857, %v1853
        %v1859 = vmul.f32 %v1823, %v1858
        %v1860 = vpack.c.bf16 %v1844, %v1844
        %v1861 = vpack.c.bf16 %v1859, %v1859
        %1862 = vrot.lane.b32.xlu0 %v1526, 80
        %v1863 = vpop.permute.xlu0 %1862
        %v1865 = vsel %vm1304, %v1860, 0
        %v1868 = vsel %vm1360, %v1863, 0
        %1870 = vmatpush.bf16.msra.mxu0 0
        %1871 = vmatpush.bf16.msra.mxu0 0
        %1872 = vmatpush.bf16.msra.mxu0 0
        %1873 = vmatpush.bf16.msra.mxu0 0
        %1874 = vmatpush.bf16.msra.mxu0 0
        %1875 = vmatpush.bf16.msra.mxu0 0
        %1876 = vmatpush.bf16.msra.mxu0 0
        %1877 = vmatpush.bf16.msra.mxu0 %v1868
        %1878 = vmatmul.bf16.gmra.mxu0 %v1865
        %v1879 = vpop.f32.mrf.mxu0
        %v1880 = vadd.f32 0.0, %v1879
        %v1881 = vpop.f32.mrf.mxu0
        %1882 = vdwg.mxu0
        %1883 = vrot.lane.b32.xlu0 %v1550, 80
        %v1884 = vpop.permute.xlu0 %1883
        %v1886 = vsel %vm1304, %v1861, 0
        %v1889 = vsel %vm1360, %v1884, 0
        %1891 = vmatpush.bf16.msra.mxu0 0
        %1892 = vmatpush.bf16.msra.mxu0 0
        %1893 = vmatpush.bf16.msra.mxu0 0
        %1894 = vmatpush.bf16.msra.mxu0 0
        %1895 = vmatpush.bf16.msra.mxu0 0
        %1896 = vmatpush.bf16.msra.mxu0 0
        %1897 = vmatpush.bf16.msra.mxu0 0
        %1898 = vmatpush.bf16.msra.mxu0 %v1889
        %1899 = vmatmul.bf16.gmra.mxu0 %v1886
        %v1900 = vpop.f32.mrf.mxu0
        %v1901 = vadd.f32 0.0, %v1900
        %v1902 = vpop.f32.mrf.mxu0
        %1903 = vdwg.mxu0
        %v1904 = vpack.c.bf16 %v1901, %v1880
        %v1907 = vunpack.c.l.b16 %v1064
        %v1908 = vunpack.c.l.b16 %v1065
        %v1909 = vpack.c.b16 %v1908, %v1907
        %1910 = vrot.lane.b32.xlu0 %v1909, 64
        %v1911 = vpop.permute.xlu0 %1910
        %v1914 = vsel %vm1260, %v1904, 0
        %1916 = vmatpush.bf16.msra.mxu0 0
        %1917 = vmatpush.bf16.msra.mxu0 0
        %1918 = vmatpush.bf16.msra.mxu0 0
        %1919 = vmatpush.bf16.msra.mxu0 0
        %1920 = vmatpush.bf16.msra.mxu0 0
        %1921 = vmatpush.bf16.msra.mxu0 0
        %1922 = vmatpush.bf16.msra.mxu0 0
        %1923 = vmatpush.bf16.msra.mxu0 %v1911
        %1924 = vmatmul.bf16.gmra.mxu0 %v1914
        %v1925 = vpop.f32.mrf.mxu0
        %v1926 = vadd.f32 0.0, %v1925
        %v1927 = vpop.f32.mrf.mxu0
        %v1928 = vadd.f32 0.0, %v1927
        %1929 = vdwg.mxu0
        %v1930 = vadd.f32 %v1764, %v1926
        %v1931 = vadd.f32 %v1765, %v1928
        %1932 = vrot.lane.b32.xlu0 %v1049, 64
        %v1933 = vpop.permute.xlu0 %1932
        %v1934 = vrot.slane %v1933, 2
        %v1935 = vperm.slane %v1934, 0
        %v1937 = vadd.f32 %v1930, %v1935
        %v1938 = vadd.f32 %v1931, %v1935
        %v1939 = vadd.f32 %v1046, %v1937
        %v1940 = vadd.f32 %v1047, %v1938
        %v1941 = vsel %vm1106, %v1939, 0.0
        %1942 = vadd.xlane.f32.xlu0 %v1941
        %v1943 = vpop.xlane.xlu0 %1942
        %v1944 = vsel %vm1106, %v1940, 0.0
        %1945 = vadd.xlane.f32.xlu0 %v1944
        %v1946 = vpop.xlane.xlu0 %1945
        %v1947 = vmul.f32 %v1943, %v1119
        %v1948 = vmul.f32 %v1946, %v1119
        %v1949 = vsub.f32 %v1939, %v1947
        %v1950 = vsub.f32 %v1940, %v1948
        %v1951 = vmul.f32 %v1949, %v1949
        %v1952 = vmul.f32 %v1950, %v1950
        %v1953 = vsel %vm1106, %v1951, 0.0
        %1954 = vadd.xlane.f32.xlu0 %v1953
        %v1955 = vpop.xlane.xlu0 %1954
        %v1956 = vsel %vm1106, %v1952, 0.0
        %1957 = vadd.xlane.f32.xlu0 %v1956
        %v1958 = vpop.xlane.xlu0 %1957
        %v1959 = vmul.f32 %v1955, %v1119
        %v1960 = vmul.f32 %v1958, %v1119
        %v1961 = vadd.f32 %v1959, 1e-05
        %v1962 = vadd.f32 %v1960, 1e-05
        %v1963 = vrsqrt.pop %v1961
        %v1964 = vmul.f32 %v1963, %v1961
        %v1965 = vmul.f32 %v1964, %v1963
        %v1966 = vmul.f32 0.5, %v1965
        %v1967 = vsub.f32 1.5, %v1966
        %v1968 = vmul.f32 %v1963, %v1967
        %vm1969 = vweird.f32 %v1961
        %vm1970 = vweird.f32 %v1963
        %vm1971 = vmor %vm1969, %vm1970
        %v1972 = vsel %vm1971, %v1963, %v1968
        %v1973 = vrsqrt.pop %v1962
        %v1974 = vmul.f32 %v1973, %v1962
        %v1975 = vmul.f32 %v1974, %v1973
        %v1976 = vmul.f32 0.5, %v1975
        %v1977 = vsub.f32 1.5, %v1976
        %v1978 = vmul.f32 %v1973, %v1977
        %vm1979 = vweird.f32 %v1962
        %vm1980 = vweird.f32 %v1973
        %vm1981 = vmor %vm1979, %vm1980
        %v1982 = vsel %vm1981, %v1973, %v1978
        %v1983 = vmul.f32 %v1949, %v1972
        %v1984 = vmul.f32 %v1950, %v1982
        %v1985 = vrot.slane %v1049, 3
        %v1986 = vperm.slane %v1985, 0
        %v1988 = vmul.f32 %v1983, %v1986
        %v1989 = vmul.f32 %v1984, %v1986
        %v1990 = vrot.slane %v1933, 3
        %v1991 = vperm.slane %v1990, 0
        %v1993 = vadd.f32 %v1988, %v1991
        %v1994 = vadd.f32 %v1989, %v1991
        %v1995 = vpack.c.bf16 %v1994, %v1993
        %v2004 = vunpack.c.l.b16 %v1066
        %v2005 = vunpack.c.h.b16 %v1066
        %v2006 = vunpack.c.l.b16 %v1067
        %v2007 = vunpack.c.h.b16 %v1067
        %v2008 = vunpack.c.l.b16 %v1068
        %v2009 = vunpack.c.h.b16 %v1068
        %v2010 = vunpack.c.l.b16 %v1069
        %v2011 = vunpack.c.h.b16 %v1069
        %v2012 = vunpack.c.l.b16 %v1070
        %v2013 = vunpack.c.h.b16 %v1070
        %v2014 = vunpack.c.l.b16 %v1071
        %v2015 = vunpack.c.h.b16 %v1071
        %v2016 = vunpack.c.l.b16 %v1072
        %v2017 = vunpack.c.h.b16 %v1072
        %v2018 = vunpack.c.l.b16 %v1073
        %v2019 = vunpack.c.h.b16 %v1073
        %v2020 = vpack.c.b16 %v2006, %v2004
        %v2021 = vpack.c.b16 %v2007, %v2005
        %v2022 = vpack.c.b16 %v2010, %v2008
        %v2023 = vpack.c.b16 %v2011, %v2009
        %v2024 = vpack.c.b16 %v2014, %v2012
        %v2025 = vpack.c.b16 %v2015, %v2013
        %v2026 = vpack.c.b16 %v2018, %v2016
        %v2027 = vpack.c.b16 %v2019, %v2017
        %v2037 = vsel %vm1106, %v1995, 0
        %2039 = vmatpush.bf16.msra.mxu0 0
        %2040 = vmatpush.bf16.msra.mxu0 0
        %2041 = vmatpush.bf16.msra.mxu0 0
        %2042 = vmatpush.bf16.msra.mxu0 0
        %2043 = vmatpush.bf16.msra.mxu0 %v2026
        %2044 = vmatpush.bf16.msra.mxu0 %v2024
        %2045 = vmatpush.bf16.msra.mxu0 %v2022
        %2046 = vmatpush.bf16.msra.mxu0 %v2020
        %2047 = vmatmul.bf16.gmra.mxu0 %v2037
        %v2048 = vpop.f32.mrf.mxu0
        %v2049 = vadd.f32 0.0, %v2048
        %v2050 = vpop.f32.mrf.mxu0
        %v2051 = vadd.f32 0.0, %v2050
        %2052 = vdwg.mxu0
        %2053 = vmatpush.bf16.msra.mxu0 0
        %2054 = vmatpush.bf16.msra.mxu0 0
        %2055 = vmatpush.bf16.msra.mxu0 0
        %2056 = vmatpush.bf16.msra.mxu0 0
        %2057 = vmatpush.bf16.msra.mxu0 %v2027
        %2058 = vmatpush.bf16.msra.mxu0 %v2025
        %2059 = vmatpush.bf16.msra.mxu0 %v2023
        %2060 = vmatpush.bf16.msra.mxu0 %v2021
        %2061 = vmatmul.bf16.gmra.mxu0 %v2037
        %v2062 = vpop.f32.mrf.mxu0
        %v2063 = vadd.f32 0.0, %v2062
        %v2064 = vpop.f32.mrf.mxu0
        %v2065 = vadd.f32 0.0, %v2064
        %2066 = vdwg.mxu0
        %v2067 = vrot.slane %v1049, 4
        %v2068 = vperm.slane %v2067, 0
        %v2069 = vperm.slane %v2067, 1
        %v2072 = vadd.f32 %v2049, %v2068
        %v2073 = vadd.f32 %v2063, %v2069
        %v2074 = vadd.f32 %v2051, %v2068
        %v2075 = vadd.f32 %v2065, %v2069
        %v2076 = vmul.f32 %v2072, 1.702
        %v2077 = vmul.f32 %v2073, 1.702
        %v2078 = vmul.f32 %v2074, 1.702
        %v2079 = vmul.f32 %v2075, 1.702
        %v2080 = vxor.u32 %v2076, 2147483648
        %v2081 = vxor.u32 %v2077, 2147483648
        %v2082 = vxor.u32 %v2078, 2147483648
        %v2083 = vxor.u32 %v2079, 2147483648
        %v2084 = vmul.f32 %v2080, 1.442695
        %v2085 = vpow.pop %v2084
        %v2086 = vmul.f32 %v2081, 1.442695
        %v2087 = vpow.pop %v2086
        %v2088 = vmul.f32 %v2082, 1.442695
        %v2089 = vpow.pop %v2088
        %v2090 = vmul.f32 %v2083, 1.442695
        %v2091 = vpow.pop %v2090
        %v2092 = vadd.f32 %v2085, 1.0
        %v2093 = vadd.f32 %v2087, 1.0
        %v2094 = vadd.f32 %v2089, 1.0
        %v2095 = vadd.f32 %v2091, 1.0
        %v2096 = vrcp.pop %v2092
        %v2097 = vmul.f32 %v2092, %v2096
        %v2098 = vsub.f32 1.0, %v2097
        %v2099 = vmul.f32 %v2096, %v2098
        %v2100 = vadd.f32 %v2096, %v2099
        %vm2101 = vweird.f32 %v2092
        %vm2102 = vweird.f32 %v2096
        %vm2103 = vmor %vm2101, %vm2102
        %v2104 = vsel %vm2103, %v2096, %v2100
        %v2105 = vand.u32 2147483647, %v2092
        %vm2106 = vcmp.eq.f32.partialorder %v2105, 8.507059e+37
        %v2107 = vand.u32 %v2092, 2147483648
        %v2108 = vor.u32 1.1754944e-38, %v2107
        %v2109 = vsel %vm2106, %v2108, %v2104
        %v2110 = vmul.f32 1.0, %v2109
        %v2111 = vrcp.pop %v2093
        %v2112 = vmul.f32 %v2093, %v2111
        %v2113 = vsub.f32 1.0, %v2112
        %v2114 = vmul.f32 %v2111, %v2113
        %v2115 = vadd.f32 %v2111, %v2114
        %vm2116 = vweird.f32 %v2093
        %vm2117 = vweird.f32 %v2111
        %vm2118 = vmor %vm2116, %vm2117
        %v2119 = vsel %vm2118, %v2111, %v2115
        %v2120 = vand.u32 2147483647, %v2093
        %vm2121 = vcmp.eq.f32.partialorder %v2120, 8.507059e+37
        %v2122 = vand.u32 %v2093, 2147483648
        %v2123 = vor.u32 1.1754944e-38, %v2122
        %v2124 = vsel %vm2121, %v2123, %v2119
        %v2125 = vmul.f32 1.0, %v2124
        %v2126 = vrcp.pop %v2094
        %v2127 = vmul.f32 %v2094, %v2126
        %v2128 = vsub.f32 1.0, %v2127
        %v2129 = vmul.f32 %v2126, %v2128
        %v2130 = vadd.f32 %v2126, %v2129
        %vm2131 = vweird.f32 %v2094
        %vm2132 = vweird.f32 %v2126
        %vm2133 = vmor %vm2131, %vm2132
        %v2134 = vsel %vm2133, %v2126, %v2130
        %v2135 = vand.u32 2147483647, %v2094
        %vm2136 = vcmp.eq.f32.partialorder %v2135, 8.507059e+37
        %v2137 = vand.u32 %v2094, 2147483648
        %v2138 = vor.u32 1.1754944e-38, %v2137
        %v2139 = vsel %vm2136, %v2138, %v2134
        %v2140 = vmul.f32 1.0, %v2139
        %v2141 = vrcp.pop %v2095
        %v2142 = vmul.f32 %v2095, %v2141
        %v2143 = vsub.f32 1.0, %v2142
        %v2144 = vmul.f32 %v2141, %v2143
        %v2145 = vadd.f32 %v2141, %v2144
        %vm2146 = vweird.f32 %v2095
        %vm2147 = vweird.f32 %v2141
        %vm2148 = vmor %vm2146, %vm2147
        %v2149 = vsel %vm2148, %v2141, %v2145
        %v2150 = vand.u32 2147483647, %v2095
        %vm2151 = vcmp.eq.f32.partialorder %v2150, 8.507059e+37
        %v2152 = vand.u32 %v2095, 2147483648
        %v2153 = vor.u32 1.1754944e-38, %v2152
        %v2154 = vsel %vm2151, %v2153, %v2149
        %v2155 = vmul.f32 1.0, %v2154
        %v2156 = vmul.f32 %v2072, %v2110
        %v2157 = vmul.f32 %v2073, %v2125
        %v2158 = vmul.f32 %v2074, %v2140
        %v2159 = vmul.f32 %v2075, %v2155
        %v2160 = vpack.c.bf16 %v2158, %v2156
        %v2161 = vpack.c.bf16 %v2159, %v2157
        %v2194 = vunpack.c.l.b16 %v1074
        %v2195 = vunpack.c.l.b16 %v1075
        %v2196 = vunpack.c.l.b16 %v1076
        %v2197 = vunpack.c.l.b16 %v1077
        %v2198 = vunpack.c.l.b16 %v1078
        %v2199 = vunpack.c.l.b16 %v1079
        %v2200 = vunpack.c.l.b16 %v1080
        %v2201 = vunpack.c.l.b16 %v1081
        %v2202 = vunpack.c.l.b16 %v1082
        %v2203 = vunpack.c.l.b16 %v1083
        %v2204 = vunpack.c.l.b16 %v1084
        %v2205 = vunpack.c.l.b16 %v1085
        %v2206 = vunpack.c.l.b16 %v1086
        %v2207 = vunpack.c.l.b16 %v1087
        %v2208 = vunpack.c.l.b16 %v1088
        %v2209 = vunpack.c.l.b16 %v1089
        %v2210 = vunpack.c.l.b16 %v1090
        %v2211 = vunpack.c.l.b16 %v1091
        %v2212 = vunpack.c.l.b16 %v1092
        %v2213 = vunpack.c.l.b16 %v1093
        %v2214 = vunpack.c.l.b16 %v1094
        %v2215 = vunpack.c.l.b16 %v1095
        %v2216 = vunpack.c.l.b16 %v1096
        %v2217 = vunpack.c.l.b16 %v1097
        %v2218 = vunpack.c.l.b16 %v1098
        %v2219 = vunpack.c.l.b16 %v1099
        %v2220 = vunpack.c.l.b16 %v1100
        %v2221 = vunpack.c.l.b16 %v1101
        %v2222 = vunpack.c.l.b16 %v1102
        %v2223 = vunpack.c.l.b16 %v1103
        %v2224 = vunpack.c.l.b16 %v1104
        %v2225 = vunpack.c.l.b16 %v1105
        %v2226 = vpack.c.b16 %v2195, %v2194
        %v2227 = vpack.c.b16 %v2197, %v2196
        %v2228 = vpack.c.b16 %v2199, %v2198
        %v2229 = vpack.c.b16 %v2201, %v2200
        %v2230 = vpack.c.b16 %v2203, %v2202
        %v2231 = vpack.c.b16 %v2205, %v2204
        %v2232 = vpack.c.b16 %v2207, %v2206
        %v2233 = vpack.c.b16 %v2209, %v2208
        %v2234 = vpack.c.b16 %v2211, %v2210
        %v2235 = vpack.c.b16 %v2213, %v2212
        %v2236 = vpack.c.b16 %v2215, %v2214
        %v2237 = vpack.c.b16 %v2217, %v2216
        %v2238 = vpack.c.b16 %v2219, %v2218
        %v2239 = vpack.c.b16 %v2221, %v2220
        %v2240 = vpack.c.b16 %v2223, %v2222
        %v2241 = vpack.c.b16 %v2225, %v2224
        %2258 = vmatpush.bf16.msra.mxu0 %v2233
        %2259 = vmatpush.bf16.msra.mxu0 %v2232
        %2260 = vmatpush.bf16.msra.mxu0 %v2231
        %2261 = vmatpush.bf16.msra.mxu0 %v2230
        %2262 = vmatpush.bf16.msra.mxu0 %v2229
        %2263 = vmatpush.bf16.msra.mxu0 %v2228
        %2264 = vmatpush.bf16.msra.mxu0 %v2227
        %2265 = vmatpush.bf16.msra.mxu0 %v2226
        %2266 = vmatmul.bf16.gmra.mxu0 %v2160
        %v2267 = vpop.f32.mrf.mxu0
        %v2268 = vadd.f32 0.0, %v2267
        %v2269 = vpop.f32.mrf.mxu0
        %v2270 = vadd.f32 0.0, %v2269
        %2271 = vdwg.mxu0
        %2272 = vmatpush.bf16.msra.mxu0 %v2241
        %2273 = vmatpush.bf16.msra.mxu0 %v2240
        %2274 = vmatpush.bf16.msra.mxu0 %v2239
        %2275 = vmatpush.bf16.msra.mxu0 %v2238
        %2276 = vmatpush.bf16.msra.mxu0 %v2237
        %2277 = vmatpush.bf16.msra.mxu0 %v2236
        %2278 = vmatpush.bf16.msra.mxu0 %v2235
        %2279 = vmatpush.bf16.msra.mxu0 %v2234
        %2280 = vmatmul.bf16.gmra.mxu0 %v2161
        %v2281 = vpop.f32.mrf.mxu0
        %v2282 = vadd.f32 %v2268, %v2281
        %v2283 = vpop.f32.mrf.mxu0
        %v2284 = vadd.f32 %v2270, %v2283
        %2285 = vdwg.mxu0
        %v2286 = vrot.slane %v1049, 6
        %v2287 = vperm.slane %v2286, 0
        %v2289 = vadd.f32 %v2282, %v2287
        %v2290 = vadd.f32 %v2284, %v2287
        %v2291 = vadd.f32 %v1939, %v2289
        %v2292 = vadd.f32 %v1940, %v2290
        %2293 = vst.msk [vmem:[#allocation2] sm:$0xff] %vm1106, %v2291
        %2294 = vst.msk [vmem:[#allocation2 + $0x8] sm:$0xff] %vm1106, %v2292
        %p2295 = scmp.eq.s32.totalorder %s29, 11
        // Predicated region
        $region121: #{custom_clip_forward.2} parent=71 // pred_check
          %p2296 = pneg %p2295
        $region122: #{custom_clip_forward.2} parent=71 // pred_check_branch
          %2298 = sbr.rel (%p2296) target = $region124
        $region123: #{custom_clip_forward.2} parent=71 // pred_region
          %v2299 = vld [vmem:[#allocation11] sm:$0x1]
          %v2300 = vld [vmem:[#allocation11 + $0x1] sm:$0x1]
          %v2303 = vrot.slane %v2292, 7
          %vm2304 = vcmask 1041409
          %v2305 = vsel %vm2304, %v2303, %v2291
          %vm2307 = vcmask 517120
          %v2308 = vsel %vm2307, %v2305, 0.0
          %2309 = vadd.xlane.f32.xlu0 %v2308
          %v2310 = vpop.xlane.xlu0 %2309
          %v2311 = vmul.f32 %v2310, %v1119
          %v2313 = vrot.slane %v2311, 1
          %v2316 = vsub.f32 %v2291, %v2311
          %v2317 = vsub.f32 %v2292, %v2313
          %v2318 = vmul.f32 %v2316, %v2316
          %v2319 = vmul.f32 %v2317, %v2317
          %v2322 = vrot.slane %v2319, 7
          %v2323 = vsel %vm2304, %v2322, %v2318
          %v2325 = vsel %vm2307, %v2323, 0.0
          %2326 = vadd.xlane.f32.xlu0 %v2325
          %v2327 = vpop.xlane.xlu0 %2326
          %v2328 = vmul.f32 %v2327, %v1119
          %v2329 = vadd.f32 %v2328, 1e-05
          %v2330 = vrsqrt.pop %v2329
          %v2331 = vmul.f32 %v2330, %v2329
          %v2332 = vmul.f32 %v2331, %v2330
          %v2333 = vmul.f32 0.5, %v2332
          %v2334 = vsub.f32 1.5, %v2333
          %v2335 = vmul.f32 %v2330, %v2334
          %vm2336 = vweird.f32 %v2329
          %vm2337 = vweird.f32 %v2330
          %vm2338 = vmor %vm2336, %vm2337
          %v2339 = vsel %vm2338, %v2330, %v2335
          %v2341 = vrot.slane %v2339, 1
          %v2344 = vmul.f32 %v2316, %v2339
          %v2345 = vmul.f32 %v2317, %v2341
          %v2346 = vperm.slane %v2299, 0
          %v2347 = vmul.f32 %v2344, %v2346
          %v2348 = vmul.f32 %v2345, %v2346
          %v2349 = vperm.slane %v2300, 0
          %v2350 = vadd.f32 %v2347, %v2349
          %v2351 = vadd.f32 %v2348, %v2349
          %v2352 = vld [vmem:[#allocation13] sm:$0xff]
          %v2353 = vld [vmem:[#allocation13 + $0x8] sm:$0xff]
          %v2354 = vld [vmem:[#allocation13 + $0x10] sm:$0xff]
          %v2355 = vld [vmem:[#allocation13 + $0x18] sm:$0xff]
          %v2356 = vld [vmem:[#allocation13 + $0x20] sm:$0xff]
          %v2357 = vld [vmem:[#allocation13 + $0x28] sm:$0xff]
          %v2358 = vld [vmem:[#allocation13 + $0x30] sm:$0xff]
          %v2359 = vld [vmem:[#allocation13 + $0x38] sm:$0xff]
          %v2360 = vpack.c.bf16 %v2350, %v2350
          %v2361 = vpack.c.bf16 %v2351, %v2351
          %v2362 = vpack.c.bf16 %v2353, %v2352
          %v2363 = vpack.c.bf16 %v2355, %v2354
          %v2364 = vpack.c.bf16 %v2357, %v2356
          %v2365 = vpack.c.bf16 %v2359, %v2358
          %v2368 = vunpack.c.l.b16 %v2360
          %v2369 = vunpack.c.l.b16 %v2361
          %v2370 = vrot.slane %v2369, 7
          %v2371 = vsel %vm2304, %v2370, %v2368
          %v2372 = vpack.c.b16 %v2371, %v2371
          %v2374 = vsel %vm1106, %v2372, 0
          %2376 = vmatpush.bf16.msra.mxu0 0
          %2377 = vmatpush.bf16.msra.mxu0 0
          %2378 = vmatpush.bf16.msra.mxu0 0
          %2379 = vmatpush.bf16.msra.mxu0 0
          %2380 = vmatpush.bf16.msra.mxu0 %v2365
          %2381 = vmatpush.bf16.msra.mxu0 %v2364
          %2382 = vmatpush.bf16.msra.mxu0 %v2363
          %2383 = vmatpush.bf16.msra.mxu0 %v2362
          %2384 = vmatmul.bf16.gmra.mxu0 %v2374
          %v2385 = vpop.f32.mrf.mxu0
          %v2386 = vadd.f32 0.0, %v2385
          %v2387 = vpop.f32.mrf.mxu0
          %2388 = vdwg.mxu0
          %vm2389 = vcmask 254976
          %2390 = vst.msk [vmem:[%s13] sm:$0x3] %vm2389, %v2386
        $region124: #{custom_clip_forward.2} parent=71 // pred_fallthru
          _
        // Predicated region
        $region125: #{custom_clip_forward.2} parent=71 // pred_check
          %p2391 = pneg %p341
        $region126: #{custom_clip_forward.2} parent=71 // pred_check_branch
          %2393 = sbr.rel (%p2391) target = $region128
        $region127: #{custom_clip_forward.2} parent=71 // pred_region
          _
        $region128: #{custom_clip_forward.2} parent=71 // pred_fallthru
          _
        // Predicated region
        $region129: #{custom_clip_forward.2} parent=71 // pred_check
          %p2394 = pneg %p341
        $region130: #{custom_clip_forward.2} parent=71 // pred_check_branch
          %2396 = sbr.rel (%p2394) target = $region132
        $region131: #{custom_clip_forward.2} parent=71 // pred_region
          _
        $region132: #{custom_clip_forward.2} parent=71 // pred_fallthru
          _
      $region72: #{custom_clip_forward.2} parent=5 // pred_fallthru
        _
      %p2397 = scmp.le.s32.totalorder 2, %s24
      // Predicated region
      $region133: #{custom_clip_forward.2} parent=5 // pred_check
        %p2398 = pneg %p2397
      $region134: #{custom_clip_forward.2} parent=5 // pred_check_branch
        %2400 = sbr.rel (%p2398) target = $region136
      $region135: #{custom_clip_forward.2} parent=5 // pred_region
        %s2401 = ssub.s32 %s24, 2
      $region136: #{custom_clip_forward.2} parent=5 // pred_fallthru
        _
    $region6: #{custom_clip_forward.2} parent=1 // loop_footer
      %s28 = sadd.s32 1, %s24
    $region7: #{custom_clip_forward.2} parent=1 // loop_footer_branch
      %23 = sbr.rel target = $region3
    $region8: #{custom_clip_forward.2} parent=1 // loop_exit
      _
    %2402 = vsyncpa [#allocation4], 1
    %s2403 = scalar_lea.sflag [#allocation4], 1
    %2404 = vsyncpa %s2403, 1
    %2405 = vsyncpa [#allocation6], 1
    %2406 = vsyncpa [#allocation9], 1
    %2407 = vsyncpa [#allocation12], 1
    %2408 = vsyncpa [#allocation15], 1

</llo_original>
